<compile_context>
chip_gen: v7x
topology: tpu7x:2x2x1
jax: 0.10.0
libtpu: 0.0.40
codegen_flags: <defaults>
</compile_context>

<pallas_src>
import math

import jax
import jax.numpy as jnp
from jax import lax
from jax.experimental import pallas as pl
from jax.experimental.pallas import tpu as pltpu


# ----------------------------- small helpers -----------------------------

def _round_up(x, m):
    return ((x + m - 1) // m) * m


def _row_tiling(M, cap=256):
    """Pick a row tile (multiple of 8) and the padded row count."""
    if M <= cap:
        mp = _round_up(M, 8)
        return mp, mp
    mp = _round_up(M, cap)
    return mp, cap


def _pick_chunk(Lt):
    """Chunk length for the scan: multiple of 8 that divides Lt, else full Lt."""
    for t in (32, 24, 16, 8):
        if Lt % t == 0:
            return t
    return Lt


# ----------------------------- linear (tiled, bf16 MXU) -----------------------------

def _linear_kernel(x_ref, w_ref, b_ref, o_ref, acc_ref):
    @pl.when(pl.program_id(1) == 0)
    def _():
        acc_ref[...] = jnp.zeros_like(acc_ref)

    acc_ref[...] += jnp.dot(x_ref[...], w_ref[...],
                            preferred_element_type=jnp.float32)

    @pl.when(pl.program_id(1) == pl.num_programs(1) - 1)
    def _():
        o_ref[...] = acc_ref[...] + b_ref[...]


def pallas_linear(x, w, b=None, tm_cap=256, tk_cap=512):
    """y = x @ w + b with M-tiling, K-tiling (f32 accumulator) and bf16 MXU operands."""
    M, K = x.shape
    N = w.shape[1]
    xb = x.astype(jnp.bfloat16)
    wb = w.astype(jnp.bfloat16)
    b2 = (jnp.zeros((1, N), jnp.float32) if b is None
          else b.reshape(1, N).astype(jnp.float32))

    Mp, tm = _row_tiling(M, tm_cap)
    if Mp != M:
        xb = jnp.pad(xb, ((0, Mp - M), (0, 0)))

    if K <= tk_cap:
        tk, Kp = K, K
    else:
        tk = tk_cap
        Kp = _round_up(K, tk)
        if Kp != K:
            xb = jnp.pad(xb, ((0, 0), (0, Kp - K)))
            wb = jnp.pad(wb, ((0, Kp - K), (0, 0)))

    out = pl.pallas_call(
        _linear_kernel,
        out_shape=jax.ShapeDtypeStruct((Mp, N), jnp.float32),
        grid_spec=pltpu.PrefetchScalarGridSpec(
            num_scalar_prefetch=0,
            grid=(Mp // tm, Kp // tk),
            in_specs=[pl.BlockSpec((tm, tk), lambda i, k: (i, k)),
                      pl.BlockSpec((tk, N), lambda i, k: (k, 0)),
                      pl.BlockSpec((1, N), lambda i, k: (0, 0))],
            out_specs=pl.BlockSpec((tm, N), lambda i, k: (i, 0)),
            scratch_shapes=[pltpu.VMEM((tm, N), jnp.float32)]),
        compiler_params=pltpu.CompilerParams(
            dimension_semantics=("parallel", "arbitrary")),
    )(xb, wb, b2)
    return out[:M] if Mp != M else out


# ----------------------------- RevIN (instance norm over time) -----------------------------

def _revin_kernel(x_ref, xn_ref, m_ref, s_ref):
    x = x_ref[...]
    m = jnp.mean(x, axis=1, keepdims=True)
    xc = x - m
    var = jnp.mean(xc * xc, axis=1, keepdims=True)       # unbiased=False
    s_ref[...] = jnp.sqrt(var + 1e-5)
    xn_ref[...] = xc * lax.rsqrt(var + 1e-5)
    m_ref[...] = m


def pallas_revin_norm(x):
    B, S, C = x.shape
    return pl.pallas_call(
        _revin_kernel,
        out_shape=(jax.ShapeDtypeStruct((B, S, C), jnp.float32),
                   jax.ShapeDtypeStruct((B, 1, C), jnp.float32),
                   jax.ShapeDtypeStruct((B, 1, C), jnp.float32)),
    )(x.astype(jnp.float32))


# ----------------------------- fused add + RMSNorm -----------------------------

def _add_rmsnorm_kernel(h_ref, r_ref, w_ref, y_ref, res_ref):
    x = h_ref[...] + r_ref[...]
    res_ref[...] = x
    ms = jnp.mean(x * x, axis=-1, keepdims=True)
    y_ref[...] = x * lax.rsqrt(ms + 1e-5) * w_ref[...]


def pallas_add_rmsnorm(h, r, w, tm_cap=256):
    M, D = h.shape
    Mp, tm = _row_tiling(M, tm_cap)
    hp = jnp.pad(h, ((0, Mp - M), (0, 0))) if Mp != M else h
    rp = jnp.pad(r, ((0, Mp - M), (0, 0))) if Mp != M else r
    y, res = pl.pallas_call(
        _add_rmsnorm_kernel,
        out_shape=(jax.ShapeDtypeStruct((Mp, D), jnp.float32),
                   jax.ShapeDtypeStruct((Mp, D), jnp.float32)),
        grid_spec=pltpu.PrefetchScalarGridSpec(
            num_scalar_prefetch=0,
            grid=(Mp // tm,),
            in_specs=[pl.BlockSpec((tm, D), lambda i: (i, 0)),
                      pl.BlockSpec((tm, D), lambda i: (i, 0)),
                      pl.BlockSpec((1, D), lambda i: (0, 0))],
            out_specs=[pl.BlockSpec((tm, D), lambda i: (i, 0)),
                       pl.BlockSpec((tm, D), lambda i: (i, 0))]),
        compiler_params=pltpu.CompilerParams(dimension_semantics=("parallel",)),
    )(hp, rp, w.reshape(1, D).astype(jnp.float32))
    if Mp != M:
        y, res = y[:M], res[:M]
    return y, res


# ----------------------------- causal depthwise conv + SiLU -----------------------------

def _make_conv_kernel(K, L, d_inner):
    def kernel(x_ref, w_ref, b_ref, o_ref):
        x = x_ref[0]                                       # (L, d_inner)
        acc = x * w_ref[K - 1:K, :]                        # tap at shift 0
        for shift in range(1, K):                          # static unroll, K small
            if shift < L:
                xs = jnp.concatenate(
                    [jnp.zeros((shift, d_inner), jnp.float32), x[:L - shift, :]],
                    axis=0)
            else:
                xs = jnp.zeros((L, d_inner), jnp.float32)
            acc = acc + xs * w_ref[K - 1 - shift:K - shift, :]
        acc = acc + b_ref[...]
        # SiLU via EUP exp + approx reciprocal
        o_ref[0] = acc * pl.reciprocal(1.0 + jnp.exp(-acc), approx=True)
    return kernel


def pallas_causal_conv_silu(x, w, b):
    """Depthwise causal conv (== torch Conv1d(groups=d_inner, padding=K-1)[..., :L]) + bias + SiLU."""
    B, L, d_inner = x.shape
    K = w.shape[0]
    # TODO(synk): for very long L this should be tiled over L with a (K-1)-row overlap.
    return pl.pallas_call(
        _make_conv_kernel(K, L, d_inner),
        out_shape=jax.ShapeDtypeStruct((B, L, d_inner), jnp.float32),
        grid_spec=pltpu.PrefetchScalarGridSpec(
            num_scalar_prefetch=0,
            grid=(B,),
            in_specs=[pl.BlockSpec((1, L, d_inner), lambda b_: (b_, 0, 0)),
                      pl.BlockSpec((K, d_inner), lambda b_: (0, 0)),
                      pl.BlockSpec((1, d_inner), lambda b_: (0, 0))],
            out_specs=pl.BlockSpec((1, L, d_inner), lambda b_: (b_, 0, 0))),
        compiler_params=pltpu.CompilerParams(dimension_semantics=("parallel",)),
    )(x.astype(jnp.float32), w.astype(jnp.float32),
      b.reshape(1, d_inner).astype(jnp.float32))


# ----------------------------- selective SSM scan (chunked, hoisted) -----------------------------

def _make_scan_kernel(T, d_state, d_inner):
    TS = T * d_state

    def kernel(u_ref, dt_ref, bt_ref, ct_ref, z_ref, at_ref, d_ref,
               y_ref, h_carry):
        # reset carried state at the first chunk of every batch element
        @pl.when(pl.program_id(1) == 0)
        def _():
            h_carry[...] = jnp.zeros_like(h_carry)

        u = u_ref[0]                    # (T, d_inner)
        dtr = dt_ref[0]                 # (T, d_inner)
        z = z_ref[0]                    # (T, d_inner)
        Bt = bt_ref[0, 0]               # (d_state, T)
        Ct = ct_ref[0, 0]               # (d_state, T)
        At = at_ref[...]                # (d_state, d_inner) == A.T
        Dv = d_ref[...]                 # (1, d_inner)

        # ---- bulk (vectorized) pre-compute: all EUP/MXU work off the serial path ----
        # stable softplus (delta_softplus=True)
        dt_sp = jnp.maximum(dtr, 0.0) + jnp.log(1.0 + jnp.exp(-jnp.abs(dtr)))
        dtu = dt_sp * u                                                   # (T, d_inner)
        gate = z * pl.reciprocal(1.0 + jnp.exp(-z), approx=True)         # SiLU(z)

        # block-diagonal selector sel[(t,s), t'] = (t' == t), built without int division
        rowi = lax.broadcasted_iota(jnp.int32, (TS, T), 0)
        colt = lax.broadcasted_iota(jnp.int32, (TS, T), 1) * d_state
        sel = (rowi >= colt) & (rowi < colt + d_state)                    # (TS, T) bool
        selF = sel.astype(jnp.float32)

        # dt replicated per state row: dt_rep[(t,s), d] = dt_sp[t, d]
        dt_rep = jnp.dot(selF, dt_sp, preferred_element_type=jnp.float32)  # (TS, d_inner)
        At_rep = jnp.broadcast_to(At[None, :, :],
                                  (T, d_state, d_inner)).reshape(TS, d_inner)
        dA_all = jnp.exp(dt_rep * At_rep)                                  # (TS, d_inner)

        # dBu[(t,s), d] = B[t,s] * dt[t,d] * u[t,d]   (one MXU matmul)
        B_rep = jnp.broadcast_to(Bt[None, :, :], (T, d_state, T)).reshape(TS, T)
        FB = jnp.where(sel, B_rep, 0.0)
        dBu_all = jnp.dot(FB, dtu, preferred_element_type=jnp.float32)     # (TS, d_inner)

        # C broadcast per row: C_exp[(t,s), d] = C[t,s]   (one MXU matmul)
        C_rep = jnp.broadcast_to(Ct[None, :, :], (T, d_state, T)).reshape(TS, T)
        FC = jnp.where(sel, C_rep, 0.0)
        C_exp = jnp.dot(FC, jnp.ones((T, d_inner), jnp.float32),
                        preferred_element_type=jnp.float32)                # (TS, d_inner)

        # ---- serial recurrence: only h = dA*h + dBu per step (pure VPU) ----
        h = h_carry[...]
        hs = []
        for t in range(T):              # static unroll, static slices
            lo = t * d_state
            h = dA_all[lo:lo + d_state, :] * h + dBu_all[lo:lo + d_state, :]
            hs.append(h)
        h_carry[...] = h
        hall = jnp.concatenate(hs, axis=0)                                 # (TS, d_inner)

        # y[t, d] = sum_s C[t,s] * h[t,s,d]  via one masked matmul (no relayout)
        lane_r = lax.broadcasted_iota(jnp.int32, (T, TS), 1)
        row_t = lax.broadcasted_iota(jnp.int32, (T, TS), 0) * d_state
        P = ((lane_r >= row_t) & (lane_r < row_t + d_state)).astype(jnp.float32)
        Y = jnp.dot(P, C_exp * hall, preferred_element_type=jnp.float32)   # (T, d_inner)

        y_ref[0] = ((Y + Dv * u) * gate).astype(y_ref.dtype)

    return kernel


def pallas_selective_scan(u, dt, Bm, Cm, z, A, D):
    """Mamba-1 selective scan.  u/dt/z: (B, Lt, d_inner); Bm/Cm: (B, Lt, d_state);
    A: (d_inner, d_state); D: (d_inner,).  Returns SiLU(z)-gated outputs."""
    Bsz, Lt, d_inner = u.shape
    d_state = A.shape[1]
    assert d_state % 8 == 0, "d_state must be a multiple of 8 for the chunked scan"

    T = _pick_chunk(Lt)
    n_chunks = Lt // T

    At = jnp.transpose(A).astype(jnp.float32)             # (d_state, d_inner)
    D2 = D.reshape(1, d_inner).astype(jnp.float32)

    def pack(X):  # (B, Lt, d_state) -> (B, n_chunks, d_state, T), free layout plumbing
        return (X.transpose(0, 2, 1)
                 .reshape(Bsz, d_state, n_chunks, T)
                 .transpose(0, 2, 1, 3))

    Bt4 = pack(Bm.astype(jnp.float32))
    Ct4 = pack(Cm.astype(jnp.float32))

    seq_spec = lambda d: pl.BlockSpec((1, T, d), lambda b, c: (b, c, 0))
    st_spec = pl.BlockSpec((1, 1, d_state, T), lambda b, c: (b, c, 0, 0))

    return pl.pallas_call(
        _make_scan_kernel(T, d_state, d_inner),
        out_shape=jax.ShapeDtypeStruct((Bsz, Lt, d_inner), jnp.float32),
        grid_spec=pltpu.PrefetchScalarGridSpec(
            num_scalar_prefetch=0,
            grid=(Bsz, n_chunks),
            in_specs=[seq_spec(d_inner), seq_spec(d_inner),
                      st_spec, st_spec, seq_spec(d_inner),
                      pl.BlockSpec((d_state, d_inner), lambda b, c: (0, 0)),
                      pl.BlockSpec((1, d_inner), lambda b, c: (0, 0))],
            out_specs=seq_spec(d_inner),
            scratch_shapes=[pltpu.VMEM((d_state, d_inner), jnp.float32)]),
        compiler_params=pltpu.CompilerParams(
            dimension_semantics=("parallel", "arbitrary")),
    )(u.astype(jnp.float32), dt.astype(jnp.float32), Bt4, Ct4,
      z.astype(jnp.float32), At, D2)


# ----------------------------- model glue -----------------------------

def mamba_mixer(x, p, cfg):
    B, Lt, d_model = x.shape
    d_inner = cfg["expand"] * d_model
    d_state = cfg["d_state"]
    dt_rank = cfg["dt_rank"]

    xz = pallas_linear(x.reshape(B * Lt, d_model), p["in_proj_w"])         # (B*Lt, 2*d_inner)
    xz = xz.reshape(B, Lt, 2 * d_inner)
    xc, z = xz[..., :d_inner], xz[..., d_inner:]

    xconv = pallas_causal_conv_silu(xc, p["conv_w"], p["conv_b"])          # (B, Lt, d_inner)

    xdbl = pallas_linear(xconv.reshape(B * Lt, d_inner), p["x_proj_w"])    # (B*Lt, dt_rank+2*d_state)
    dt_raw = xdbl[:, :dt_rank]
    Bm = xdbl[:, dt_rank:dt_rank + d_state].reshape(B, Lt, d_state)
    Cm = xdbl[:, dt_rank + d_state:].reshape(B, Lt, d_state)
    dt_lin = pallas_linear(dt_raw, p["dt_proj_w"], p["dt_proj_b"]).reshape(B, Lt, d_inner)

    A = -jnp.exp(p["A_log"])                                               # (d_inner, d_state)
    y = pallas_selective_scan(xconv, dt_lin, Bm, Cm, z, A, p["D"])
    out = pallas_linear(y.reshape(B * Lt, d_inner), p["out_proj_w"])
    return out.reshape(B, Lt, d_model)


def mamba_ts_forecast(x_enc, params, cfg):
    # x_enc: (B, seq_len, n_vars)
    B, S, C = x_enc.shape
    d_model = cfg["d_model"]
    patch_len, stride, pred_len = cfg["patch_len"], cfg["stride"], cfg["pred_len"]

    # RevIN_mode == 1: instance norm over the time axis
    xn, means, stdev = pallas_revin_norm(x_enc)

    # permute + unfold -> (B, C, num_patches, patch_len)
    xt = jnp.transpose(xn, (0, 2, 1))
    num_patches = (S - patch_len) // stride + 1
    idx = jnp.arange(num_patches)[:, None] * stride + jnp.arange(patch_len)[None, :]
    patches = xt[:, :, idx]

    # value embedding: Linear(patch_len -> d_model, bias=False)
    emb = pallas_linear(patches.reshape(B * C * num_patches, patch_len), params["emb_w"])
    # arrange_mode 0: '(b c) l d -> b (c l) d'
    enc_in = emb.reshape(B, C * num_patches, d_model)

    # Mamba encoder: pre-norm residual stream with fused add + RMSNorm
    Lt = C * num_patches
    hidden = enc_in.reshape(B * Lt, d_model)
    residual = jnp.zeros_like(hidden)
    for lp in params["layers"]:
        normed, residual = pallas_add_rmsnorm(hidden, residual, lp["norm_w"])
        hidden = mamba_mixer(normed.reshape(B, Lt, d_model), lp, cfg).reshape(B * Lt, d_model)
    enc_out, _ = pallas_add_rmsnorm(hidden, residual, params["norm_f_w"])
    enc_out = enc_out.reshape(B, Lt, d_model)

    # head: 'b (c l) d -> (b c) (l d)' ; Linear(d_model*seq_len//patch_len -> pred_len)
    flat = enc_out.reshape(B, C, num_patches, d_model).reshape(B * C, num_patches * d_model)
    dec = pallas_linear(flat, params["head_w"], params["head_b"])          # (B*C, pred_len)
    dec = dec.reshape(B, C, pred_len).transpose(0, 2, 1)                   # '(b c) p -> b p c'

    # RevIN denorm
    dec = dec * stdev[:, 0:1, :] + means[:, 0:1, :]
    return dec[:, -pred_len:, :]


# ----------------------------- parameters -----------------------------

def init_params(key, cfg):
    d_model = cfg["d_model"]
    d_inner = cfg["expand"] * d_model
    d_state, d_conv = cfg["d_state"], cfg["d_conv"]
    dt_rank = cfg["dt_rank"]
    num_patches = (cfg["seq_len"] - cfg["patch_len"]) // cfg["stride"] + 1

    keys = jax.random.split(key, 2 + cfg["e_layers"])
    rn = lambda k, shape, s: (s * jax.random.normal(k, shape)).astype(jnp.float32)

    params = {
        "emb_w": rn(keys[0], (cfg["patch_len"], d_model), 1.0 / math.sqrt(cfg["patch_len"])),
        "head_w": rn(keys[1], (d_model * num_patches, cfg["pred_len"]),
                     1.0 / math.sqrt(d_model * num_patches)),
        "head_b": jnp.zeros((cfg["pred_len"],), jnp.float32),
        "norm_f_w": jnp.ones((d_model,), jnp.float32),
        "layers": [],
    }
    for li in range(cfg["e_layers"]):
        ks = jax.random.split(keys[2 + li], 5)
        A = jnp.tile(jnp.arange(1, d_state + 1, dtype=jnp.float32)[None, :], (d_inner, 1))
        params["layers"].append(dict(
            norm_w=jnp.ones((d_model,), jnp.float32),
            in_proj_w=rn(ks[0], (d_model, 2 * d_inner), 1.0 / math.sqrt(d_model)),
            conv_w=rn(ks[1], (d_conv, d_inner), 0.3),
            conv_b=jnp.zeros((d_inner,), jnp.float32),
            x_proj_w=rn(ks[2], (d_inner, dt_rank + 2 * d_state), 1.0 / math.sqrt(d_inner)),
            dt_proj_w=rn(ks[3], (dt_rank, d_inner), 1.0 / math.sqrt(dt_rank)),
            dt_proj_b=jnp.full((d_inner,), math.log(math.expm1(0.01)), jnp.float32),
            A_log=jnp.log(A),
            D=jnp.ones((d_inner,), jnp.float32),
            out_proj_w=rn(ks[4], (d_inner, d_model), 1.0 / math.sqrt(d_inner)),
        ))
    return params


# ----------------------------- main -----------------------------

if __name__ == "__main__":
    cfg = dict(
        batch=2, seq_len=16, pred_len=8, enc_in=4,
        patch_len=4, stride=4, d_model=32, e_layers=2,
        d_state=16, d_conv=4, expand=2,
    )
    cfg["dt_rank"] = math.ceil(cfg["d_model"] / 16)

    key = jax.random.PRNGKey(0)
    k_x, k_p = jax.random.split(key)
    x_enc = jax.random.normal(k_x, (cfg["batch"], cfg["seq_len"], cfg["enc_in"]), jnp.float32)
    # x_mark_enc / x_dec / x_mark_dec are unused by the forecast path.
    params = init_params(k_p, cfg)

    fwd = jax.jit(lambda x: mamba_ts_forecast(x, params, cfg))
    out = fwd(x_enc)
    jax.block_until_ready(out)
    assert out.shape == (cfg["batch"], cfg["pred_len"], cfg["enc_in"]), out.shape
    assert bool(jnp.all(jnp.isfinite(out)))
    print("KERNEL_OK")
</pallas_src>

<mosaic_0001>
module attributes {stable_mosaic.version = 11 : i64} {
  func.func @_revin_kernel(%arg0: memref<2x16x4xf32, #tpu.memory_space<vmem>>, %arg1: memref<2x16x4xf32, #tpu.memory_space<vmem>>, %arg2: memref<2x1x4xf32, #tpu.memory_space<vmem>>, %arg3: memref<2x1x4xf32, #tpu.memory_space<vmem>>) attributes {dimension_semantics = [], scalar_prefetch = 0 : i64, scratch_operands = 0 : i64, tpu.core_type = #tpu.core_type<tc>} {
    %c0 = arith.constant 0 : index
    %c0_0 = arith.constant 0 : index
    %c0_1 = arith.constant 0 : index
    %0 = vector.load %arg0[%c0, %c0_0, %c0_1] : memref<2x16x4xf32, #tpu.memory_space<vmem>>, vector<2x16x4xf32>
    %cst = arith.constant dense<0.000000e+00> : vector<2x4xf32>
    %1 = vector.multi_reduction <add>, %0, %cst [1] : vector<2x16x4xf32> to vector<2x4xf32>
    %2 = vector.shape_cast %1 : vector<2x4xf32> to vector<2x1x4xf32>
    %cst_2 = arith.constant 1.600000e+01 : f32
    %3 = vector.broadcast %cst_2 : f32 to vector<2x1x4xf32>
    %4 = arith.divf %2, %3 : vector<2x1x4xf32>
    %5 = vector.broadcast %4 : vector<2x1x4xf32> to vector<2x16x4xf32>
    %6 = arith.subf %0, %5 : vector<2x16x4xf32>
    %7 = arith.mulf %6, %6 : vector<2x16x4xf32>
    %cst_3 = arith.constant dense<0.000000e+00> : vector<2x4xf32>
    %8 = vector.multi_reduction <add>, %7, %cst_3 [1] : vector<2x16x4xf32> to vector<2x4xf32>
    %9 = vector.shape_cast %8 : vector<2x4xf32> to vector<2x1x4xf32>
    %cst_4 = arith.constant 1.600000e+01 : f32
    %10 = vector.broadcast %cst_4 : f32 to vector<2x1x4xf32>
    %11 = arith.divf %9, %10 : vector<2x1x4xf32>
    %cst_5 = arith.constant 9.99999974E-6 : f32
    %12 = vector.broadcast %cst_5 : f32 to vector<2x1x4xf32>
    %13 = arith.addf %11, %12 : vector<2x1x4xf32>
    %14 = math.sqrt %13 : vector<2x1x4xf32>
    %c0_6 = arith.constant 0 : index
    %c0_7 = arith.constant 0 : index
    %c0_8 = arith.constant 0 : index
    %15 = vector.load %arg3[%c0_6, %c0_7, %c0_8] : memref<2x1x4xf32, #tpu.memory_space<vmem>>, vector<2x1x4xf32>
    tpu.vector_store %arg3[%c0_6, %c0_7, %c0_8], %14 {strides = array<i32>} : memref<2x1x4xf32, #tpu.memory_space<vmem>>, vector<2x1x4xf32>,
    %cst_9 = arith.constant 9.99999974E-6 : f32
    %16 = vector.broadcast %cst_9 : f32 to vector<2x1x4xf32>
    %17 = arith.addf %11, %16 : vector<2x1x4xf32>
    %18 = math.rsqrt %17 : vector<2x1x4xf32>
    %19 = vector.broadcast %18 : vector<2x1x4xf32> to vector<2x16x4xf32>
    %20 = arith.mulf %6, %19 : vector<2x16x4xf32>
    %c0_10 = arith.constant 0 : index
    %c0_11 = arith.constant 0 : index
    %c0_12 = arith.constant 0 : index
    %21 = vector.load %arg1[%c0_10, %c0_11, %c0_12] : memref<2x16x4xf32, #tpu.memory_space<vmem>>, vector<2x16x4xf32>
    tpu.vector_store %arg1[%c0_10, %c0_11, %c0_12], %20 {strides = array<i32>} : memref<2x16x4xf32, #tpu.memory_space<vmem>>, vector<2x16x4xf32>,
    %c0_13 = arith.constant 0 : index
    %c0_14 = arith.constant 0 : index
    %c0_15 = arith.constant 0 : index
    %22 = vector.load %arg2[%c0_13, %c0_14, %c0_15] : memref<2x1x4xf32, #tpu.memory_space<vmem>>, vector<2x1x4xf32>
    tpu.vector_store %arg2[%c0_13, %c0_14, %c0_15], %4 {strides = array<i32>} : memref<2x1x4xf32, #tpu.memory_space<vmem>>, vector<2x1x4xf32>,
    return
  }
}

module attributes {stable_mosaic.version = 11 : i64} {
  func.func @_add_rmsnorm_kernel(%arg0: i32, %arg1: memref<32x32xf32, #tpu.memory_space<vmem>>, %arg2: memref<32x32xf32, #tpu.memory_space<vmem>>, %arg3: memref<1x32xf32, #tpu.memory_space<vmem>>, %arg4: memref<32x32xf32, #tpu.memory_space<vmem>>, %arg5: memref<32x32xf32, #tpu.memory_space<vmem>>) attributes {dimension_semantics = [#tpu.dimension_semantics<parallel>], iteration_bounds = array<i64: 1>, scalar_prefetch = 0 : i64, scratch_operands = 0 : i64, tpu.core_type = #tpu.core_type<tc>, window_params = [{transform_indices = @transform_0, window_bounds = array<i64: 32, 32>}, {transform_indices = @transform_1, window_bounds = array<i64: 32, 32>}, {pipeline_mode = #tpu.pipeline_mode<synchronous>, transform_indices = @transform_2, window_bounds = array<i64: 1, 32>}, {transform_indices = @transform_3, window_bounds = array<i64: 32, 32>}, {transform_indices = @transform_4, window_bounds = array<i64: 32, 32>}]} {
    %c0 = arith.constant 0 : index
    %c0_0 = arith.constant 0 : index
    %0 = vector.load %arg1[%c0, %c0_0] : memref<32x32xf32, #tpu.memory_space<vmem>>, vector<32x32xf32>
    %c0_1 = arith.constant 0 : index
    %c0_2 = arith.constant 0 : index
    %1 = vector.load %arg2[%c0_1, %c0_2] : memref<32x32xf32, #tpu.memory_space<vmem>>, vector<32x32xf32>
    %2 = arith.addf %0, %1 : vector<32x32xf32>
    %c0_3 = arith.constant 0 : index
    %c0_4 = arith.constant 0 : index
    %3 = vector.load %arg5[%c0_3, %c0_4] : memref<32x32xf32, #tpu.memory_space<vmem>>, vector<32x32xf32>
    tpu.vector_store %arg5[%c0_3, %c0_4], %2 {strides = array<i32>} : memref<32x32xf32, #tpu.memory_space<vmem>>, vector<32x32xf32>,
    %4 = arith.mulf %2, %2 : vector<32x32xf32>
    %cst = arith.constant dense<0.000000e+00> : vector<32xf32>
    %5 = vector.multi_reduction <add>, %4, %cst [1] : vector<32x32xf32> to vector<32xf32>
    %6 = vector.shape_cast %5 : vector<32xf32> to vector<32x1xf32>
    %cst_5 = arith.constant 3.200000e+01 : f32
    %7 = vector.broadcast %cst_5 : f32 to vector<32x1xf32>
    %8 = arith.divf %6, %7 : vector<32x1xf32>
    %cst_6 = arith.constant 9.99999974E-6 : f32
    %9 = vector.broadcast %cst_6 : f32 to vector<32x1xf32>
    %10 = arith.addf %8, %9 : vector<32x1xf32>
    %11 = math.rsqrt %10 : vector<32x1xf32>
    %12 = vector.broadcast %11 : vector<32x1xf32> to vector<32x32xf32>
    %13 = arith.mulf %2, %12 : vector<32x32xf32>
    %c0_7 = arith.constant 0 : index
    %c0_8 = arith.constant 0 : index
    %14 = vector.load %arg3[%c0_7, %c0_8] : memref<1x32xf32, #tpu.memory_space<vmem>>, vector<1x32xf32>
    %15 = vector.broadcast %14 : vector<1x32xf32> to vector<32x32xf32>
    %16 = arith.mulf %13, %15 : vector<32x32xf32>
    %c0_9 = arith.constant 0 : index
    %c0_10 = arith.constant 0 : index
    %17 = vector.load %arg4[%c0_9, %c0_10] : memref<32x32xf32, #tpu.memory_space<vmem>>, vector<32x32xf32>
    tpu.vector_store %arg4[%c0_9, %c0_10], %16 {strides = array<i32>} : memref<32x32xf32, #tpu.memory_space<vmem>>, vector<32x32xf32>,
    return
  }
  func.func @transform_0(%arg0: i32) -> (i32, i32) {
    %c0_i32 = arith.constant 0 : i32
    %c0_i32_0 = arith.constant 0 : i32
    return %arg0, %c0_i32 : i32, i32
  }
  func.func @transform_1(%arg0: i32) -> (i32, i32) {
    %c0_i32 = arith.constant 0 : i32
    %c0_i32_0 = arith.constant 0 : i32
    return %arg0, %c0_i32 : i32, i32
  }
  func.func @transform_2(%arg0: i32) -> (i32, i32) {
    %c0_i32 = arith.constant 0 : i32
    %c0_i32_0 = arith.constant 0 : i32
    %c0_i32_1 = arith.constant 0 : i32
    return %c0_i32, %c0_i32_0 : i32, i32
  }
  func.func @transform_3(%arg0: i32) -> (i32, i32) {
    %c0_i32 = arith.constant 0 : i32
    %c0_i32_0 = arith.constant 0 : i32
    return %arg0, %c0_i32 : i32, i32
  }
  func.func @transform_4(%arg0: i32) -> (i32, i32) {
    %c0_i32 = arith.constant 0 : i32
    %c0_i32_0 = arith.constant 0 : i32
    return %arg0, %c0_i32 : i32, i32
  }
}

module attributes {stable_mosaic.version = 11 : i64} {
  func.func @_linear_kernel(%arg0: i32, %arg1: i32, %arg2: memref<32x4xbf16, #tpu.memory_space<vmem>>, %arg3: memref<4x32xbf16, #tpu.memory_space<vmem>>, %arg4: memref<1x32xf32, #tpu.memory_space<vmem>>, %arg5: memref<32x32xf32, #tpu.memory_space<vmem>>, %arg6: memref<32x32xf32, #tpu.memory_space<vmem>>) attributes {dimension_semantics = [#tpu.dimension_semantics<parallel>, #tpu.dimension_semantics<arbitrary>], iteration_bounds = array<i64: 1, 1>, scalar_prefetch = 0 : i64, scratch_operands = 1 : i64, tpu.core_type = #tpu.core_type<tc>, window_params = [{transform_indices = @transform_0, window_bounds = array<i64: 32, 4>}, {transform_indices = @transform_1, window_bounds = array<i64: 4, 32>}, {pipeline_mode = #tpu.pipeline_mode<synchronous>, transform_indices = @transform_2, window_bounds = array<i64: 1, 32>}, {transform_indices = @transform_3, window_bounds = array<i64: 32, 32>}]} {
    %c0_i32 = arith.constant 0 : i32
    %0 = arith.cmpi eq, %arg1, %c0_i32 : i32
    %1 = arith.extui %0 : i1 to i32
    %c0_i32_0 = arith.constant 0 : i32
    %2 = arith.cmpi ne, %1, %c0_i32_0 : i32
    scf.if %2 {
      %cst_10 = arith.constant 0.000000e+00 : f32
      %12 = vector.broadcast %cst_10 : f32 to vector<32x32xf32>
      %c0_11 = arith.constant 0 : index
      %c0_12 = arith.constant 0 : index
      %13 = vector.load %arg6[%c0_11, %c0_12] : memref<32x32xf32, #tpu.memory_space<vmem>>, vector<32x32xf32>
      tpu.vector_store %arg6[%c0_11, %c0_12], %12 {strides = array<i32>} : memref<32x32xf32, #tpu.memory_space<vmem>>, vector<32x32xf32>,
    } else {
    }
    %c0 = arith.constant 0 : index
    %c0_1 = arith.constant 0 : index
    %3 = vector.load %arg6[%c0, %c0_1] : memref<32x32xf32, #tpu.memory_space<vmem>>, vector<32x32xf32>
    %c0_2 = arith.constant 0 : index
    %c0_3 = arith.constant 0 : index
    %4 = vector.load %arg2[%c0_2, %c0_3] : memref<32x4xbf16, #tpu.memory_space<vmem>>, vector<32x4xbf16>
    %c0_4 = arith.constant 0 : index
    %c0_5 = arith.constant 0 : index
    %5 = vector.load %arg3[%c0_4, %c0_5] : memref<4x32xbf16, #tpu.memory_space<vmem>>, vector<4x32xbf16>
    %cst = arith.constant dense<0.000000e+00> : vector<32x32xf32>
    %6 = tpu.matmul %4, %5, %cst {dimension_numbers = #tpu.dot_dimension_numbers<[1], [0], [0], [1], [0, 0, 1, 1], [], []>} : vector<32x4xbf16>, vector<4x32xbf16>, vector<32x32xf32> -> vector<32x32xf32>
    %7 = arith.addf %3, %6 : vector<32x32xf32>
    %c0_6 = arith.constant 0 : index
    %c0_7 = arith.constant 0 : index
    %8 = vector.load %arg6[%c0_6, %c0_7] : memref<32x32xf32, #tpu.memory_space<vmem>>, vector<32x32xf32>
    tpu.vector_store %arg6[%c0_6, %c0_7], %7 {strides = array<i32>} : memref<32x32xf32, #tpu.memory_space<vmem>>, vector<32x32xf32>,
    %c0_i32_8 = arith.constant 0 : i32
    %9 = arith.cmpi eq, %arg1, %c0_i32_8 : i32
    %10 = arith.extui %9 : i1 to i32
    %c0_i32_9 = arith.constant 0 : i32
    %11 = arith.cmpi ne, %10, %c0_i32_9 : i32
    scf.if %11 {
      %c0_10 = arith.constant 0 : index
      %c0_11 = arith.constant 0 : index
      %12 = vector.load %arg6[%c0_10, %c0_11] : memref<32x32xf32, #tpu.memory_space<vmem>>, vector<32x32xf32>
      %c0_12 = arith.constant 0 : index
      %c0_13 = arith.constant 0 : index
      %13 = vector.load %arg4[%c0_12, %c0_13] : memref<1x32xf32, #tpu.memory_space<vmem>>, vector<1x32xf32>
      %14 = vector.broadcast %13 : vector<1x32xf32> to vector<32x32xf32>
      %15 = arith.addf %12, %14 : vector<32x32xf32>
      %c0_14 = arith.constant 0 : index
      %c0_15 = arith.constant 0 : index
      %16 = vector.load %arg5[%c0_14, %c0_15] : memref<32x32xf32, #tpu.memory_space<vmem>>, vector<32x32xf32>
      tpu.vector_store %arg5[%c0_14, %c0_15], %15 {strides = array<i32>} : memref<32x32xf32, #tpu.memory_space<vmem>>, vector<32x32xf32>,
    } else {
    }
    return
  }
  func.func @transform_0(%arg0: i32, %arg1: i32) -> (i32, i32) {
    %c0_i32 = arith.constant 0 : i32
    return %arg0, %arg1 : i32, i32
  }
  func.func @transform_1(%arg0: i32, %arg1: i32) -> (i32, i32) {
    %c0_i32 = arith.constant 0 : i32
    %c0_i32_0 = arith.constant 0 : i32
    return %arg1, %c0_i32 : i32, i32
  }
  func.func @transform_2(%arg0: i32, %arg1: i32) -> (i32, i32) {
    %c0_i32 = arith.constant 0 : i32
    %c0_i32_0 = arith.constant 0 : i32
    %c0_i32_1 = arith.constant 0 : i32
    return %c0_i32, %c0_i32_0 : i32, i32
  }
  func.func @transform_3(%arg0: i32, %arg1: i32) -> (i32, i32) {
    %c0_i32 = arith.constant 0 : i32
    %c0_i32_0 = arith.constant 0 : i32
    return %arg0, %c0_i32 : i32, i32
  }
}

module attributes {stable_mosaic.version = 11 : i64} {
  func.func @_linear_kernel(%arg0: i32, %arg1: i32, %arg2: memref<32x32xbf16, #tpu.memory_space<vmem>>, %arg3: memref<32x128xbf16, #tpu.memory_space<vmem>>, %arg4: memref<1x128xf32, #tpu.memory_space<vmem>>, %arg5: memref<32x128xf32, #tpu.memory_space<vmem>>, %arg6: memref<32x128xf32, #tpu.memory_space<vmem>>) attributes {dimension_semantics = [#tpu.dimension_semantics<parallel>, #tpu.dimension_semantics<arbitrary>], iteration_bounds = array<i64: 1, 1>, scalar_prefetch = 0 : i64, scratch_operands = 1 : i64, tpu.core_type = #tpu.core_type<tc>, window_params = [{transform_indices = @transform_0, window_bounds = array<i64: 32, 32>}, {transform_indices = @transform_1, window_bounds = array<i64: 32, 128>}, {pipeline_mode = #tpu.pipeline_mode<synchronous>, transform_indices = @transform_2, window_bounds = array<i64: 1, 128>}, {transform_indices = @transform_3, window_bounds = array<i64: 32, 128>}]} {
    %c0_i32 = arith.constant 0 : i32
    %0 = arith.cmpi eq, %arg1, %c0_i32 : i32
    %1 = arith.extui %0 : i1 to i32
    %c0_i32_0 = arith.constant 0 : i32
    %2 = arith.cmpi ne, %1, %c0_i32_0 : i32
    scf.if %2 {
      %cst_10 = arith.constant 0.000000e+00 : f32
      %12 = vector.broadcast %cst_10 : f32 to vector<32x128xf32>
      %c0_11 = arith.constant 0 : index
      %c0_12 = arith.constant 0 : index
      %13 = vector.load %arg6[%c0_11, %c0_12] : memref<32x128xf32, #tpu.memory_space<vmem>>, vector<32x128xf32>
      tpu.vector_store %arg6[%c0_11, %c0_12], %12 {strides = array<i32>} : memref<32x128xf32, #tpu.memory_space<vmem>>, vector<32x128xf32>,
    } else {
    }
    %c0 = arith.constant 0 : index
    %c0_1 = arith.constant 0 : index
    %3 = vector.load %arg6[%c0, %c0_1] : memref<32x128xf32, #tpu.memory_space<vmem>>, vector<32x128xf32>
    %c0_2 = arith.constant 0 : index
    %c0_3 = arith.constant 0 : index
    %4 = vector.load %arg2[%c0_2, %c0_3] : memref<32x32xbf16, #tpu.memory_space<vmem>>, vector<32x32xbf16>
    %c0_4 = arith.constant 0 : index
    %c0_5 = arith.constant 0 : index
    %5 = vector.load %arg3[%c0_4, %c0_5] : memref<32x128xbf16, #tpu.memory_space<vmem>>, vector<32x128xbf16>
    %cst = arith.constant dense<0.000000e+00> : vector<32x128xf32>
    %6 = tpu.matmul %4, %5, %cst {dimension_numbers = #tpu.dot_dimension_numbers<[1], [0], [0], [1], [0, 0, 1, 1], [], []>} : vector<32x32xbf16>, vector<32x128xbf16>, vector<32x128xf32> -> vector<32x128xf32>
    %7 = arith.addf %3, %6 : vector<32x128xf32>
    %c0_6 = arith.constant 0 : index
    %c0_7 = arith.constant 0 : index
    %8 = vector.load %arg6[%c0_6, %c0_7] : memref<32x128xf32, #tpu.memory_space<vmem>>, vector<32x128xf32>
    tpu.vector_store %arg6[%c0_6, %c0_7], %7 {strides = array<i32>} : memref<32x128xf32, #tpu.memory_space<vmem>>, vector<32x128xf32>,
    %c0_i32_8 = arith.constant 0 : i32
    %9 = arith.cmpi eq, %arg1, %c0_i32_8 : i32
    %10 = arith.extui %9 : i1 to i32
    %c0_i32_9 = arith.constant 0 : i32
    %11 = arith.cmpi ne, %10, %c0_i32_9 : i32
    scf.if %11 {
      %c0_10 = arith.constant 0 : index
      %c0_11 = arith.constant 0 : index
      %12 = vector.load %arg6[%c0_10, %c0_11] : memref<32x128xf32, #tpu.memory_space<vmem>>, vector<32x128xf32>
      %c0_12 = arith.constant 0 : index
      %c0_13 = arith.constant 0 : index
      %13 = vector.load %arg4[%c0_12, %c0_13] : memref<1x128xf32, #tpu.memory_space<vmem>>, vector<1x128xf32>
      %14 = vector.broadcast %13 : vector<1x128xf32> to vector<32x128xf32>
      %15 = arith.addf %12, %14 : vector<32x128xf32>
      %c0_14 = arith.constant 0 : index
      %c0_15 = arith.constant 0 : index
      %16 = vector.load %arg5[%c0_14, %c0_15] : memref<32x128xf32, #tpu.memory_space<vmem>>, vector<32x128xf32>
      tpu.vector_store %arg5[%c0_14, %c0_15], %15 {strides = array<i32>} : memref<32x128xf32, #tpu.memory_space<vmem>>, vector<32x128xf32>,
    } else {
    }
    return
  }
  func.func @transform_0(%arg0: i32, %arg1: i32) -> (i32, i32) {
    %c0_i32 = arith.constant 0 : i32
    return %arg0, %arg1 : i32, i32
  }
  func.func @transform_1(%arg0: i32, %arg1: i32) -> (i32, i32) {
    %c0_i32 = arith.constant 0 : i32
    %c0_i32_0 = arith.constant 0 : i32
    return %arg1, %c0_i32 : i32, i32
  }
  func.func @transform_2(%arg0: i32, %arg1: i32) -> (i32, i32) {
    %c0_i32 = arith.constant 0 : i32
    %c0_i32_0 = arith.constant 0 : i32
    %c0_i32_1 = arith.constant 0 : i32
    return %c0_i32, %c0_i32_0 : i32, i32
  }
  func.func @transform_3(%arg0: i32, %arg1: i32) -> (i32, i32) {
    %c0_i32 = arith.constant 0 : i32
    %c0_i32_0 = arith.constant 0 : i32
    return %arg0, %c0_i32 : i32, i32
  }
}

module attributes {stable_mosaic.version = 11 : i64} {
  func.func @kernel(%arg0: i32, %arg1: memref<1x16x64xf32, #tpu.memory_space<vmem>>, %arg2: memref<4x64xf32, #tpu.memory_space<vmem>>, %arg3: memref<1x64xf32, #tpu.memory_space<vmem>>, %arg4: memref<1x16x64xf32, #tpu.memory_space<vmem>>) attributes {dimension_semantics = [#tpu.dimension_semantics<parallel>], iteration_bounds = array<i64: 2>, scalar_prefetch = 0 : i64, scratch_operands = 0 : i64, tpu.core_type = #tpu.core_type<tc>, window_params = [{transform_indices = @transform_0, window_bounds = array<i64: 1, 16, 64>}, {pipeline_mode = #tpu.pipeline_mode<synchronous>, transform_indices = @transform_1, window_bounds = array<i64: 4, 64>}, {pipeline_mode = #tpu.pipeline_mode<synchronous>, transform_indices = @transform_2, window_bounds = array<i64: 1, 64>}, {transform_indices = @transform_3, window_bounds = array<i64: 1, 16, 64>}]} {
    %c0 = arith.constant 0 : index
    %c0_0 = arith.constant 0 : index
    %c0_1 = arith.constant 0 : index
    %0 = vector.load %arg1[%c0, %c0_0, %c0_1] : memref<1x16x64xf32, #tpu.memory_space<vmem>>, vector<1x16x64xf32>
    %1 = vector.shape_cast %0 : vector<1x16x64xf32> to vector<16x64xf32>
    %c3 = arith.constant 3 : index
    %c0_2 = arith.constant 0 : index
    %2 = vector.load %arg2[%c3, %c0_2] : memref<4x64xf32, #tpu.memory_space<vmem>>, vector<1x64xf32>
    %3 = vector.broadcast %2 : vector<1x64xf32> to vector<16x64xf32>
    %4 = arith.mulf %1, %3 : vector<16x64xf32>
    %cst = arith.constant 0.000000e+00 : f32
    %5 = vector.broadcast %cst : f32 to vector<1x64xf32>
    %6 = vector.extract_strided_slice %1 {offsets = [0, 0], sizes = [15, 64], strides = [1, 1]} : vector<16x64xf32> to vector<15x64xf32>
    %7 = tpu.concatenate %5, %6 in 0 : vector<1x64xf32>, vector<15x64xf32> -> vector<16x64xf32>
    %c2 = arith.constant 2 : index
    %c0_3 = arith.constant 0 : index
    %8 = vector.load %arg2[%c2, %c0_3] : memref<4x64xf32, #tpu.memory_space<vmem>>, vector<1x64xf32>
    %9 = vector.broadcast %8 : vector<1x64xf32> to vector<16x64xf32>
    %10 = arith.mulf %7, %9 : vector<16x64xf32>
    %11 = arith.addf %4, %10 : vector<16x64xf32>
    %cst_4 = arith.constant 0.000000e+00 : f32
    %12 = vector.broadcast %cst_4 : f32 to vector<2x64xf32>
    %13 = vector.extract_strided_slice %1 {offsets = [0, 0], sizes = [14, 64], strides = [1, 1]} : vector<16x64xf32> to vector<14x64xf32>
    %14 = tpu.concatenate %12, %13 in 0 : vector<2x64xf32>, vector<14x64xf32> -> vector<16x64xf32>
    %c1 = arith.constant 1 : index
    %c0_5 = arith.constant 0 : index
    %15 = vector.load %arg2[%c1, %c0_5] : memref<4x64xf32, #tpu.memory_space<vmem>>, vector<1x64xf32>
    %16 = vector.broadcast %15 : vector<1x64xf32> to vector<16x64xf32>
    %17 = arith.mulf %14, %16 : vector<16x64xf32>
    %18 = arith.addf %11, %17 : vector<16x64xf32>
    %cst_6 = arith.constant 0.000000e+00 : f32
    %19 = vector.broadcast %cst_6 : f32 to vector<3x64xf32>
    %20 = vector.extract_strided_slice %1 {offsets = [0, 0], sizes = [13, 64], strides = [1, 1]} : vector<16x64xf32> to vector<13x64xf32>
    %21 = tpu.concatenate %19, %20 in 0 : vector<3x64xf32>, vector<13x64xf32> -> vector<16x64xf32>
    %c0_7 = arith.constant 0 : index
    %c0_8 = arith.constant 0 : index
    %22 = vector.load %arg2[%c0_7, %c0_8] : memref<4x64xf32, #tpu.memory_space<vmem>>, vector<1x64xf32>
    %23 = vector.broadcast %22 : vector<1x64xf32> to vector<16x64xf32>
    %24 = arith.mulf %21, %23 : vector<16x64xf32>
    %25 = arith.addf %18, %24 : vector<16x64xf32>
    %c0_9 = arith.constant 0 : index
    %c0_10 = arith.constant 0 : index
    %26 = vector.load %arg3[%c0_9, %c0_10] : memref<1x64xf32, #tpu.memory_space<vmem>>, vector<1x64xf32>
    %27 = vector.broadcast %26 : vector<1x64xf32> to vector<16x64xf32>
    %28 = arith.addf %25, %27 : vector<16x64xf32>
    %cst_11 = arith.constant 0.000000e+00 : f32
    %29 = vector.broadcast %cst_11 : f32 to vector<16x64xf32>
    %30 = arith.subf %29, %28 : vector<16x64xf32>
    %31 = math.exp %30 : vector<16x64xf32>
    %cst_12 = arith.constant 1.000000e+00 : f32
    %32 = vector.broadcast %cst_12 : f32 to vector<16x64xf32>
    %33 = arith.addf %32, %31 : vector<16x64xf32>
    %34 = tpu.reciprocal %33 {approx = true} : vector<16x64xf32> -> vector<16x64xf32>
    %35 = arith.mulf %28, %34 : vector<16x64xf32>
    %c0_13 = arith.constant 0 : index
    %c0_14 = arith.constant 0 : index
    %c0_15 = arith.constant 0 : index
    %36 = vector.load %arg4[%c0_13, %c0_14, %c0_15] : memref<1x16x64xf32, #tpu.memory_space<vmem>>, vector<1x16x64xf32>
    %37 = vector.shape_cast %36 : vector<1x16x64xf32> to vector<16x64xf32>
    %38 = vector.shape_cast %35 : vector<16x64xf32> to vector<1x16x64xf32>
    tpu.vector_store %arg4[%c0_13, %c0_14, %c0_15], %38 {strides = array<i32>} : memref<1x16x64xf32, #tpu.memory_space<vmem>>, vector<1x16x64xf32>,
    return
  }
  func.func @transform_0(%arg0: i32) -> (i32, i32, i32) {
    %c0_i32 = arith.constant 0 : i32
    %c0_i32_0 = arith.constant 0 : i32
    %c0_i32_1 = arith.constant 0 : i32
    return %arg0, %c0_i32, %c0_i32_0 : i32, i32, i32
  }
  func.func @transform_1(%arg0: i32) -> (i32, i32) {
    %c0_i32 = arith.constant 0 : i32
    %c0_i32_0 = arith.constant 0 : i32
    %c0_i32_1 = arith.constant 0 : i32
    return %c0_i32, %c0_i32_0 : i32, i32
  }
  func.func @transform_2(%arg0: i32) -> (i32, i32) {
    %c0_i32 = arith.constant 0 : i32
    %c0_i32_0 = arith.constant 0 : i32
    %c0_i32_1 = arith.constant 0 : i32
    return %c0_i32, %c0_i32_0 : i32, i32
  }
  func.func @transform_3(%arg0: i32) -> (i32, i32, i32) {
    %c0_i32 = arith.constant 0 : i32
    %c0_i32_0 = arith.constant 0 : i32
    %c0_i32_1 = arith.constant 0 : i32
    return %arg0, %c0_i32, %c0_i32_0 : i32, i32, i32
  }
}

module attributes {stable_mosaic.version = 11 : i64} {
  func.func @_linear_kernel(%arg0: i32, %arg1: i32, %arg2: memref<32x64xbf16, #tpu.memory_space<vmem>>, %arg3: memref<64x34xbf16, #tpu.memory_space<vmem>>, %arg4: memref<1x34xf32, #tpu.memory_space<vmem>>, %arg5: memref<32x34xf32, #tpu.memory_space<vmem>>, %arg6: memref<32x34xf32, #tpu.memory_space<vmem>>) attributes {dimension_semantics = [#tpu.dimension_semantics<parallel>, #tpu.dimension_semantics<arbitrary>], iteration_bounds = array<i64: 1, 1>, scalar_prefetch = 0 : i64, scratch_operands = 1 : i64, tpu.core_type = #tpu.core_type<tc>, window_params = [{transform_indices = @transform_0, window_bounds = array<i64: 32, 64>}, {transform_indices = @transform_1, window_bounds = array<i64: 64, 34>}, {pipeline_mode = #tpu.pipeline_mode<synchronous>, transform_indices = @transform_2, window_bounds = array<i64: 1, 34>}, {transform_indices = @transform_3, window_bounds = array<i64: 32, 34>}]} {
    %c0_i32 = arith.constant 0 : i32
    %0 = arith.cmpi eq, %arg1, %c0_i32 : i32
    %1 = arith.extui %0 : i1 to i32
    %c0_i32_0 = arith.constant 0 : i32
    %2 = arith.cmpi ne, %1, %c0_i32_0 : i32
    scf.if %2 {
      %cst_10 = arith.constant 0.000000e+00 : f32
      %12 = vector.broadcast %cst_10 : f32 to vector<32x34xf32>
      %c0_11 = arith.constant 0 : index
      %c0_12 = arith.constant 0 : index
      %13 = vector.load %arg6[%c0_11, %c0_12] : memref<32x34xf32, #tpu.memory_space<vmem>>, vector<32x34xf32>
      tpu.vector_store %arg6[%c0_11, %c0_12], %12 {strides = array<i32>} : memref<32x34xf32, #tpu.memory_space<vmem>>, vector<32x34xf32>,
    } else {
    }
    %c0 = arith.constant 0 : index
    %c0_1 = arith.constant 0 : index
    %3 = vector.load %arg6[%c0, %c0_1] : memref<32x34xf32, #tpu.memory_space<vmem>>, vector<32x34xf32>
    %c0_2 = arith.constant 0 : index
    %c0_3 = arith.constant 0 : index
    %4 = vector.load %arg2[%c0_2, %c0_3] : memref<32x64xbf16, #tpu.memory_space<vmem>>, vector<32x64xbf16>
    %c0_4 = arith.constant 0 : index
    %c0_5 = arith.constant 0 : index
    %5 = vector.load %arg3[%c0_4, %c0_5] : memref<64x34xbf16, #tpu.memory_space<vmem>>, vector<64x34xbf16>
    %cst = arith.constant dense<0.000000e+00> : vector<32x34xf32>
    %6 = tpu.matmul %4, %5, %cst {dimension_numbers = #tpu.dot_dimension_numbers<[1], [0], [0], [1], [0, 0, 1, 1], [], []>} : vector<32x64xbf16>, vector<64x34xbf16>, vector<32x34xf32> -> vector<32x34xf32>
    %7 = arith.addf %3, %6 : vector<32x34xf32>
    %c0_6 = arith.constant 0 : index
    %c0_7 = arith.constant 0 : index
    %8 = vector.load %arg6[%c0_6, %c0_7] : memref<32x34xf32, #tpu.memory_space<vmem>>, vector<32x34xf32>
    tpu.vector_store %arg6[%c0_6, %c0_7], %7 {strides = array<i32>} : memref<32x34xf32, #tpu.memory_space<vmem>>, vector<32x34xf32>,
    %c0_i32_8 = arith.constant 0 : i32
    %9 = arith.cmpi eq, %arg1, %c0_i32_8 : i32
    %10 = arith.extui %9 : i1 to i32
    %c0_i32_9 = arith.constant 0 : i32
    %11 = arith.cmpi ne, %10, %c0_i32_9 : i32
    scf.if %11 {
      %c0_10 = arith.constant 0 : index
      %c0_11 = arith.constant 0 : index
      %12 = vector.load %arg6[%c0_10, %c0_11] : memref<32x34xf32, #tpu.memory_space<vmem>>, vector<32x34xf32>
      %c0_12 = arith.constant 0 : index
      %c0_13 = arith.constant 0 : index
      %13 = vector.load %arg4[%c0_12, %c0_13] : memref<1x34xf32, #tpu.memory_space<vmem>>, vector<1x34xf32>
      %14 = vector.broadcast %13 : vector<1x34xf32> to vector<32x34xf32>
      %15 = arith.addf %12, %14 : vector<32x34xf32>
      %c0_14 = arith.constant 0 : index
      %c0_15 = arith.constant 0 : index
      %16 = vector.load %arg5[%c0_14, %c0_15] : memref<32x34xf32, #tpu.memory_space<vmem>>, vector<32x34xf32>
      tpu.vector_store %arg5[%c0_14, %c0_15], %15 {strides = array<i32>} : memref<32x34xf32, #tpu.memory_space<vmem>>, vector<32x34xf32>,
    } else {
    }
    return
  }
  func.func @transform_0(%arg0: i32, %arg1: i32) -> (i32, i32) {
    %c0_i32 = arith.constant 0 : i32
    return %arg0, %arg1 : i32, i32
  }
  func.func @transform_1(%arg0: i32, %arg1: i32) -> (i32, i32) {
    %c0_i32 = arith.constant 0 : i32
    %c0_i32_0 = arith.constant 0 : i32
    return %arg1, %c0_i32 : i32, i32
  }
  func.func @transform_2(%arg0: i32, %arg1: i32) -> (i32, i32) {
    %c0_i32 = arith.constant 0 : i32
    %c0_i32_0 = arith.constant 0 : i32
    %c0_i32_1 = arith.constant 0 : i32
    return %c0_i32, %c0_i32_0 : i32, i32
  }
  func.func @transform_3(%arg0: i32, %arg1: i32) -> (i32, i32) {
    %c0_i32 = arith.constant 0 : i32
    %c0_i32_0 = arith.constant 0 : i32
    return %arg0, %c0_i32 : i32, i32
  }
}

module attributes {stable_mosaic.version = 11 : i64} {
  func.func @kernel(%arg0: i32, %arg1: i32, %arg2: memref<1x16x64xf32, #tpu.memory_space<vmem>>, %arg3: memref<1x16x64xf32, #tpu.memory_space<vmem>>, %arg4: memref<1x1x16x16xf32, #tpu.memory_space<vmem>>, %arg5: memref<1x1x16x16xf32, #tpu.memory_space<vmem>>, %arg6: memref<1x16x64xf32, #tpu.memory_space<vmem>>, %arg7: memref<16x64xf32, #tpu.memory_space<vmem>>, %arg8: memref<1x64xf32, #tpu.memory_space<vmem>>, %arg9: memref<1x16x64xf32, #tpu.memory_space<vmem>>, %arg10: memref<16x64xf32, #tpu.memory_space<vmem>>) attributes {dimension_semantics = [#tpu.dimension_semantics<parallel>, #tpu.dimension_semantics<arbitrary>], iteration_bounds = array<i64: 2, 1>, scalar_prefetch = 0 : i64, scratch_operands = 1 : i64, tpu.core_type = #tpu.core_type<tc>, window_params = [{transform_indices = @transform_0, window_bounds = array<i64: 1, 16, 64>}, {transform_indices = @transform_1, window_bounds = array<i64: 1, 16, 64>}, {transform_indices = @transform_2, window_bounds = array<i64: 1, 1, 16, 16>}, {transform_indices = @transform_3, window_bounds = array<i64: 1, 1, 16, 16>}, {transform_indices = @transform_4, window_bounds = array<i64: 1, 16, 64>}, {pipeline_mode = #tpu.pipeline_mode<synchronous>, transform_indices = @transform_5, window_bounds = array<i64: 16, 64>}, {pipeline_mode = #tpu.pipeline_mode<synchronous>, transform_indices = @transform_6, window_bounds = array<i64: 1, 64>}, {transform_indices = @transform_7, window_bounds = array<i64: 1, 16, 64>}]} {
    %c0_i32 = arith.constant 0 : i32
    %0 = arith.cmpi eq, %arg1, %c0_i32 : i32
    %1 = arith.extui %0 : i1 to i32
    %c0_i32_0 = arith.constant 0 : i32
    %2 = arith.cmpi ne, %1, %c0_i32_0 : i32
    scf.if %2 {
      %cst_42 = arith.constant 0.000000e+00 : f32
      %153 = vector.broadcast %cst_42 : f32 to vector<16x64xf32>
      %c0_43 = arith.constant 0 : index
      %c0_44 = arith.constant 0 : index
      %154 = vector.load %arg10[%c0_43, %c0_44] : memref<16x64xf32, #tpu.memory_space<vmem>>, vector<16x64xf32>
      tpu.vector_store %arg10[%c0_43, %c0_44], %153 {strides = array<i32>} : memref<16x64xf32, #tpu.memory_space<vmem>>, vector<16x64xf32>,
    } else {
    }
    %c0 = arith.constant 0 : index
    %c0_1 = arith.constant 0 : index
    %c0_2 = arith.constant 0 : index
    %3 = vector.load %arg2[%c0, %c0_1, %c0_2] : memref<1x16x64xf32, #tpu.memory_space<vmem>>, vector<1x16x64xf32>
    %4 = vector.shape_cast %3 : vector<1x16x64xf32> to vector<16x64xf32>
    %c0_3 = arith.constant 0 : index
    %c0_4 = arith.constant 0 : index
    %c0_5 = arith.constant 0 : index
    %5 = vector.load %arg3[%c0_3, %c0_4, %c0_5] : memref<1x16x64xf32, #tpu.memory_space<vmem>>, vector<1x16x64xf32>
    %6 = vector.shape_cast %5 : vector<1x16x64xf32> to vector<16x64xf32>
    %c0_6 = arith.constant 0 : index
    %c0_7 = arith.constant 0 : index
    %c0_8 = arith.constant 0 : index
    %7 = vector.load %arg6[%c0_6, %c0_7, %c0_8] : memref<1x16x64xf32, #tpu.memory_space<vmem>>, vector<1x16x64xf32>
    %8 = vector.shape_cast %7 : vector<1x16x64xf32> to vector<16x64xf32>
    %c0_9 = arith.constant 0 : index
    %c0_10 = arith.constant 0 : index
    %c0_11 = arith.constant 0 : index
    %c0_12 = arith.constant 0 : index
    %9 = vector.load %arg4[%c0_9, %c0_10, %c0_11, %c0_12] : memref<1x1x16x16xf32, #tpu.memory_space<vmem>>, vector<1x1x16x16xf32>
    %10 = vector.shape_cast %9 : vector<1x1x16x16xf32> to vector<16x16xf32>
    %c0_13 = arith.constant 0 : index
    %c0_14 = arith.constant 0 : index
    %c0_15 = arith.constant 0 : index
    %c0_16 = arith.constant 0 : index
    %11 = vector.load %arg5[%c0_13, %c0_14, %c0_15, %c0_16] : memref<1x1x16x16xf32, #tpu.memory_space<vmem>>, vector<1x1x16x16xf32>
    %12 = vector.shape_cast %11 : vector<1x1x16x16xf32> to vector<16x16xf32>
    %c0_17 = arith.constant 0 : index
    %c0_18 = arith.constant 0 : index
    %13 = vector.load %arg7[%c0_17, %c0_18] : memref<16x64xf32, #tpu.memory_space<vmem>>, vector<16x64xf32>
    %c0_19 = arith.constant 0 : index
    %c0_20 = arith.constant 0 : index
    %14 = vector.load %arg8[%c0_19, %c0_20] : memref<1x64xf32, #tpu.memory_space<vmem>>, vector<1x64xf32>
    %cst = arith.constant 0.000000e+00 : f32
    %15 = vector.broadcast %cst : f32 to vector<16x64xf32>
    %16 = arith.maximumf %6, %15 : vector<16x64xf32>
    %17 = math.absf %6 : vector<16x64xf32>
    %cst_21 = arith.constant 0.000000e+00 : f32
    %18 = vector.broadcast %cst_21 : f32 to vector<16x64xf32>
    %19 = arith.subf %18, %17 : vector<16x64xf32>
    %20 = math.exp %19 : vector<16x64xf32>
    %cst_22 = arith.constant 1.000000e+00 : f32
    %21 = vector.broadcast %cst_22 : f32 to vector<16x64xf32>
    %22 = arith.addf %21, %20 : vector<16x64xf32>
    %23 = math.log %22 : vector<16x64xf32>
    %24 = arith.addf %16, %23 : vector<16x64xf32>
    %25 = arith.mulf %24, %4 : vector<16x64xf32>
    %cst_23 = arith.constant 0.000000e+00 : f32
    %26 = vector.broadcast %cst_23 : f32 to vector<16x64xf32>
    %27 = arith.subf %26, %8 : vector<16x64xf32>
    %28 = math.exp %27 : vector<16x64xf32>
    %cst_24 = arith.constant 1.000000e+00 : f32
    %29 = vector.broadcast %cst_24 : f32 to vector<16x64xf32>
    %30 = arith.addf %29, %28 : vector<16x64xf32>
    %31 = tpu.reciprocal %30 {approx = true} : vector<16x64xf32> -> vector<16x64xf32>
    %32 = arith.mulf %8, %31 : vector<16x64xf32>
    %33 = tpu.iota {dimensions = array<i32: 0>} : vector<256x16xi32>
    %34 = tpu.iota {dimensions = array<i32: 1>} : vector<256x16xi32>
    %c16_i32 = arith.constant 16 : i32
    %35 = vector.broadcast %c16_i32 : i32 to vector<256x16xi32>
    %36 = arith.muli %34, %35 : vector<256x16xi32>
    %37 = arith.cmpi sge, %33, %36 : vector<256x16xi32>
    %c16_i32_25 = arith.constant 16 : i32
    %38 = vector.broadcast %c16_i32_25 : i32 to vector<256x16xi32>
    %39 = arith.addi %36, %38 : vector<256x16xi32>
    %40 = arith.cmpi slt, %33, %39 : vector<256x16xi32>
    %41 = arith.andi %37, %40 : vector<256x16xi1>
    %42 = arith.extui %41 : vector<256x16xi1> to vector<256x16xi32>
    %43 = arith.sitofp %42 : vector<256x16xi32> to vector<256x16xf32>
    %cst_26 = arith.constant dense<0.000000e+00> : vector<256x64xf32>
    %44 = tpu.matmul %43, %24, %cst_26 {dimension_numbers = #tpu.dot_dimension_numbers<[1], [0], [0], [1], [0, 0, 1, 1], [], []>} : vector<256x16xf32>, vector<16x64xf32>, vector<256x64xf32> -> vector<256x64xf32>
    %45 = vector.shape_cast %13 : vector<16x64xf32> to vector<1x16x64xf32>
    %46 = vector.shape_cast %45 : vector<1x16x64xf32> to vector<1x16x64xf32>
    %47 = vector.broadcast %46 : vector<1x16x64xf32> to vector<16x16x64xf32>
    %48 = vector.shape_cast %47 : vector<16x16x64xf32> to vector<256x64xf32>
    %49 = arith.mulf %44, %48 : vector<256x64xf32>
    %50 = math.exp %49 : vector<256x64xf32>
    %51 = vector.shape_cast %10 : vector<16x16xf32> to vector<1x16x16xf32>
    %52 = vector.shape_cast %51 : vector<1x16x16xf32> to vector<1x16x16xf32>
    %53 = vector.broadcast %52 : vector<1x16x16xf32> to vector<16x16x16xf32>
    %54 = vector.shape_cast %53 : vector<16x16x16xf32> to vector<256x16xf32>
    %cst_27 = arith.constant 0.000000e+00 : f32
    %55 = vector.broadcast %cst_27 : f32 to vector<256x16xf32>
    %56 = arith.select %41, %54, %55 : vector<256x16xi1>, vector<256x16xf32>
    %cst_28 = arith.constant dense<0.000000e+00> : vector<256x64xf32>
    %57 = tpu.matmul %56, %25, %cst_28 {dimension_numbers = #tpu.dot_dimension_numbers<[1], [0], [0], [1], [0, 0, 1, 1], [], []>} : vector<256x16xf32>, vector<16x64xf32>, vector<256x64xf32> -> vector<256x64xf32>
    %58 = vector.shape_cast %12 : vector<16x16xf32> to vector<1x16x16xf32>
    %59 = vector.shape_cast %58 : vector<1x16x16xf32> to vector<1x16x16xf32>
    %60 = vector.broadcast %59 : vector<1x16x16xf32> to vector<16x16x16xf32>
    %61 = vector.shape_cast %60 : vector<16x16x16xf32> to vector<256x16xf32>
    %cst_29 = arith.constant 0.000000e+00 : f32
    %62 = vector.broadcast %cst_29 : f32 to vector<256x16xf32>
    %63 = arith.select %41, %61, %62 : vector<256x16xi1>, vector<256x16xf32>
    %cst_30 = arith.constant 1.000000e+00 : f32
    %64 = vector.broadcast %cst_30 : f32 to vector<16x64xf32>
    %cst_31 = arith.constant dense<0.000000e+00> : vector<256x64xf32>
    %65 = tpu.matmul %63, %64, %cst_31 {dimension_numbers = #tpu.dot_dimension_numbers<[1], [0], [0], [1], [0, 0, 1, 1], [], []>} : vector<256x16xf32>, vector<16x64xf32>, vector<256x64xf32> -> vector<256x64xf32>
    %c0_32 = arith.constant 0 : index
    %c0_33 = arith.constant 0 : index
    %66 = vector.load %arg10[%c0_32, %c0_33] : memref<16x64xf32, #tpu.memory_space<vmem>>, vector<16x64xf32>
    %67 = vector.extract_strided_slice %50 {offsets = [0, 0], sizes = [16, 64], strides = [1, 1]} : vector<256x64xf32> to vector<16x64xf32>
    %68 = arith.mulf %67, %66 : vector<16x64xf32>
    %69 = vector.extract_strided_slice %57 {offsets = [0, 0], sizes = [16, 64], strides = [1, 1]} : vector<256x64xf32> to vector<16x64xf32>
    %70 = arith.addf %68, %69 : vector<16x64xf32>
    %71 = vector.extract_strided_slice %50 {offsets = [16, 0], sizes = [16, 64], strides = [1, 1]} : vector<256x64xf32> to vector<16x64xf32>
    %72 = arith.mulf %71, %70 : vector<16x64xf32>
    %73 = vector.extract_strided_slice %57 {offsets = [16, 0], sizes = [16, 64], strides = [1, 1]} : vector<256x64xf32> to vector<16x64xf32>
    %74 = arith.addf %72, %73 : vector<16x64xf32>
    %75 = vector.extract_strided_slice %50 {offsets = [32, 0], sizes = [16, 64], strides = [1, 1]} : vector<256x64xf32> to vector<16x64xf32>
    %76 = arith.mulf %75, %74 : vector<16x64xf32>
    %77 = vector.extract_strided_slice %57 {offsets = [32, 0], sizes = [16, 64], strides = [1, 1]} : vector<256x64xf32> to vector<16x64xf32>
    %78 = arith.addf %76, %77 : vector<16x64xf32>
    %79 = vector.extract_strided_slice %50 {offsets = [48, 0], sizes = [16, 64], strides = [1, 1]} : vector<256x64xf32> to vector<16x64xf32>
    %80 = arith.mulf %79, %78 : vector<16x64xf32>
    %81 = vector.extract_strided_slice %57 {offsets = [48, 0], sizes = [16, 64], strides = [1, 1]} : vector<256x64xf32> to vector<16x64xf32>
    %82 = arith.addf %80, %81 : vector<16x64xf32>
    %83 = vector.extract_strided_slice %50 {offsets = [64, 0], sizes = [16, 64], strides = [1, 1]} : vector<256x64xf32> to vector<16x64xf32>
    %84 = arith.mulf %83, %82 : vector<16x64xf32>
    %85 = vector.extract_strided_slice %57 {offsets = [64, 0], sizes = [16, 64], strides = [1, 1]} : vector<256x64xf32> to vector<16x64xf32>
    %86 = arith.addf %84, %85 : vector<16x64xf32>
    %87 = vector.extract_strided_slice %50 {offsets = [80, 0], sizes = [16, 64], strides = [1, 1]} : vector<256x64xf32> to vector<16x64xf32>
    %88 = arith.mulf %87, %86 : vector<16x64xf32>
    %89 = vector.extract_strided_slice %57 {offsets = [80, 0], sizes = [16, 64], strides = [1, 1]} : vector<256x64xf32> to vector<16x64xf32>
    %90 = arith.addf %88, %89 : vector<16x64xf32>
    %91 = vector.extract_strided_slice %50 {offsets = [96, 0], sizes = [16, 64], strides = [1, 1]} : vector<256x64xf32> to vector<16x64xf32>
    %92 = arith.mulf %91, %90 : vector<16x64xf32>
    %93 = vector.extract_strided_slice %57 {offsets = [96, 0], sizes = [16, 64], strides = [1, 1]} : vector<256x64xf32> to vector<16x64xf32>
    %94 = arith.addf %92, %93 : vector<16x64xf32>
    %95 = vector.extract_strided_slice %50 {offsets = [112, 0], sizes = [16, 64], strides = [1, 1]} : vector<256x64xf32> to vector<16x64xf32>
    %96 = arith.mulf %95, %94 : vector<16x64xf32>
    %97 = vector.extract_strided_slice %57 {offsets = [112, 0], sizes = [16, 64], strides = [1, 1]} : vector<256x64xf32> to vector<16x64xf32>
    %98 = arith.addf %96, %97 : vector<16x64xf32>
    %99 = vector.extract_strided_slice %50 {offsets = [128, 0], sizes = [16, 64], strides = [1, 1]} : vector<256x64xf32> to vector<16x64xf32>
    %100 = arith.mulf %99, %98 : vector<16x64xf32>
    %101 = vector.extract_strided_slice %57 {offsets = [128, 0], sizes = [16, 64], strides = [1, 1]} : vector<256x64xf32> to vector<16x64xf32>
    %102 = arith.addf %100, %101 : vector<16x64xf32>
    %103 = vector.extract_strided_slice %50 {offsets = [144, 0], sizes = [16, 64], strides = [1, 1]} : vector<256x64xf32> to vector<16x64xf32>
    %104 = arith.mulf %103, %102 : vector<16x64xf32>
    %105 = vector.extract_strided_slice %57 {offsets = [144, 0], sizes = [16, 64], strides = [1, 1]} : vector<256x64xf32> to vector<16x64xf32>
    %106 = arith.addf %104, %105 : vector<16x64xf32>
    %107 = vector.extract_strided_slice %50 {offsets = [160, 0], sizes = [16, 64], strides = [1, 1]} : vector<256x64xf32> to vector<16x64xf32>
    %108 = arith.mulf %107, %106 : vector<16x64xf32>
    %109 = vector.extract_strided_slice %57 {offsets = [160, 0], sizes = [16, 64], strides = [1, 1]} : vector<256x64xf32> to vector<16x64xf32>
    %110 = arith.addf %108, %109 : vector<16x64xf32>
    %111 = vector.extract_strided_slice %50 {offsets = [176, 0], sizes = [16, 64], strides = [1, 1]} : vector<256x64xf32> to vector<16x64xf32>
    %112 = arith.mulf %111, %110 : vector<16x64xf32>
    %113 = vector.extract_strided_slice %57 {offsets = [176, 0], sizes = [16, 64], strides = [1, 1]} : vector<256x64xf32> to vector<16x64xf32>
    %114 = arith.addf %112, %113 : vector<16x64xf32>
    %115 = vector.extract_strided_slice %50 {offsets = [192, 0], sizes = [16, 64], strides = [1, 1]} : vector<256x64xf32> to vector<16x64xf32>
    %116 = arith.mulf %115, %114 : vector<16x64xf32>
    %117 = vector.extract_strided_slice %57 {offsets = [192, 0], sizes = [16, 64], strides = [1, 1]} : vector<256x64xf32> to vector<16x64xf32>
    %118 = arith.addf %116, %117 : vector<16x64xf32>
    %119 = vector.extract_strided_slice %50 {offsets = [208, 0], sizes = [16, 64], strides = [1, 1]} : vector<256x64xf32> to vector<16x64xf32>
    %120 = arith.mulf %119, %118 : vector<16x64xf32>
    %121 = vector.extract_strided_slice %57 {offsets = [208, 0], sizes = [16, 64], strides = [1, 1]} : vector<256x64xf32> to vector<16x64xf32>
    %122 = arith.addf %120, %121 : vector<16x64xf32>
    %123 = vector.extract_strided_slice %50 {offsets = [224, 0], sizes = [16, 64], strides = [1, 1]} : vector<256x64xf32> to vector<16x64xf32>
    %124 = arith.mulf %123, %122 : vector<16x64xf32>
    %125 = vector.extract_strided_slice %57 {offsets = [224, 0], sizes = [16, 64], strides = [1, 1]} : vector<256x64xf32> to vector<16x64xf32>
    %126 = arith.addf %124, %125 : vector<16x64xf32>
    %127 = vector.extract_strided_slice %50 {offsets = [240, 0], sizes = [16, 64], strides = [1, 1]} : vector<256x64xf32> to vector<16x64xf32>
    %128 = arith.mulf %127, %126 : vector<16x64xf32>
    %129 = vector.extract_strided_slice %57 {offsets = [240, 0], sizes = [16, 64], strides = [1, 1]} : vector<256x64xf32> to vector<16x64xf32>
    %130 = arith.addf %128, %129 : vector<16x64xf32>
    %c0_34 = arith.constant 0 : index
    %c0_35 = arith.constant 0 : index
    %131 = vector.load %arg10[%c0_34, %c0_35] : memref<16x64xf32, #tpu.memory_space<vmem>>, vector<16x64xf32>
    tpu.vector_store %arg10[%c0_34, %c0_35], %130 {strides = array<i32>} : memref<16x64xf32, #tpu.memory_space<vmem>>, vector<16x64xf32>,
    %132 = tpu.concatenate %70, %74, %78, %82, %86, %90, %94, %98, %102, %106, %110, %114, %118, %122, %126, %130 in 0 : vector<16x64xf32>, vector<16x64xf32>, vector<16x64xf32>, vector<16x64xf32>, vector<16x64xf32>, vector<16x64xf32>, vector<16x64xf32>, vector<16x64xf32>, vector<16x64xf32>, vector<16x64xf32>, vector<16x64xf32>, vector<16x64xf32>, vector<16x64xf32>, vector<16x64xf32>, vector<16x64xf32>, vector<16x64xf32> -> vector<256x64xf32>
    %133 = tpu.iota {dimensions = array<i32: 1>} : vector<16x256xi32>
    %134 = tpu.iota {dimensions = array<i32: 0>} : vector<16x256xi32>
    %c16_i32_36 = arith.constant 16 : i32
    %135 = vector.broadcast %c16_i32_36 : i32 to vector<16x256xi32>
    %136 = arith.muli %134, %135 : vector<16x256xi32>
    %137 = arith.cmpi sge, %133, %136 : vector<16x256xi32>
    %c16_i32_37 = arith.constant 16 : i32
    %138 = vector.broadcast %c16_i32_37 : i32 to vector<16x256xi32>
    %139 = arith.addi %136, %138 : vector<16x256xi32>
    %140 = arith.cmpi slt, %133, %139 : vector<16x256xi32>
    %141 = arith.andi %137, %140 : vector<16x256xi1>
    %142 = arith.extui %141 : vector<16x256xi1> to vector<16x256xi32>
    %143 = arith.sitofp %142 : vector<16x256xi32> to vector<16x256xf32>
    %144 = arith.mulf %65, %132 : vector<256x64xf32>
    %cst_38 = arith.constant dense<0.000000e+00> : vector<16x64xf32>
    %145 = tpu.matmul %143, %144, %cst_38 {dimension_numbers = #tpu.dot_dimension_numbers<[1], [0], [0], [1], [0, 0, 1, 1], [], []>} : vector<16x256xf32>, vector<256x64xf32>, vector<16x64xf32> -> vector<16x64xf32>
    %146 = vector.broadcast %14 : vector<1x64xf32> to vector<16x64xf32>
    %147 = arith.mulf %146, %4 : vector<16x64xf32>
    %148 = arith.addf %145, %147 : vector<16x64xf32>
    %149 = arith.mulf %148, %32 : vector<16x64xf32>
    %c0_39 = arith.constant 0 : index
    %c0_40 = arith.constant 0 : index
    %c0_41 = arith.constant 0 : index
    %150 = vector.load %arg9[%c0_39, %c0_40, %c0_41] : memref<1x16x64xf32, #tpu.memory_space<vmem>>, vector<1x16x64xf32>
    %151 = vector.shape_cast %150 : vector<1x16x64xf32> to vector<16x64xf32>
    %152 = vector.shape_cast %149 : vector<16x64xf32> to vector<1x16x64xf32>
    tpu.vector_store %arg9[%c0_39, %c0_40, %c0_41], %152 {strides = array<i32>} : memref<1x16x64xf32, #tpu.memory_space<vmem>>, vector<1x16x64xf32>,
    return
  }
  func.func @transform_0(%arg0: i32, %arg1: i32) -> (i32, i32, i32) {
    %c0_i32 = arith.constant 0 : i32
    %c0_i32_0 = arith.constant 0 : i32
    return %arg0, %arg1, %c0_i32 : i32, i32, i32
  }
  func.func @transform_1(%arg0: i32, %arg1: i32) -> (i32, i32, i32) {
    %c0_i32 = arith.constant 0 : i32
    %c0_i32_0 = arith.constant 0 : i32
    return %arg0, %arg1, %c0_i32 : i32, i32, i32
  }
  func.func @transform_2(%arg0: i32, %arg1: i32) -> (i32, i32, i32, i32) {
    %c0_i32 = arith.constant 0 : i32
    %c0_i32_0 = arith.constant 0 : i32
    %c0_i32_1 = arith.constant 0 : i32
    return %arg0, %arg1, %c0_i32, %c0_i32_0 : i32, i32, i32, i32
  }
  func.func @transform_3(%arg0: i32, %arg1: i32) -> (i32, i32, i32, i32) {
    %c0_i32 = arith.constant 0 : i32
    %c0_i32_0 = arith.constant 0 : i32
    %c0_i32_1 = arith.constant 0 : i32
    return %arg0, %arg1, %c0_i32, %c0_i32_0 : i32, i32, i32, i32
  }
  func.func @transform_4(%arg0: i32, %arg1: i32) -> (i32, i32, i32) {
    %c0_i32 = arith.constant 0 : i32
    %c0_i32_0 = arith.constant 0 : i32
    return %arg0, %arg1, %c0_i32 : i32, i32, i32
  }
  func.func @transform_5(%arg0: i32, %arg1: i32) -> (i32, i32) {
    %c0_i32 = arith.constant 0 : i32
    %c0_i32_0 = arith.constant 0 : i32
    %c0_i32_1 = arith.constant 0 : i32
    return %c0_i32, %c0_i32_0 : i32, i32
  }
  func.func @transform_6(%arg0: i32, %arg1: i32) -> (i32, i32) {
    %c0_i32 = arith.constant 0 : i32
    %c0_i32_0 = arith.constant 0 : i32
    %c0_i32_1 = arith.constant 0 : i32
    return %c0_i32, %c0_i32_0 : i32, i32
  }
  func.func @transform_7(%arg0: i32, %arg1: i32) -> (i32, i32, i32) {
    %c0_i32 = arith.constant 0 : i32
    %c0_i32_0 = arith.constant 0 : i32
    return %arg0, %arg1, %c0_i32 : i32, i32, i32
  }
}

module attributes {stable_mosaic.version = 11 : i64} {
  func.func @_linear_kernel(%arg0: i32, %arg1: i32, %arg2: memref<32x64xbf16, #tpu.memory_space<vmem>>, %arg3: memref<64x32xbf16, #tpu.memory_space<vmem>>, %arg4: memref<1x32xf32, #tpu.memory_space<vmem>>, %arg5: memref<32x32xf32, #tpu.memory_space<vmem>>, %arg6: memref<32x32xf32, #tpu.memory_space<vmem>>) attributes {dimension_semantics = [#tpu.dimension_semantics<parallel>, #tpu.dimension_semantics<arbitrary>], iteration_bounds = array<i64: 1, 1>, scalar_prefetch = 0 : i64, scratch_operands = 1 : i64, tpu.core_type = #tpu.core_type<tc>, window_params = [{transform_indices = @transform_0, window_bounds = array<i64: 32, 64>}, {transform_indices = @transform_1, window_bounds = array<i64: 64, 32>}, {pipeline_mode = #tpu.pipeline_mode<synchronous>, transform_indices = @transform_2, window_bounds = array<i64: 1, 32>}, {transform_indices = @transform_3, window_bounds = array<i64: 32, 32>}]} {
    %c0_i32 = arith.constant 0 : i32
    %0 = arith.cmpi eq, %arg1, %c0_i32 : i32
    %1 = arith.extui %0 : i1 to i32
    %c0_i32_0 = arith.constant 0 : i32
    %2 = arith.cmpi ne, %1, %c0_i32_0 : i32
    scf.if %2 {
      %cst_10 = arith.constant 0.000000e+00 : f32
      %12 = vector.broadcast %cst_10 : f32 to vector<32x32xf32>
      %c0_11 = arith.constant 0 : index
      %c0_12 = arith.constant 0 : index
      %13 = vector.load %arg6[%c0_11, %c0_12] : memref<32x32xf32, #tpu.memory_space<vmem>>, vector<32x32xf32>
      tpu.vector_store %arg6[%c0_11, %c0_12], %12 {strides = array<i32>} : memref<32x32xf32, #tpu.memory_space<vmem>>, vector<32x32xf32>,
    } else {
    }
    %c0 = arith.constant 0 : index
    %c0_1 = arith.constant 0 : index
    %3 = vector.load %arg6[%c0, %c0_1] : memref<32x32xf32, #tpu.memory_space<vmem>>, vector<32x32xf32>
    %c0_2 = arith.constant 0 : index
    %c0_3 = arith.constant 0 : index
    %4 = vector.load %arg2[%c0_2, %c0_3] : memref<32x64xbf16, #tpu.memory_space<vmem>>, vector<32x64xbf16>
    %c0_4 = arith.constant 0 : index
    %c0_5 = arith.constant 0 : index
    %5 = vector.load %arg3[%c0_4, %c0_5] : memref<64x32xbf16, #tpu.memory_space<vmem>>, vector<64x32xbf16>
    %cst = arith.constant dense<0.000000e+00> : vector<32x32xf32>
    %6 = tpu.matmul %4, %5, %cst {dimension_numbers = #tpu.dot_dimension_numbers<[1], [0], [0], [1], [0, 0, 1, 1], [], []>} : vector<32x64xbf16>, vector<64x32xbf16>, vector<32x32xf32> -> vector<32x32xf32>
    %7 = arith.addf %3, %6 : vector<32x32xf32>
    %c0_6 = arith.constant 0 : index
    %c0_7 = arith.constant 0 : index
    %8 = vector.load %arg6[%c0_6, %c0_7] : memref<32x32xf32, #tpu.memory_space<vmem>>, vector<32x32xf32>
    tpu.vector_store %arg6[%c0_6, %c0_7], %7 {strides = array<i32>} : memref<32x32xf32, #tpu.memory_space<vmem>>, vector<32x32xf32>,
    %c0_i32_8 = arith.constant 0 : i32
    %9 = arith.cmpi eq, %arg1, %c0_i32_8 : i32
    %10 = arith.extui %9 : i1 to i32
    %c0_i32_9 = arith.constant 0 : i32
    %11 = arith.cmpi ne, %10, %c0_i32_9 : i32
    scf.if %11 {
      %c0_10 = arith.constant 0 : index
      %c0_11 = arith.constant 0 : index
      %12 = vector.load %arg6[%c0_10, %c0_11] : memref<32x32xf32, #tpu.memory_space<vmem>>, vector<32x32xf32>
      %c0_12 = arith.constant 0 : index
      %c0_13 = arith.constant 0 : index
      %13 = vector.load %arg4[%c0_12, %c0_13] : memref<1x32xf32, #tpu.memory_space<vmem>>, vector<1x32xf32>
      %14 = vector.broadcast %13 : vector<1x32xf32> to vector<32x32xf32>
      %15 = arith.addf %12, %14 : vector<32x32xf32>
      %c0_14 = arith.constant 0 : index
      %c0_15 = arith.constant 0 : index
      %16 = vector.load %arg5[%c0_14, %c0_15] : memref<32x32xf32, #tpu.memory_space<vmem>>, vector<32x32xf32>
      tpu.vector_store %arg5[%c0_14, %c0_15], %15 {strides = array<i32>} : memref<32x32xf32, #tpu.memory_space<vmem>>, vector<32x32xf32>,
    } else {
    }
    return
  }
  func.func @transform_0(%arg0: i32, %arg1: i32) -> (i32, i32) {
    %c0_i32 = arith.constant 0 : i32
    return %arg0, %arg1 : i32, i32
  }
  func.func @transform_1(%arg0: i32, %arg1: i32) -> (i32, i32) {
    %c0_i32 = arith.constant 0 : i32
    %c0_i32_0 = arith.constant 0 : i32
    return %arg1, %c0_i32 : i32, i32
  }
  func.func @transform_2(%arg0: i32, %arg1: i32) -> (i32, i32) {
    %c0_i32 = arith.constant 0 : i32
    %c0_i32_0 = arith.constant 0 : i32
    %c0_i32_1 = arith.constant 0 : i32
    return %c0_i32, %c0_i32_0 : i32, i32
  }
  func.func @transform_3(%arg0: i32, %arg1: i32) -> (i32, i32) {
    %c0_i32 = arith.constant 0 : i32
    %c0_i32_0 = arith.constant 0 : i32
    return %arg0, %c0_i32 : i32, i32
  }
}

module attributes {stable_mosaic.version = 11 : i64} {
  func.func @_linear_kernel(%arg0: i32, %arg1: i32, %arg2: memref<32x2xbf16, #tpu.memory_space<vmem>>, %arg3: memref<2x64xbf16, #tpu.memory_space<vmem>>, %arg4: memref<1x64xf32, #tpu.memory_space<vmem>>, %arg5: memref<32x64xf32, #tpu.memory_space<vmem>>, %arg6: memref<32x64xf32, #tpu.memory_space<vmem>>) attributes {dimension_semantics = [#tpu.dimension_semantics<parallel>, #tpu.dimension_semantics<arbitrary>], iteration_bounds = array<i64: 1, 1>, scalar_prefetch = 0 : i64, scratch_operands = 1 : i64, tpu.core_type = #tpu.core_type<tc>, window_params = [{transform_indices = @transform_0, window_bounds = array<i64: 32, 2>}, {transform_indices = @transform_1, window_bounds = array<i64: 2, 64>}, {pipeline_mode = #tpu.pipeline_mode<synchronous>, transform_indices = @transform_2, window_bounds = array<i64: 1, 64>}, {transform_indices = @transform_3, window_bounds = array<i64: 32, 64>}]} {
    %c0_i32 = arith.constant 0 : i32
    %0 = arith.cmpi eq, %arg1, %c0_i32 : i32
    %1 = arith.extui %0 : i1 to i32
    %c0_i32_0 = arith.constant 0 : i32
    %2 = arith.cmpi ne, %1, %c0_i32_0 : i32
    scf.if %2 {
      %cst_10 = arith.constant 0.000000e+00 : f32
      %12 = vector.broadcast %cst_10 : f32 to vector<32x64xf32>
      %c0_11 = arith.constant 0 : index
      %c0_12 = arith.constant 0 : index
      %13 = vector.load %arg6[%c0_11, %c0_12] : memref<32x64xf32, #tpu.memory_space<vmem>>, vector<32x64xf32>
      tpu.vector_store %arg6[%c0_11, %c0_12], %12 {strides = array<i32>} : memref<32x64xf32, #tpu.memory_space<vmem>>, vector<32x64xf32>,
    } else {
    }
    %c0 = arith.constant 0 : index
    %c0_1 = arith.constant 0 : index
    %3 = vector.load %arg6[%c0, %c0_1] : memref<32x64xf32, #tpu.memory_space<vmem>>, vector<32x64xf32>
    %c0_2 = arith.constant 0 : index
    %c0_3 = arith.constant 0 : index
    %4 = vector.load %arg2[%c0_2, %c0_3] : memref<32x2xbf16, #tpu.memory_space<vmem>>, vector<32x2xbf16>
    %c0_4 = arith.constant 0 : index
    %c0_5 = arith.constant 0 : index
    %5 = vector.load %arg3[%c0_4, %c0_5] : memref<2x64xbf16, #tpu.memory_space<vmem>>, vector<2x64xbf16>
    %cst = arith.constant dense<0.000000e+00> : vector<32x64xf32>
    %6 = tpu.matmul %4, %5, %cst {dimension_numbers = #tpu.dot_dimension_numbers<[1], [0], [0], [1], [0, 0, 1, 1], [], []>} : vector<32x2xbf16>, vector<2x64xbf16>, vector<32x64xf32> -> vector<32x64xf32>
    %7 = arith.addf %3, %6 : vector<32x64xf32>
    %c0_6 = arith.constant 0 : index
    %c0_7 = arith.constant 0 : index
    %8 = vector.load %arg6[%c0_6, %c0_7] : memref<32x64xf32, #tpu.memory_space<vmem>>, vector<32x64xf32>
    tpu.vector_store %arg6[%c0_6, %c0_7], %7 {strides = array<i32>} : memref<32x64xf32, #tpu.memory_space<vmem>>, vector<32x64xf32>,
    %c0_i32_8 = arith.constant 0 : i32
    %9 = arith.cmpi eq, %arg1, %c0_i32_8 : i32
    %10 = arith.extui %9 : i1 to i32
    %c0_i32_9 = arith.constant 0 : i32
    %11 = arith.cmpi ne, %10, %c0_i32_9 : i32
    scf.if %11 {
      %c0_10 = arith.constant 0 : index
      %c0_11 = arith.constant 0 : index
      %12 = vector.load %arg6[%c0_10, %c0_11] : memref<32x64xf32, #tpu.memory_space<vmem>>, vector<32x64xf32>
      %c0_12 = arith.constant 0 : index
      %c0_13 = arith.constant 0 : index
      %13 = vector.load %arg4[%c0_12, %c0_13] : memref<1x64xf32, #tpu.memory_space<vmem>>, vector<1x64xf32>
      %14 = vector.broadcast %13 : vector<1x64xf32> to vector<32x64xf32>
      %15 = arith.addf %12, %14 : vector<32x64xf32>
      %c0_14 = arith.constant 0 : index
      %c0_15 = arith.constant 0 : index
      %16 = vector.load %arg5[%c0_14, %c0_15] : memref<32x64xf32, #tpu.memory_space<vmem>>, vector<32x64xf32>
      tpu.vector_store %arg5[%c0_14, %c0_15], %15 {strides = array<i32>} : memref<32x64xf32, #tpu.memory_space<vmem>>, vector<32x64xf32>,
    } else {
    }
    return
  }
  func.func @transform_0(%arg0: i32, %arg1: i32) -> (i32, i32) {
    %c0_i32 = arith.constant 0 : i32
    return %arg0, %arg1 : i32, i32
  }
  func.func @transform_1(%arg0: i32, %arg1: i32) -> (i32, i32) {
    %c0_i32 = arith.constant 0 : i32
    %c0_i32_0 = arith.constant 0 : i32
    return %arg1, %c0_i32 : i32, i32
  }
  func.func @transform_2(%arg0: i32, %arg1: i32) -> (i32, i32) {
    %c0_i32 = arith.constant 0 : i32
    %c0_i32_0 = arith.constant 0 : i32
    %c0_i32_1 = arith.constant 0 : i32
    return %c0_i32, %c0_i32_0 : i32, i32
  }
  func.func @transform_3(%arg0: i32, %arg1: i32) -> (i32, i32) {
    %c0_i32 = arith.constant 0 : i32
    %c0_i32_0 = arith.constant 0 : i32
    return %arg0, %c0_i32 : i32, i32
  }
}

module attributes {stable_mosaic.version = 11 : i64} {
  func.func @_add_rmsnorm_kernel(%arg0: i32, %arg1: memref<32x32xf32, #tpu.memory_space<vmem>>, %arg2: memref<32x32xf32, #tpu.memory_space<vmem>>, %arg3: memref<1x32xf32, #tpu.memory_space<vmem>>, %arg4: memref<32x32xf32, #tpu.memory_space<vmem>>, %arg5: memref<32x32xf32, #tpu.memory_space<vmem>>) attributes {dimension_semantics = [#tpu.dimension_semantics<parallel>], iteration_bounds = array<i64: 1>, scalar_prefetch = 0 : i64, scratch_operands = 0 : i64, tpu.core_type = #tpu.core_type<tc>, window_params = [{transform_indices = @transform_0, window_bounds = array<i64: 32, 32>}, {transform_indices = @transform_1, window_bounds = array<i64: 32, 32>}, {pipeline_mode = #tpu.pipeline_mode<synchronous>, transform_indices = @transform_2, window_bounds = array<i64: 1, 32>}, {transform_indices = @transform_3, window_bounds = array<i64: 32, 32>}, {transform_indices = @transform_4, window_bounds = array<i64: 32, 32>}]} {
    %c0 = arith.constant 0 : index
    %c0_0 = arith.constant 0 : index
    %0 = vector.load %arg1[%c0, %c0_0] : memref<32x32xf32, #tpu.memory_space<vmem>>, vector<32x32xf32>
    %c0_1 = arith.constant 0 : index
    %c0_2 = arith.constant 0 : index
    %1 = vector.load %arg2[%c0_1, %c0_2] : memref<32x32xf32, #tpu.memory_space<vmem>>, vector<32x32xf32>
    %2 = arith.addf %0, %1 : vector<32x32xf32>
    %c0_3 = arith.constant 0 : index
    %c0_4 = arith.constant 0 : index
    %3 = vector.load %arg5[%c0_3, %c0_4] : memref<32x32xf32, #tpu.memory_space<vmem>>, vector<32x32xf32>
    tpu.vector_store %arg5[%c0_3, %c0_4], %2 {strides = array<i32>} : memref<32x32xf32, #tpu.memory_space<vmem>>, vector<32x32xf32>,
    %4 = arith.mulf %2, %2 : vector<32x32xf32>
    %cst = arith.constant dense<0.000000e+00> : vector<32xf32>
    %5 = vector.multi_reduction <add>, %4, %cst [1] : vector<32x32xf32> to vector<32xf32>
    %6 = vector.shape_cast %5 : vector<32xf32> to vector<32x1xf32>
    %cst_5 = arith.constant 3.200000e+01 : f32
    %7 = vector.broadcast %cst_5 : f32 to vector<32x1xf32>
    %8 = arith.divf %6, %7 : vector<32x1xf32>
    %cst_6 = arith.constant 9.99999974E-6 : f32
    %9 = vector.broadcast %cst_6 : f32 to vector<32x1xf32>
    %10 = arith.addf %8, %9 : vector<32x1xf32>
    %11 = math.rsqrt %10 : vector<32x1xf32>
    %12 = vector.broadcast %11 : vector<32x1xf32> to vector<32x32xf32>
    %13 = arith.mulf %2, %12 : vector<32x32xf32>
    %c0_7 = arith.constant 0 : index
    %c0_8 = arith.constant 0 : index
    %14 = vector.load %arg3[%c0_7, %c0_8] : memref<1x32xf32, #tpu.memory_space<vmem>>, vector<1x32xf32>
    %15 = vector.broadcast %14 : vector<1x32xf32> to vector<32x32xf32>
    %16 = arith.mulf %13, %15 : vector<32x32xf32>
    %c0_9 = arith.constant 0 : index
    %c0_10 = arith.constant 0 : index
    %17 = vector.load %arg4[%c0_9, %c0_10] : memref<32x32xf32, #tpu.memory_space<vmem>>, vector<32x32xf32>
    tpu.vector_store %arg4[%c0_9, %c0_10], %16 {strides = array<i32>} : memref<32x32xf32, #tpu.memory_space<vmem>>, vector<32x32xf32>,
    return
  }
  func.func @transform_0(%arg0: i32) -> (i32, i32) {
    %c0_i32 = arith.constant 0 : i32
    %c0_i32_0 = arith.constant 0 : i32
    return %arg0, %c0_i32 : i32, i32
  }
  func.func @transform_1(%arg0: i32) -> (i32, i32) {
    %c0_i32 = arith.constant 0 : i32
    %c0_i32_0 = arith.constant 0 : i32
    return %arg0, %c0_i32 : i32, i32
  }
  func.func @transform_2(%arg0: i32) -> (i32, i32) {
    %c0_i32 = arith.constant 0 : i32
    %c0_i32_0 = arith.constant 0 : i32
    %c0_i32_1 = arith.constant 0 : i32
    return %c0_i32, %c0_i32_0 : i32, i32
  }
  func.func @transform_3(%arg0: i32) -> (i32, i32) {
    %c0_i32 = arith.constant 0 : i32
    %c0_i32_0 = arith.constant 0 : i32
    return %arg0, %c0_i32 : i32, i32
  }
  func.func @transform_4(%arg0: i32) -> (i32, i32) {
    %c0_i32 = arith.constant 0 : i32
    %c0_i32_0 = arith.constant 0 : i32
    return %arg0, %c0_i32 : i32, i32
  }
}

module attributes {stable_mosaic.version = 11 : i64} {
  func.func @_linear_kernel(%arg0: i32, %arg1: i32, %arg2: memref<8x128xbf16, #tpu.memory_space<vmem>>, %arg3: memref<128x8xbf16, #tpu.memory_space<vmem>>, %arg4: memref<1x8xf32, #tpu.memory_space<vmem>>, %arg5: memref<8x8xf32, #tpu.memory_space<vmem>>, %arg6: memref<8x8xf32, #tpu.memory_space<vmem>>) attributes {dimension_semantics = [#tpu.dimension_semantics<parallel>, #tpu.dimension_semantics<arbitrary>], iteration_bounds = array<i64: 1, 1>, scalar_prefetch = 0 : i64, scratch_operands = 1 : i64, tpu.core_type = #tpu.core_type<tc>, window_params = [{transform_indices = @transform_0, window_bounds = array<i64: 8, 128>}, {transform_indices = @transform_1, window_bounds = array<i64: 128, 8>}, {pipeline_mode = #tpu.pipeline_mode<synchronous>, transform_indices = @transform_2, window_bounds = array<i64: 1, 8>}, {transform_indices = @transform_3, window_bounds = array<i64: 8, 8>}]} {
    %c0_i32 = arith.constant 0 : i32
    %0 = arith.cmpi eq, %arg1, %c0_i32 : i32
    %1 = arith.extui %0 : i1 to i32
    %c0_i32_0 = arith.constant 0 : i32
    %2 = arith.cmpi ne, %1, %c0_i32_0 : i32
    scf.if %2 {
      %cst_10 = arith.constant 0.000000e+00 : f32
      %12 = vector.broadcast %cst_10 : f32 to vector<8x8xf32>
      %c0_11 = arith.constant 0 : index
      %c0_12 = arith.constant 0 : index
      %13 = vector.load %arg6[%c0_11, %c0_12] : memref<8x8xf32, #tpu.memory_space<vmem>>, vector<8x8xf32>
      tpu.vector_store %arg6[%c0_11, %c0_12], %12 {strides = array<i32>} : memref<8x8xf32, #tpu.memory_space<vmem>>, vector<8x8xf32>,
    } else {
    }
    %c0 = arith.constant 0 : index
    %c0_1 = arith.constant 0 : index
    %3 = vector.load %arg6[%c0, %c0_1] : memref<8x8xf32, #tpu.memory_space<vmem>>, vector<8x8xf32>
    %c0_2 = arith.constant 0 : index
    %c0_3 = arith.constant 0 : index
    %4 = vector.load %arg2[%c0_2, %c0_3] : memref<8x128xbf16, #tpu.memory_space<vmem>>, vector<8x128xbf16>
    %c0_4 = arith.constant 0 : index
    %c0_5 = arith.constant 0 : index
    %5 = vector.load %arg3[%c0_4, %c0_5] : memref<128x8xbf16, #tpu.memory_space<vmem>>, vector<128x8xbf16>
    %cst = arith.constant dense<0.000000e+00> : vector<8x8xf32>
    %6 = tpu.matmul %4, %5, %cst {dimension_numbers = #tpu.dot_dimension_numbers<[1], [0], [0], [1], [0, 0, 1, 1], [], []>} : vector<8x128xbf16>, vector<128x8xbf16>, vector<8x8xf32> -> vector<8x8xf32>
    %7 = arith.addf %3, %6 : vector<8x8xf32>
    %c0_6 = arith.constant 0 : index
    %c0_7 = arith.constant 0 : index
    %8 = vector.load %arg6[%c0_6, %c0_7] : memref<8x8xf32, #tpu.memory_space<vmem>>, vector<8x8xf32>
    tpu.vector_store %arg6[%c0_6, %c0_7], %7 {strides = array<i32>} : memref<8x8xf32, #tpu.memory_space<vmem>>, vector<8x8xf32>,
    %c0_i32_8 = arith.constant 0 : i32
    %9 = arith.cmpi eq, %arg1, %c0_i32_8 : i32
    %10 = arith.extui %9 : i1 to i32
    %c0_i32_9 = arith.constant 0 : i32
    %11 = arith.cmpi ne, %10, %c0_i32_9 : i32
    scf.if %11 {
      %c0_10 = arith.constant 0 : index
      %c0_11 = arith.constant 0 : index
      %12 = vector.load %arg6[%c0_10, %c0_11] : memref<8x8xf32, #tpu.memory_space<vmem>>, vector<8x8xf32>
      %c0_12 = arith.constant 0 : index
      %c0_13 = arith.constant 0 : index
      %13 = vector.load %arg4[%c0_12, %c0_13] : memref<1x8xf32, #tpu.memory_space<vmem>>, vector<1x8xf32>
      %14 = vector.broadcast %13 : vector<1x8xf32> to vector<8x8xf32>
      %15 = arith.addf %12, %14 : vector<8x8xf32>
      %c0_14 = arith.constant 0 : index
      %c0_15 = arith.constant 0 : index
      %16 = vector.load %arg5[%c0_14, %c0_15] : memref<8x8xf32, #tpu.memory_space<vmem>>, vector<8x8xf32>
      tpu.vector_store %arg5[%c0_14, %c0_15], %15 {strides = array<i32>} : memref<8x8xf32, #tpu.memory_space<vmem>>, vector<8x8xf32>,
    } else {
    }
    return
  }
  func.func @transform_0(%arg0: i32, %arg1: i32) -> (i32, i32) {
    %c0_i32 = arith.constant 0 : i32
    return %arg0, %arg1 : i32, i32
  }
  func.func @transform_1(%arg0: i32, %arg1: i32) -> (i32, i32) {
    %c0_i32 = arith.constant 0 : i32
    %c0_i32_0 = arith.constant 0 : i32
    return %arg1, %c0_i32 : i32, i32
  }
  func.func @transform_2(%arg0: i32, %arg1: i32) -> (i32, i32) {
    %c0_i32 = arith.constant 0 : i32
    %c0_i32_0 = arith.constant 0 : i32
    %c0_i32_1 = arith.constant 0 : i32
    return %c0_i32, %c0_i32_0 : i32, i32
  }
  func.func @transform_3(%arg0: i32, %arg1: i32) -> (i32, i32) {
    %c0_i32 = arith.constant 0 : i32
    %c0_i32_0 = arith.constant 0 : i32
    return %arg0, %c0_i32 : i32, i32
  }
}

</mosaic_0001>

<llo_original>
// kernel: _lambda_.20
$region0: #{_lambda_.20}
  #allocation0 [shape = 'u32[]', space=smem, size = 0x4, offset = 0x4, fixed_abs, tag = 'smem constant byte address 0x4 - core index']
  #allocation1 [shape = 'u32[144,128]{1,0:T(1,128)}', space=vmem, size = 0x12000, scoped, tag = 'internal scratch']
  %s0 = inlined_call_operand.vmem [shape: f32[32,32], index: 0, kind: input, shape index: {}]
  %s1 = inlined_call_operand.vmem [shape: f32[32,32], index: 1, kind: input, shape index: {}]
  %s2 = inlined_call_operand.vmem [shape: f32[1,32], index: 2, kind: input, shape index: {}]
  %s3 = inlined_call_operand.vmem [shape: f32[32,32], index: 3, kind: output, shape index: {0}]
  %s4 = inlined_call_operand.vmem [shape: f32[32,32], index: 4, kind: output, shape index: {1}]
  %5 = xla_tuple %s3, %s4
  %s6 = sld [smem:[#allocation0]]
  $region30: #{_lambda_.20} parent=0
    _
  %s8 = ssub.s32 1, %s6
  %s9 = scalar_select 0, %s8, %s6
  // Predicated region
  $region2: #{_lambda_.20} parent=0 // pred_check
    _
  $region3: #{_lambda_.20} parent=0 // pred_check_branch
    %11 = sbr.rel (0) target = $region5
  $region4: #{_lambda_.20} parent=0 // pred_region
    _
  $region5: #{_lambda_.20} parent=0 // pred_fallthru
    _
  // Predicated region
  $region6: #{_lambda_.20} parent=0 // pred_check
    _
  $region7: #{_lambda_.20} parent=0 // pred_check_branch
    %13 = sbr.rel (0) target = $region9
  $region8: #{_lambda_.20} parent=0 // pred_region
    _
  $region9: #{_lambda_.20} parent=0 // pred_fallthru
    _
  // Predicated region
  $region10: #{_lambda_.20} parent=0 // pred_check
    _
  $region11: #{_lambda_.20} parent=0 // pred_check_branch
    %15 = sbr.rel (0) target = $region13
  $region12: #{_lambda_.20} parent=0 // pred_region
    _
  $region13: #{_lambda_.20} parent=0 // pred_fallthru
    _
  %v16 = vld [vmem:[%s0] sm:$0xff]
  %v17 = vld [vmem:[%s0 + $0x8] sm:$0xff]
  %v18 = vld [vmem:[%s0 + $0x10] sm:$0xff]
  %v19 = vld [vmem:[%s0 + $0x18] sm:$0xff]
  %v20 = vld [vmem:[%s1] sm:$0xff]
  %v21 = vld [vmem:[%s1 + $0x8] sm:$0xff]
  %v22 = vld [vmem:[%s1 + $0x10] sm:$0xff]
  %v23 = vld [vmem:[%s1 + $0x18] sm:$0xff]
  %v24 = vadd.f32 %v16, %v20
  %v25 = vadd.f32 %v17, %v21
  %v26 = vadd.f32 %v18, %v22
  %v27 = vadd.f32 %v19, %v23
  %vm28 = vcmask 261120
  %29 = vst.msk [vmem:[%s4] sm:$0xff] %vm28, %v24
  %30 = vst.msk [vmem:[%s4 + $0x8] sm:$0xff] %vm28, %v25
  %31 = vst.msk [vmem:[%s4 + $0x10] sm:$0xff] %vm28, %v26
  %32 = vst.msk [vmem:[%s4 + $0x18] sm:$0xff] %vm28, %v27
  %v33 = vmul.f32 %v24, %v24
  %v34 = vmul.f32 %v25, %v25
  %v35 = vmul.f32 %v26, %v26
  %v36 = vmul.f32 %v27, %v27
  %v37 = vsel %vm28, %v33, 0.0
  %38 = vadd.xlane.f32.xlu0 %v37
  %v39 = vpop.xlane.xlu0 %38
  %v40 = vsel %vm28, %v34, 0.0
  %41 = vadd.xlane.f32.xlu0 %v40
  %v42 = vpop.xlane.xlu0 %41
  %v43 = vsel %vm28, %v35, 0.0
  %44 = vadd.xlane.f32.xlu0 %v43
  %v45 = vpop.xlane.xlu0 %44
  %v46 = vsel %vm28, %v36, 0.0
  %47 = vadd.xlane.f32.xlu0 %v46
  %v48 = vpop.xlane.xlu0 %47
  %v49 = vrcp.pop 32.0
  %v50 = vmul.f32 %v39, %v49
  %v51 = vmul.f32 %v42, %v49
  %v52 = vmul.f32 %v45, %v49
  %v53 = vmul.f32 %v48, %v49
  %v54 = vadd.f32 %v50, 1e-05
  %v55 = vadd.f32 %v51, 1e-05
  %v56 = vadd.f32 %v52, 1e-05
  %v57 = vadd.f32 %v53, 1e-05
  %v58 = vrsqrt.pop %v54
  %v59 = vrsqrt.pop %v55
  %v60 = vrsqrt.pop %v56
  %v61 = vrsqrt.pop %v57
  %v62 = vmul.f32 %v24, %v58
  %v63 = vmul.f32 %v25, %v59
  %v64 = vmul.f32 %v26, %v60
  %v65 = vmul.f32 %v27, %v61
  %v66 = vld [vmem:[%s2] sm:$0x1]
  %v68 = vlaneseq
  %v69 = vshrl.u32 %v68, 7
  %v70 = vsub.s32 0, %v69
  %v71 = vrot.slane %v66, %v70
  %v73 = vmul.f32 %v62, %v71
  %v74 = vmul.f32 %v63, %v71
  %v75 = vmul.f32 %v64, %v71
  %v76 = vmul.f32 %v65, %v71
  %77 = vst.msk [vmem:[%s3] sm:$0xff] %vm28, %v73
  %78 = vst.msk [vmem:[%s3 + $0x8] sm:$0xff] %vm28, %v74
  %79 = vst.msk [vmem:[%s3 + $0x10] sm:$0xff] %vm28, %v75
  %80 = vst.msk [vmem:[%s3 + $0x18] sm:$0xff] %vm28, %v76
  // Predicated region
  $region14: #{_lambda_.20} parent=0 // pred_check
    _
  $region15: #{_lambda_.20} parent=0 // pred_check_branch
    %82 = sbr.rel (0) target = $region17
  $region16: #{_lambda_.20} parent=0 // pred_region
    _
  $region17: #{_lambda_.20} parent=0 // pred_fallthru
    _
  // Predicated region
  $region18: #{_lambda_.20} parent=0 // pred_check
    _
  $region19: #{_lambda_.20} parent=0 // pred_check_branch
    %84 = sbr.rel (0) target = $region21
  $region20: #{_lambda_.20} parent=0 // pred_region
    _
  $region21: #{_lambda_.20} parent=0 // pred_fallthru
    _
  // Predicated region
  $region22: #{_lambda_.20} parent=0 // pred_check
    _
  $region23: #{_lambda_.20} parent=0 // pred_check_branch
    %86 = sbr.rel (0) target = $region25
  $region24: #{_lambda_.20} parent=0 // pred_region
    _
  $region25: #{_lambda_.20} parent=0 // pred_fallthru
    _
  // Predicated region
  $region26: #{_lambda_.20} parent=0 // pred_check
    _
  $region27: #{_lambda_.20} parent=0 // pred_check_branch
    %88 = sbr.rel (0) target = $region29
  $region28: #{_lambda_.20} parent=0 // pred_region
    _
  $region29: #{_lambda_.20} parent=0 // pred_fallthru
    _

// kernel: _lambda_.18
$region0: #{_lambda_.18}
  #allocation0 [shape = 'u32[]', space=smem, size = 0x4, offset = 0x4, fixed_abs, tag = 'smem constant byte address 0x4 - core index']
  #allocation1 [shape = 'u32[144,128]{1,0:T(1,128)}', space=vmem, size = 0x12000, scoped, tag = 'internal scratch']
  %s0 = inlined_call_operand.vmem [shape: f32[2,16,4], index: 0, kind: input, shape index: {}]
  %s1 = inlined_call_operand.vmem [shape: f32[2,16,4], index: 1, kind: output, shape index: {0}]
  %s2 = inlined_call_operand.vmem [shape: f32[2,1,4], index: 2, kind: output, shape index: {1}]
  %s3 = inlined_call_operand.vmem [shape: f32[2,1,4], index: 3, kind: output, shape index: {2}]
  %4 = xla_tuple %s1, %s2, %s3
  %s5 = sld [smem:[#allocation0]]
  $region30: #{_lambda_.18} parent=0
    _
  %s7 = ssub.s32 1, %s5
  %s8 = scalar_select 0, %s7, %s5
  // Predicated region
  $region2: #{_lambda_.18} parent=0 // pred_check
    _
  $region3: #{_lambda_.18} parent=0 // pred_check_branch
    %10 = sbr.rel (0) target = $region5
  $region4: #{_lambda_.18} parent=0 // pred_region
    _
  $region5: #{_lambda_.18} parent=0 // pred_fallthru
    _
  %v11 = vld [vmem:[%s0] sm:$0xff]
  %v12 = vld [vmem:[%s0 + $0x8] sm:$0xff]
  %v13 = vld [vmem:[%s0 + $0x10] sm:$0xff]
  %v14 = vld [vmem:[%s0 + $0x18] sm:$0xff]
  %vm15 = vcmask 31744
  %v16 = vsel %vm15, %v11, 0.0
  %v17 = vsel %vm15, %v12, 0.0
  %v18 = vadd.f32 %v16, %v17
  %v19 = vrot.slane %v18, 4
  %v20 = vadd.f32 %v18, %v19
  %v21 = vrot.slane %v20, 2
  %v22 = vadd.f32 %v20, %v21
  %v23 = vrot.slane %v22, 1
  %v24 = vadd.f32 %v22, %v23
  %v25 = vsel %vm15, %v13, 0.0
  %v26 = vsel %vm15, %v14, 0.0
  %v27 = vadd.f32 %v25, %v26
  %v28 = vrot.slane %v27, 4
  %v29 = vadd.f32 %v27, %v28
  %v30 = vrot.slane %v29, 2
  %v31 = vadd.f32 %v29, %v30
  %v32 = vrot.slane %v31, 1
  %v33 = vadd.f32 %v31, %v32
  %v34 = vrcp.pop 16.0
  %v35 = vmul.f32 %v24, %v34
  %v36 = vmul.f32 %v33, %v34
  %v37 = vsub.f32 %v11, %v35
  %v38 = vsub.f32 %v12, %v35
  %v39 = vsub.f32 %v13, %v36
  %v40 = vsub.f32 %v14, %v36
  %v41 = vmul.f32 %v37, %v37
  %v42 = vmul.f32 %v38, %v38
  %v43 = vmul.f32 %v39, %v39
  %v44 = vmul.f32 %v40, %v40
  %v45 = vsel %vm15, %v41, 0.0
  %v46 = vsel %vm15, %v42, 0.0
  %v47 = vadd.f32 %v45, %v46
  %v48 = vrot.slane %v47, 4
  %v49 = vadd.f32 %v47, %v48
  %v50 = vrot.slane %v49, 2
  %v51 = vadd.f32 %v49, %v50
  %v52 = vrot.slane %v51, 1
  %v53 = vadd.f32 %v51, %v52
  %v54 = vsel %vm15, %v43, 0.0
  %v55 = vsel %vm15, %v44, 0.0
  %v56 = vadd.f32 %v54, %v55
  %v57 = vrot.slane %v56, 4
  %v58 = vadd.f32 %v56, %v57
  %v59 = vrot.slane %v58, 2
  %v60 = vadd.f32 %v58, %v59
  %v61 = vrot.slane %v60, 1
  %v62 = vadd.f32 %v60, %v61
  %v63 = vmul.f32 %v53, %v34
  %v64 = vmul.f32 %v62, %v34
  %v65 = vadd.f32 %v63, 1e-05
  %v66 = vadd.f32 %v64, 1e-05
  %v67 = vrsqrt.pop %v65
  %v68 = vmul.f32 %v65, %v67
  %vm69 = vcmp.eq.f32.partialorder %v65, inf
  %v70 = vsel %vm69, %v65, %v68
  %vm71 = vcmp.eq.f32.partialorder %v65, 0.0
  %v72 = vand.u32 %v65, 2147483648
  %v73 = vsel %vm71, %v72, %v70
  %v74 = vrsqrt.pop %v66
  %v75 = vmul.f32 %v66, %v74
  %vm76 = vcmp.eq.f32.partialorder %v66, inf
  %v77 = vsel %vm76, %v66, %v75
  %vm78 = vcmp.eq.f32.partialorder %v66, 0.0
  %v79 = vand.u32 %v66, 2147483648
  %v80 = vsel %vm78, %v79, %v77
  %vm81 = vcmask 24576
  %82 = vst.msk [vmem:[%s3] sm:$0x1] %vm81, %v73
  %83 = vst.msk [vmem:[%s3 + $0x1] sm:$0x1] %vm81, %v80
  %v84 = vrsqrt.pop %v65
  %v85 = vrsqrt.pop %v66
  %v86 = vmul.f32 %v37, %v84
  %v87 = vmul.f32 %v38, %v84
  %v88 = vmul.f32 %v39, %v85
  %v89 = vmul.f32 %v40, %v85
  %90 = vst.msk [vmem:[%s1] sm:$0xff] %vm15, %v86
  %91 = vst.msk [vmem:[%s1 + $0x8] sm:$0xff] %vm15, %v87
  %92 = vst.msk [vmem:[%s1 + $0x10] sm:$0xff] %vm15, %v88
  %93 = vst.msk [vmem:[%s1 + $0x18] sm:$0xff] %vm15, %v89
  %94 = vst.msk [vmem:[%s2] sm:$0x1] %vm81, %v35
  %95 = vst.msk [vmem:[%s2 + $0x1] sm:$0x1] %vm81, %v36
  // Predicated region
  $region6: #{_lambda_.18} parent=0 // pred_check
    _
  $region7: #{_lambda_.18} parent=0 // pred_check_branch
    %97 = sbr.rel (0) target = $region9
  $region8: #{_lambda_.18} parent=0 // pred_region
    _
  $region9: #{_lambda_.18} parent=0 // pred_fallthru
    _
  // Predicated region
  $region10: #{_lambda_.18} parent=0 // pred_check
    _
  $region11: #{_lambda_.18} parent=0 // pred_check_branch
    %99 = sbr.rel (0) target = $region13
  $region12: #{_lambda_.18} parent=0 // pred_region
    _
  $region13: #{_lambda_.18} parent=0 // pred_fallthru
    _
  // Predicated region
  $region14: #{_lambda_.18} parent=0 // pred_check
    _
  $region15: #{_lambda_.18} parent=0 // pred_check_branch
    %101 = sbr.rel (0) target = $region17
  $region16: #{_lambda_.18} parent=0 // pred_region
    _
  $region17: #{_lambda_.18} parent=0 // pred_fallthru
    _
  // Predicated region
  $region18: #{_lambda_.18} parent=0 // pred_check
    _
  $region19: #{_lambda_.18} parent=0 // pred_check_branch
    %103 = sbr.rel (0) target = $region21
  $region20: #{_lambda_.18} parent=0 // pred_region
    _
  $region21: #{_lambda_.18} parent=0 // pred_fallthru
    _
  // Predicated region
  $region22: #{_lambda_.18} parent=0 // pred_check
    _
  $region23: #{_lambda_.18} parent=0 // pred_check_branch
    %105 = sbr.rel (0) target = $region25
  $region24: #{_lambda_.18} parent=0 // pred_region
    _
  $region25: #{_lambda_.18} parent=0 // pred_fallthru
    _
  // Predicated region
  $region26: #{_lambda_.18} parent=0 // pred_check
    _
  $region27: #{_lambda_.18} parent=0 // pred_check_branch
    %107 = sbr.rel (0) target = $region29
  $region28: #{_lambda_.18} parent=0 // pred_region
    _
  $region29: #{_lambda_.18} parent=0 // pred_fallthru
    _

// kernel: _lambda_.19
$region0: #{_lambda_.19}
  #allocation0 [shape = 'u32[]', space=smem, size = 0x4, offset = 0x4, fixed_abs, tag = 'smem constant byte address 0x4 - core index']
  #allocation1 [shape = 'u32[144,128]{1,0:T(1,128)}', space=vmem, size = 0x12000, scoped, tag = 'internal scratch']
  #allocation2 [shape = 'f32[32,32]{1,0:T(8,128)}', space=vmem, size = 0x4000, scoped, tag = 'scratch operand']
  %s0 = inlined_call_operand.vmem [shape: bf16[32,4], index: 0, kind: input, shape index: {}]
  %s1 = inlined_call_operand.vmem [shape: bf16[4,32], index: 1, kind: input, shape index: {}]
  %s2 = inlined_call_operand.vmem [shape: f32[1,32], index: 2, kind: input, shape index: {}]
  %s3 = inlined_call_operand.vmem [shape: f32[32,32], index: 3, kind: output, shape index: {}]
  %s4 = sld [smem:[#allocation0]]
  $region30: #{_lambda_.19} parent=0
    _
  %s6 = ssub.s32 1, %s4
  %s7 = scalar_select 0, %s6, %s4
  // Predicated region
  $region2: #{_lambda_.19} parent=0 // pred_check
    _
  $region3: #{_lambda_.19} parent=0 // pred_check_branch
    %9 = sbr.rel (0) target = $region5
  $region4: #{_lambda_.19} parent=0 // pred_region
    _
  $region5: #{_lambda_.19} parent=0 // pred_fallthru
    _
  // Predicated region
  $region6: #{_lambda_.19} parent=0 // pred_check
    _
  $region7: #{_lambda_.19} parent=0 // pred_check_branch
    %11 = sbr.rel (0) target = $region9
  $region8: #{_lambda_.19} parent=0 // pred_region
    _
  $region9: #{_lambda_.19} parent=0 // pred_fallthru
    _
  // Predicated region
  $region10: #{_lambda_.19} parent=0 // pred_check
    _
  $region11: #{_lambda_.19} parent=0 // pred_check_branch
    %13 = sbr.rel (0) target = $region13
  $region12: #{_lambda_.19} parent=0 // pred_region
    _
  $region13: #{_lambda_.19} parent=0 // pred_fallthru
    _
  %p15 = scmp.eq.s32.totalorder 0, 0
  // Predicated region
  $region14: #{_lambda_.19} parent=0 // pred_check
    %p16 = pneg %p15
  $region15: #{_lambda_.19} parent=0 // pred_check_branch
    %18 = sbr.rel (%p16) target = $region17
  $region16: #{_lambda_.19} parent=0 // pred_region
    %vm19 = vcmask 261120
    %20 = vst.msk [vmem:[#allocation2] sm:$0xff] %vm19, 0.0
    %21 = vst.msk [vmem:[#allocation2 + $0x8] sm:$0xff] %vm19, 0.0
    %22 = vst.msk [vmem:[#allocation2 + $0x10] sm:$0xff] %vm19, 0.0
    %23 = vst.msk [vmem:[#allocation2 + $0x18] sm:$0xff] %vm19, 0.0
  $region17: #{_lambda_.19} parent=0 // pred_fallthru
    _
  %v24 = vld [vmem:[#allocation2] sm:$0xff]
  %v25 = vld [vmem:[#allocation2 + $0x8] sm:$0xff]
  %v26 = vld [vmem:[#allocation2 + $0x10] sm:$0xff]
  %v27 = vld [vmem:[#allocation2 + $0x18] sm:$0xff]
  %v28 = vld [vmem:[%s0] sm:$0xf]
  %v29 = vld [vmem:[%s0 + $0x4] sm:$0xf]
  %v30 = vld [vmem:[%s0 + $0x8] sm:$0xf]
  %v31 = vld [vmem:[%s0 + $0xc] sm:$0xf]
  %v32 = vld [vmem:[%s1] sm:$0x3]
  %v37 = vunpack.c.l.b16 %v28
  %v38 = vunpack.c.l.b16 %v29
  %v39 = vunpack.c.l.b16 %v30
  %v40 = vunpack.c.l.b16 %v31
  %v41 = vpack.c.b16 %v38, %v37
  %v42 = vpack.c.b16 %v40, %v39
  %vm43 = vcmask 31744
  %v45 = vsel %vm43, %v41, 0
  %v48 = vsel %vm43, %v42, 0
  %vm50 = vcmask 1041408
  %v52 = vsel %vm50, %v32, 0
  %54 = vmatprep.subr.bf16.mxu0 0
  %55 = vmatpush1.bf16.msra.mxu0 %v52
  %56 = vmatprep.subr.bf16.mxu0 0
  %57 = vmatpush1.bf16.msra.mxu0 0
  %58 = vmatprep.subr.bf16.mxu0 0
  %59 = vmatpush1.bf16.msra.mxu0 0
  %60 = vmatprep.subr.bf16.mxu0 0
  %61 = vmatpush1.bf16.msra.mxu0 0
  %62 = vmatprep.subr.bf16.mxu0 0
  %63 = vmatpush1.bf16.msra.mxu0 0
  %64 = vmatprep.subr.bf16.mxu0 0
  %65 = vmatpush1.bf16.msra.mxu0 0
  %66 = vmatprep.subr.bf16.mxu0 0
  %67 = vmatpush1.bf16.msra.mxu0 0
  %68 = vmatprep.subr.bf16.mxu0 0
  %69 = vmatpush1.bf16.msra.mxu0 0
  %70 = vmatprep.subr.bf16.mxu0 0
  %71 = vmatpush1.bf16.msra.mxu0 0
  %72 = vmatprep.subr.bf16.mxu0 0
  %73 = vmatpush1.bf16.msra.mxu0 0
  %74 = vmatprep.subr.bf16.mxu0 0
  %75 = vmatpush1.bf16.msra.mxu0 0
  %76 = vmatprep.subr.bf16.mxu0 0
  %77 = vmatpush1.bf16.msra.mxu0 0
  %78 = vmatprep.subr.bf16.mxu0 0
  %79 = vmatpush1.bf16.msra.mxu0 0
  %80 = vmatprep.subr.bf16.mxu0 0
  %81 = vmatpush1.bf16.msra.mxu0 0
  %82 = vmatprep.subr.bf16.mxu0 0
  %83 = vmatpush1.bf16.msra.mxu0 0
  %84 = vmatprep.subr.bf16.mxu0 0
  %85 = vmatpush1.bf16.msra.mxu0 0
  %86 = vmatprep.mubr.bf16.mxu0 0
  %87 = vmatmul.mubr.bf16.gmra.mrb[0].mxu0 %v45
  %v88 = vpop.f32.mrb[0].mxu0
  %v89 = vadd.f32 0.0, %v88
  %v90 = vpop.f32.mrb[0].mxu0
  %v91 = vpop.f32.mrb[0].mxu0
  %v92 = vadd.f32 0.0, %v91
  %v93 = vpop.f32.mrb[0].mxu0
  %94 = vmatprep.mubr.bf16.mxu0 0
  %95 = vmatmul.mubr.bf16.gmra.mrb[0].mxu0 %v48
  %v96 = vpop.f32.mrb[0].mxu0
  %v97 = vadd.f32 0.0, %v96
  %v98 = vpop.f32.mrb[0].mxu0
  %v99 = vpop.f32.mrb[0].mxu0
  %v100 = vadd.f32 0.0, %v99
  %v101 = vpop.f32.mrb[0].mxu0
  %102 = vdwg.mxu0
  %v103 = vadd.f32 %v24, %v89
  %v104 = vadd.f32 %v25, %v92
  %v105 = vadd.f32 %v26, %v97
  %v106 = vadd.f32 %v27, %v100
  %vm107 = vcmask 261120
  %108 = vst.msk [vmem:[#allocation2] sm:$0xff] %vm107, %v103
  %109 = vst.msk [vmem:[#allocation2 + $0x8] sm:$0xff] %vm107, %v104
  %110 = vst.msk [vmem:[#allocation2 + $0x10] sm:$0xff] %vm107, %v105
  %111 = vst.msk [vmem:[#allocation2 + $0x18] sm:$0xff] %vm107, %v106
  // Predicated region
  $region18: #{_lambda_.19} parent=0 // pred_check
    %p112 = pneg %p15
  $region19: #{_lambda_.19} parent=0 // pred_check_branch
    %114 = sbr.rel (%p112) target = $region21
  $region20: #{_lambda_.19} parent=0 // pred_region
    %v115 = vld [vmem:[#allocation2] sm:$0xff]
    %v116 = vld [vmem:[#allocation2 + $0x8] sm:$0xff]
    %v117 = vld [vmem:[#allocation2 + $0x10] sm:$0xff]
    %v118 = vld [vmem:[#allocation2 + $0x18] sm:$0xff]
    %v119 = vld [vmem:[%s2] sm:$0x1]
    %v121 = vlaneseq
    %v122 = vshrl.u32 %v121, 7
    %v123 = vsub.s32 0, %v122
    %v124 = vrot.slane %v119, %v123
    %v126 = vadd.f32 %v115, %v124
    %v127 = vadd.f32 %v116, %v124
    %v128 = vadd.f32 %v117, %v124
    %v129 = vadd.f32 %v118, %v124
    %130 = vst.msk [vmem:[%s3] sm:$0xff] %vm107, %v126
    %131 = vst.msk [vmem:[%s3 + $0x8] sm:$0xff] %vm107, %v127
    %132 = vst.msk [vmem:[%s3 + $0x10] sm:$0xff] %vm107, %v128
    %133 = vst.msk [vmem:[%s3 + $0x18] sm:$0xff] %vm107, %v129
  $region21: #{_lambda_.19} parent=0 // pred_fallthru
    _
  // Predicated region
  $region22: #{_lambda_.19} parent=0 // pred_check
    _
  $region23: #{_lambda_.19} parent=0 // pred_check_branch
    %135 = sbr.rel (0) target = $region25
  $region24: #{_lambda_.19} parent=0 // pred_region
    _
  $region25: #{_lambda_.19} parent=0 // pred_fallthru
    _
  // Predicated region
  $region26: #{_lambda_.19} parent=0 // pred_check
    _
  $region27: #{_lambda_.19} parent=0 // pred_check_branch
    %137 = sbr.rel (0) target = $region29
  $region28: #{_lambda_.19} parent=0 // pred_region
    _
  $region29: #{_lambda_.19} parent=0 // pred_fallthru
    _

// kernel: _lambda_.22
$region0: #{_lambda_.22}
  #allocation0 [shape = 'u32[]', space=smem, size = 0x4, offset = 0x4, fixed_abs, tag = 'smem constant byte address 0x4 - core index']
  #allocation1 [shape = 'u32[144,128]{1,0:T(1,128)}', space=vmem, size = 0x12000, scoped, tag = 'internal scratch']
  %s0 = inlined_call_operand.vmem [shape: f32[2,16,64], index: 0, kind: input, shape index: {}]
  %s1 = inlined_call_operand.vmem [shape: f32[4,64], index: 1, kind: input, shape index: {}]
  %s2 = inlined_call_operand.vmem [shape: f32[1,64], index: 2, kind: input, shape index: {}]
  %s3 = inlined_call_operand.vmem [shape: f32[2,16,64], index: 3, kind: output, shape index: {}]
  %s4 = sld [smem:[#allocation0]]
  $region45: #{_lambda_.22} parent=0
    _
  %s6 = ssub.s32 1, %s4
  %s7 = scalar_select 0, %s6, %s4
  loop: start=0, step=1, limit=4
  $region2: #{_lambda_.22} parent=0 // loop_pre_header
    _
  $region3: #{_lambda_.22} parent=0 // loop_header
    %s9 = sphi 0, %s13
    %p10 = scmp.ge.s32.totalorder %s9, 4
    %s19 = sphi 0, %s21
    %s22 = sphi 0, %s19
    %s23 = sphi 0, %s22
    %s39 = sphi 0, %s23
    %s43 = sphi 0, %s43
    %s45 = sphi 0, %s43
    %s46 = sphi 0, %s45
    %s60 = sphi 0, %s46
    %s64 = sphi 0, %s64
    %s66 = sphi 0, %s64
    %s67 = sphi 0, %s66
    %s81 = sphi 0, %s67
    %s87 = sphi 0, %s89
    %s90 = sphi 0, %s87
    %s91 = sphi 0, %s90
    %s107 = sphi 0, %s91
  $region4: #{_lambda_.22} parent=0 // loop_header_branch
    %12 = sbr.rel (%p10) target = $region8
  $region5: #{_lambda_.22} parent=0 // loop_body
    %s14 = ssub.s32 %s9, 1
    %s15 = ssub.s32 %s9, 2
    %s16 = sadd.s32 %s9, 1
    %s17 = ssub.s32 %s9, %s16
    %p18 = scmp.eq.s32.totalorder %s17, 0
    %s20 = sadd.s32 %s19, 1
    %s21 = scalar_select %p18, %s19, %s20
    %p24 = pneg %p18
    %p25 = scmp.eq.s32.totalorder %s9, 1
    %p26 = por %p24, %p25
    %p27 = scmp.ne.s32.totalorder %s19, %s22
    %p28 = scmp.eq.s32.totalorder %s9, 0
    %p29 = por %p27, %p28
    %p30 = scmp.ne.s32.totalorder %s19, %s22
    %p31 = scmp.eq.s32.totalorder %s14, 1
    %p32 = por %p30, %p31
    %p33 = scmp.ne.s32.totalorder %s22, %s23
    %p34 = scmp.eq.s32.totalorder %s14, 0
    %p35 = por %p33, %p34
    %p36 = scmp.ne.s32.totalorder %s22, %s23
    %p37 = scmp.eq.s32.totalorder %s15, 1
    %p38 = por %p36, %p37
    %p40 = scmp.ne.s32.totalorder %s23, %s39
    %p41 = scmp.eq.s32.totalorder %s15, 0
    %p42 = por %p40, %p41
    %s44 = sadd.s32 %s43, 1
    %p47 = scmp.eq.s32.totalorder %s9, 1
    %p48 = scmp.ne.s32.totalorder %s43, %s45
    %p49 = scmp.eq.s32.totalorder %s9, 0
    %p50 = por %p48, %p49
    %p51 = scmp.ne.s32.totalorder %s43, %s45
    %p52 = scmp.eq.s32.totalorder %s14, 1
    %p53 = por %p51, %p52
    %p54 = scmp.ne.s32.totalorder %s45, %s46
    %p55 = scmp.eq.s32.totalorder %s14, 0
    %p56 = por %p54, %p55
    %p57 = scmp.ne.s32.totalorder %s45, %s46
    %p58 = scmp.eq.s32.totalorder %s15, 1
    %p59 = por %p57, %p58
    %p61 = scmp.ne.s32.totalorder %s46, %s60
    %p62 = scmp.eq.s32.totalorder %s15, 0
    %p63 = por %p61, %p62
    %s65 = sadd.s32 %s64, 1
    %p68 = scmp.eq.s32.totalorder %s9, 1
    %p69 = scmp.ne.s32.totalorder %s64, %s66
    %p70 = scmp.eq.s32.totalorder %s9, 0
    %p71 = por %p69, %p70
    %p72 = scmp.ne.s32.totalorder %s64, %s66
    %p73 = scmp.eq.s32.totalorder %s14, 1
    %p74 = por %p72, %p73
    %p75 = scmp.ne.s32.totalorder %s66, %s67
    %p76 = scmp.eq.s32.totalorder %s14, 0
    %p77 = por %p75, %p76
    %p78 = scmp.ne.s32.totalorder %s66, %s67
    %p79 = scmp.eq.s32.totalorder %s15, 1
    %p80 = por %p78, %p79
    %p82 = scmp.ne.s32.totalorder %s67, %s81
    %p83 = scmp.eq.s32.totalorder %s15, 0
    %p84 = por %p82, %p83
    %s85 = ssub.s32 %s9, %s16
    %p86 = scmp.eq.s32.totalorder %s85, 0
    %s88 = sadd.s32 %s87, 1
    %s89 = scalar_select %p86, %s87, %s88
    %p92 = pneg %p86
    %p93 = scmp.eq.s32.totalorder %s9, 1
    %p94 = por %p92, %p93
    %p95 = scmp.ne.s32.totalorder %s87, %s90
    %p96 = scmp.eq.s32.totalorder %s9, 0
    %p97 = por %p95, %p96
    %p98 = scmp.ne.s32.totalorder %s87, %s90
    %p99 = scmp.eq.s32.totalorder %s14, 1
    %p100 = por %p98, %p99
    %p101 = scmp.ne.s32.totalorder %s90, %s91
    %p102 = scmp.eq.s32.totalorder %s14, 0
    %p103 = por %p101, %p102
    %p104 = scmp.ne.s32.totalorder %s90, %s91
    %p105 = scmp.eq.s32.totalorder %s15, 1
    %p106 = por %p104, %p105
    %p108 = scmp.ne.s32.totalorder %s91, %s107
    %p109 = scmp.eq.s32.totalorder %s15, 0
    %p110 = por %p108, %p109
    %p111 = scmp.le.s32.totalorder 1, %s9
    %p112 = scmp.lt.s32.totalorder %s9, 3
    %p113 = pnand %p111, %p112
    %p114 = pneg %p113
    // Predicated region
    $region9: #{_lambda_.22} parent=5 // pred_check
      _
    $region10: #{_lambda_.22} parent=5 // pred_check_branch
      %116 = sbr.rel (%p113) target = $region12
    $region11: #{_lambda_.22} parent=5 // pred_region
      %s117 = ssub.s32 %s9, 1
      // Predicated region
      $region13: #{_lambda_.22} parent=11 // pred_check
        %p118 = pneg %p56
      $region14: #{_lambda_.22} parent=11 // pred_check_branch
        %120 = sbr.rel (%p118) target = $region16
      $region15: #{_lambda_.22} parent=11 // pred_region
        _
      $region16: #{_lambda_.22} parent=11 // pred_fallthru
        _
      // Predicated region
      $region17: #{_lambda_.22} parent=11 // pred_check
        %p121 = pneg %p77
      $region18: #{_lambda_.22} parent=11 // pred_check_branch
        %123 = sbr.rel (%p121) target = $region20
      $region19: #{_lambda_.22} parent=11 // pred_region
        _
      $region20: #{_lambda_.22} parent=11 // pred_fallthru
        _
    $region12: #{_lambda_.22} parent=5 // pred_fallthru
      _
    %p124 = scmp.lt.s32.totalorder %s9, 2
    // Predicated region
    $region21: #{_lambda_.22} parent=5 // pred_check
      %p125 = pneg %p124
    $region22: #{_lambda_.22} parent=5 // pred_check_branch
      %127 = sbr.rel (%p125) target = $region24
    $region23: #{_lambda_.22} parent=5 // pred_region
      // Predicated region
      $region25: #{_lambda_.22} parent=23 // pred_check
        %p128 = pneg %p29
      $region26: #{_lambda_.22} parent=23 // pred_check_branch
        %130 = sbr.rel (%p128) target = $region28
      $region27: #{_lambda_.22} parent=23 // pred_region
        %p131 = scmp.lt.s32.totalorder %s9, 1
        %s132 = scalar_select %p131, %s9, 1
        %s133 = smul.addr %s132, 2
        %s134 = smul.addr %s133, 8
        %s135 = scalar_lea.vmem %s0, %s134
      $region28: #{_lambda_.22} parent=23 // pred_fallthru
        _
    $region24: #{_lambda_.22} parent=5 // pred_fallthru
      _
    %p136 = scmp.le.s32.totalorder 1, %s9
    %p137 = scmp.lt.s32.totalorder %s9, 3
    %p138 = pnand %p136, %p137
    %p139 = pneg %p138
    // Predicated region
    $region29: #{_lambda_.22} parent=5 // pred_check
      _
    $region30: #{_lambda_.22} parent=5 // pred_check_branch
      %141 = sbr.rel (%p138) target = $region32
    $region31: #{_lambda_.22} parent=5 // pred_region
      %s142 = ssub.s32 %s9, 1
      %p143 = scmp.lt.s32.totalorder %s14, 1
      %s144 = scalar_select %p143, %s14, 1
      %s145 = smul.addr %s144, 2
      %s146 = smul.addr %s145, 8
      %s147 = scalar_lea.vmem %s0, %s146
      %p148 = pneg %p35
      %p149 = pneg %p32
      %p150 = pneg %p56
      %p151 = pneg %p53
      %p152 = pneg %p77
      %p153 = pneg %p74
      %p154 = pneg %p103
      %p155 = pneg %p100
      %p156 = scmp.lt.s32.totalorder %s14, 1
      %s157 = scalar_select %p156, %s14, 1
      %s158 = smul.addr %s157, 2
      %s159 = smul.addr %s158, 8
      %s160 = scalar_lea.vmem %s3, %s159
      %p161 = scmp.lt.s32.totalorder %s14, 1
      %s162 = scalar_select %p161, %s14, 1
      %s163 = smul.addr %s162, 2
      %s164 = smul.addr %s163, 8
      %s165 = scalar_lea.vmem %s0, %s164
      %p166 = scmp.lt.s32.totalorder %s14, 1
      %s167 = scalar_select %p166, %s14, 1
      %s168 = smul.addr %s167, 2
      %s169 = smul.addr %s168, 8
      %s170 = scalar_lea.vmem %s3, %s169
      %v171 = vld [vmem:[%s165] sm:$0xff]
      %v172 = vld [vmem:[%s165 + $0x8] sm:$0xff]
      %v173 = vld [vmem:[%s1 + $0x3] sm:$0x1]
      %v174 = vlaneseq
      %v175 = vshrl.u32 %v174, 7
      %v176 = vsub.s32 0, %v175
      %v177 = vrot.slane %v173, %v176
      %v178 = vmul.f32 %v171, %v177
      %v179 = vmul.f32 %v172, %v177
      %vm182 = vcmask 1040384
      %v183 = vrot.slane %v171, 7
      %v184 = vrot.slane %v172, 7
      %v185 = vsel %vm182, %v183, %v184
      %v188 = vsel %vm182, 0.0, %v183
      %v189 = vld [vmem:[%s1 + $0x2] sm:$0x1]
      %v190 = vlaneseq
      %v191 = vshrl.u32 %v190, 7
      %v192 = vsub.s32 0, %v191
      %v193 = vrot.slane %v189, %v192
      %v194 = vmul.f32 %v188, %v193
      %v195 = vmul.f32 %v185, %v193
      %v196 = vadd.f32 %v178, %v194
      %v197 = vadd.f32 %v179, %v195
      %vm198 = vcmask 1041408
      %v199 = vrot.slane %v171, 6
      %v200 = vrot.slane %v172, 6
      %v201 = vsel %vm198, %v199, %v200
      %v204 = vsel %vm198, 0.0, %v199
      %v205 = vld [vmem:[%s1 + $0x1] sm:$0x1]
      %v206 = vlaneseq
      %v207 = vshrl.u32 %v206, 7
      %v208 = vsub.s32 0, %v207
      %v209 = vrot.slane %v205, %v208
      %v210 = vmul.f32 %v204, %v209
      %v211 = vmul.f32 %v201, %v209
      %v212 = vadd.f32 %v196, %v210
      %v213 = vadd.f32 %v197, %v211
      %vm214 = vcmask 1042432
      %v215 = vrot.slane %v171, 5
      %v216 = vrot.slane %v172, 5
      %v217 = vsel %vm214, %v215, %v216
      %v220 = vsel %vm214, 0.0, %v215
      %v221 = vld [vmem:[%s1] sm:$0x1]
      %v222 = vlaneseq
      %v223 = vshrl.u32 %v222, 7
      %v224 = vsub.s32 0, %v223
      %v225 = vrot.slane %v221, %v224
      %v226 = vmul.f32 %v220, %v225
      %v227 = vmul.f32 %v217, %v225
      %v228 = vadd.f32 %v212, %v226
      %v229 = vadd.f32 %v213, %v227
      %v230 = vld [vmem:[%s2] sm:$0x1]
      %v232 = vlaneseq
      %v233 = vshrl.u32 %v232, 7
      %v234 = vsub.s32 0, %v233
      %v235 = vrot.slane %v230, %v234
      %v237 = vadd.f32 %v228, %v235
      %v238 = vadd.f32 %v229, %v235
      %v239 = vsub.f32 0.0, %v237
      %v240 = vsub.f32 0.0, %v238
      %v241 = vmul.f32 %v239, 1.442695
      %v242 = vpow.pop %v241
      %v243 = vmul.f32 %v240, 1.442695
      %v244 = vpow.pop %v243
      %v245 = vadd.f32 %v242, 1.0
      %v246 = vadd.f32 %v244, 1.0
      %v247 = vrcp.pop %v245
      %v248 = vrcp.pop %v246
      %v249 = vmul.f32 %v237, %v247
      %v250 = vmul.f32 %v238, %v248
      %vm251 = vcmask 523264
      %252 = vst.msk [vmem:[%s170] sm:$0xff] %vm251, %v249
      %253 = vst.msk [vmem:[%s170 + $0x8] sm:$0xff] %vm251, %v250
      %p254 = scmp.lt.s32.totalorder %s14, 1
      %s255 = scalar_select %p254, %s14, 1
      %s256 = smul.addr %s255, 2
      %s257 = smul.addr %s256, 8
      %s258 = scalar_lea.vmem %s3, %s257
      // Predicated region
      $region33: #{_lambda_.22} parent=31 // pred_check
        %p259 = pneg %p100
      $region34: #{_lambda_.22} parent=31 // pred_check_branch
        %261 = sbr.rel (%p259) target = $region36
      $region35: #{_lambda_.22} parent=31 // pred_region
        _
      $region36: #{_lambda_.22} parent=31 // pred_fallthru
        _
    $region32: #{_lambda_.22} parent=5 // pred_fallthru
      _
    %p262 = scmp.le.s32.totalorder 2, %s9
    // Predicated region
    $region37: #{_lambda_.22} parent=5 // pred_check
      %p263 = pneg %p262
    $region38: #{_lambda_.22} parent=5 // pred_check_branch
      %265 = sbr.rel (%p263) target = $region40
    $region39: #{_lambda_.22} parent=5 // pred_region
      %s266 = ssub.s32 %s9, 2
      // Predicated region
      $region41: #{_lambda_.22} parent=39 // pred_check
        %p267 = pneg %p106
      $region42: #{_lambda_.22} parent=39 // pred_check_branch
        %269 = sbr.rel (%p267) target = $region44
      $region43: #{_lambda_.22} parent=39 // pred_region
        %p270 = scmp.lt.s32.totalorder %s15, 1
        %s271 = scalar_select %p270, %s15, 1
        %s272 = smul.addr %s271, 2
        %s273 = smul.addr %s272, 8
        %s274 = scalar_lea.vmem %s3, %s273
      $region44: #{_lambda_.22} parent=39 // pred_fallthru
        _
    $region40: #{_lambda_.22} parent=5 // pred_fallthru
      _
  $region6: #{_lambda_.22} parent=0 // loop_footer
    %s13 = sadd.s32 1, %s9
  $region7: #{_lambda_.22} parent=0 // loop_footer_branch
    %8 = sbr.rel target = $region3
  $region8: #{_lambda_.22} parent=0 // loop_exit
    _

// kernel: _lambda_.21
$region0: #{_lambda_.21}
  #allocation0 [shape = 'u32[]', space=smem, size = 0x4, offset = 0x4, fixed_abs, tag = 'smem constant byte address 0x4 - core index']
  #allocation1 [shape = 'u32[144,128]{1,0:T(1,128)}', space=vmem, size = 0x12000, scoped, tag = 'internal scratch']
  #allocation2 [shape = 'f32[32,128]{1,0:T(8,128)}', space=vmem, size = 0x4000, scoped, tag = 'scratch operand']
  %s0 = inlined_call_operand.vmem [shape: bf16[32,32], index: 0, kind: input, shape index: {}]
  %s1 = inlined_call_operand.vmem [shape: bf16[32,128], index: 1, kind: input, shape index: {}]
  %s2 = inlined_call_operand.vmem [shape: f32[1,128], index: 2, kind: input, shape index: {}]
  %s3 = inlined_call_operand.vmem [shape: f32[32,128], index: 3, kind: output, shape index: {}]
  %s4 = sld [smem:[#allocation0]]
  $region30: #{_lambda_.21} parent=0
    _
  %s6 = ssub.s32 1, %s4
  %s7 = scalar_select 0, %s6, %s4
  // Predicated region
  $region2: #{_lambda_.21} parent=0 // pred_check
    _
  $region3: #{_lambda_.21} parent=0 // pred_check_branch
    %9 = sbr.rel (0) target = $region5
  $region4: #{_lambda_.21} parent=0 // pred_region
    _
  $region5: #{_lambda_.21} parent=0 // pred_fallthru
    _
  // Predicated region
  $region6: #{_lambda_.21} parent=0 // pred_check
    _
  $region7: #{_lambda_.21} parent=0 // pred_check_branch
    %11 = sbr.rel (0) target = $region9
  $region8: #{_lambda_.21} parent=0 // pred_region
    _
  $region9: #{_lambda_.21} parent=0 // pred_fallthru
    _
  // Predicated region
  $region10: #{_lambda_.21} parent=0 // pred_check
    _
  $region11: #{_lambda_.21} parent=0 // pred_check_branch
    %13 = sbr.rel (0) target = $region13
  $region12: #{_lambda_.21} parent=0 // pred_region
    _
  $region13: #{_lambda_.21} parent=0 // pred_fallthru
    _
  %p15 = scmp.eq.s32.totalorder 0, 0
  // Predicated region
  $region14: #{_lambda_.21} parent=0 // pred_check
    %p16 = pneg %p15
  $region15: #{_lambda_.21} parent=0 // pred_check_branch
    %18 = sbr.rel (%p16) target = $region17
  $region16: #{_lambda_.21} parent=0 // pred_region
    %19 = vst [vmem:[#allocation2] sm:$0xff] 0.0
    %20 = vst [vmem:[#allocation2 + $0x8] sm:$0xff] 0.0
    %21 = vst [vmem:[#allocation2 + $0x10] sm:$0xff] 0.0
    %22 = vst [vmem:[#allocation2 + $0x18] sm:$0xff] 0.0
  $region17: #{_lambda_.21} parent=0 // pred_fallthru
    _
  %v23 = vld [vmem:[#allocation2] sm:$0xff]
  %v24 = vld [vmem:[#allocation2 + $0x8] sm:$0xff]
  %v25 = vld [vmem:[#allocation2 + $0x10] sm:$0xff]
  %v26 = vld [vmem:[#allocation2 + $0x18] sm:$0xff]
  %v27 = vld [vmem:[%s0] sm:$0xf]
  %v28 = vld [vmem:[%s0 + $0x4] sm:$0xf]
  %v29 = vld [vmem:[%s0 + $0x8] sm:$0xf]
  %v30 = vld [vmem:[%s0 + $0xc] sm:$0xf]
  %v31 = vld [vmem:[%s1] sm:$0xf]
  %v32 = vld [vmem:[%s1 + $0x4] sm:$0xf]
  %v33 = vld [vmem:[%s1 + $0x8] sm:$0xf]
  %v34 = vld [vmem:[%s1 + $0xc] sm:$0xf]
  %v39 = vunpack.c.l.b16 %v27
  %v40 = vunpack.c.l.b16 %v28
  %v41 = vunpack.c.l.b16 %v29
  %v42 = vunpack.c.l.b16 %v30
  %v43 = vpack.c.b16 %v40, %v39
  %v44 = vpack.c.b16 %v42, %v41
  %v49 = vunpack.c.l.b16 %v31
  %v50 = vunpack.c.l.b16 %v32
  %v51 = vunpack.c.l.b16 %v33
  %v52 = vunpack.c.l.b16 %v34
  %v53 = vpack.c.b16 %v50, %v49
  %v54 = vpack.c.b16 %v52, %v51
  %vm57 = vcmask 261120
  %v59 = vsel %vm57, %v43, 0
  %v62 = vsel %vm57, %v44, 0
  %64 = vmatprep.subr.bf16.mxu0 0
  %65 = vmatpush1.bf16.msra.mxu0 %v53
  %66 = vmatprep.subr.bf16.mxu0 0
  %67 = vmatpush1.bf16.msra.mxu0 %v54
  %68 = vmatprep.subr.bf16.mxu0 0
  %69 = vmatpush1.bf16.msra.mxu0 0
  %70 = vmatprep.subr.bf16.mxu0 0
  %71 = vmatpush1.bf16.msra.mxu0 0
  %72 = vmatprep.subr.bf16.mxu0 0
  %73 = vmatpush1.bf16.msra.mxu0 0
  %74 = vmatprep.subr.bf16.mxu0 0
  %75 = vmatpush1.bf16.msra.mxu0 0
  %76 = vmatprep.subr.bf16.mxu0 0
  %77 = vmatpush1.bf16.msra.mxu0 0
  %78 = vmatprep.subr.bf16.mxu0 0
  %79 = vmatpush1.bf16.msra.mxu0 0
  %80 = vmatprep.subr.bf16.mxu0 0
  %81 = vmatpush1.bf16.msra.mxu0 0
  %82 = vmatprep.subr.bf16.mxu0 0
  %83 = vmatpush1.bf16.msra.mxu0 0
  %84 = vmatprep.subr.bf16.mxu0 0
  %85 = vmatpush1.bf16.msra.mxu0 0
  %86 = vmatprep.subr.bf16.mxu0 0
  %87 = vmatpush1.bf16.msra.mxu0 0
  %88 = vmatprep.subr.bf16.mxu0 0
  %89 = vmatpush1.bf16.msra.mxu0 0
  %90 = vmatprep.subr.bf16.mxu0 0
  %91 = vmatpush1.bf16.msra.mxu0 0
  %92 = vmatprep.subr.bf16.mxu0 0
  %93 = vmatpush1.bf16.msra.mxu0 0
  %94 = vmatprep.subr.bf16.mxu0 0
  %95 = vmatpush1.bf16.msra.mxu0 0
  %96 = vmatprep.mubr.bf16.mxu0 0
  %97 = vmatmul.mubr.bf16.gmra.mrb[0].mxu0 %v59
  %v98 = vpop.f32.mrb[0].mxu0
  %v99 = vadd.f32 0.0, %v98
  %v100 = vpop.f32.mrb[0].mxu0
  %v101 = vpop.f32.mrb[0].mxu0
  %v102 = vadd.f32 0.0, %v101
  %v103 = vpop.f32.mrb[0].mxu0
  %104 = vmatprep.mubr.bf16.mxu0 0
  %105 = vmatmul.mubr.bf16.gmra.mrb[0].mxu0 %v62
  %v106 = vpop.f32.mrb[0].mxu0
  %v107 = vadd.f32 0.0, %v106
  %v108 = vpop.f32.mrb[0].mxu0
  %v109 = vpop.f32.mrb[0].mxu0
  %v110 = vadd.f32 0.0, %v109
  %v111 = vpop.f32.mrb[0].mxu0
  %112 = vdwg.mxu0
  %v113 = vadd.f32 %v23, %v99
  %v114 = vadd.f32 %v24, %v102
  %v115 = vadd.f32 %v25, %v107
  %v116 = vadd.f32 %v26, %v110
  %117 = vst [vmem:[#allocation2] sm:$0xff] %v113
  %118 = vst [vmem:[#allocation2 + $0x8] sm:$0xff] %v114
  %119 = vst [vmem:[#allocation2 + $0x10] sm:$0xff] %v115
  %120 = vst [vmem:[#allocation2 + $0x18] sm:$0xff] %v116
  // Predicated region
  $region18: #{_lambda_.21} parent=0 // pred_check
    %p121 = pneg %p15
  $region19: #{_lambda_.21} parent=0 // pred_check_branch
    %123 = sbr.rel (%p121) target = $region21
  $region20: #{_lambda_.21} parent=0 // pred_region
    %v124 = vld [vmem:[#allocation2] sm:$0xff]
    %v125 = vld [vmem:[#allocation2 + $0x8] sm:$0xff]
    %v126 = vld [vmem:[#allocation2 + $0x10] sm:$0xff]
    %v127 = vld [vmem:[#allocation2 + $0x18] sm:$0xff]
    %v128 = vld [vmem:[%s2] sm:$0x1]
    %v130 = vlaneseq
    %v131 = vshrl.u32 %v130, 7
    %v132 = vsub.s32 0, %v131
    %v133 = vrot.slane %v128, %v132
    %v135 = vadd.f32 %v124, %v133
    %v136 = vadd.f32 %v125, %v133
    %v137 = vadd.f32 %v126, %v133
    %v138 = vadd.f32 %v127, %v133
    %139 = vst [vmem:[%s3] sm:$0xff] %v135
    %140 = vst [vmem:[%s3 + $0x8] sm:$0xff] %v136
    %141 = vst [vmem:[%s3 + $0x10] sm:$0xff] %v137
    %142 = vst [vmem:[%s3 + $0x18] sm:$0xff] %v138
  $region21: #{_lambda_.21} parent=0 // pred_fallthru
    _
  // Predicated region
  $region22: #{_lambda_.21} parent=0 // pred_check
    _
  $region23: #{_lambda_.21} parent=0 // pred_check_branch
    %144 = sbr.rel (0) target = $region25
  $region24: #{_lambda_.21} parent=0 // pred_region
    _
  $region25: #{_lambda_.21} parent=0 // pred_fallthru
    _
  // Predicated region
  $region26: #{_lambda_.21} parent=0 // pred_check
    _
  $region27: #{_lambda_.21} parent=0 // pred_check_branch
    %146 = sbr.rel (0) target = $region29
  $region28: #{_lambda_.21} parent=0 // pred_region
    _
  $region29: #{_lambda_.21} parent=0 // pred_fallthru
    _

// kernel: _lambda_.23
$region0: #{_lambda_.23}
  #allocation0 [shape = 'u32[]', space=smem, size = 0x4, offset = 0x4, fixed_abs, tag = 'smem constant byte address 0x4 - core index']
  #allocation1 [shape = 'u32[144,128]{1,0:T(1,128)}', space=vmem, size = 0x12000, scoped, tag = 'internal scratch']
  #allocation2 [shape = 'f32[32,34]{1,0:T(8,128)}', space=vmem, size = 0x4000, scoped, tag = 'scratch operand']
  %s0 = inlined_call_operand.vmem [shape: bf16[32,64], index: 0, kind: input, shape index: {}]
  %s1 = inlined_call_operand.vmem [shape: bf16[64,34], index: 1, kind: input, shape index: {}]
  %s2 = inlined_call_operand.vmem [shape: f32[1,34], index: 2, kind: input, shape index: {}]
  %s3 = inlined_call_operand.vmem [shape: f32[32,34], index: 3, kind: output, shape index: {}]
  %s4 = sld [smem:[#allocation0]]
  $region30: #{_lambda_.23} parent=0
    _
  %s6 = ssub.s32 1, %s4
  %s7 = scalar_select 0, %s6, %s4
  // Predicated region
  $region2: #{_lambda_.23} parent=0 // pred_check
    _
  $region3: #{_lambda_.23} parent=0 // pred_check_branch
    %9 = sbr.rel (0) target = $region5
  $region4: #{_lambda_.23} parent=0 // pred_region
    _
  $region5: #{_lambda_.23} parent=0 // pred_fallthru
    _
  // Predicated region
  $region6: #{_lambda_.23} parent=0 // pred_check
    _
  $region7: #{_lambda_.23} parent=0 // pred_check_branch
    %11 = sbr.rel (0) target = $region9
  $region8: #{_lambda_.23} parent=0 // pred_region
    _
  $region9: #{_lambda_.23} parent=0 // pred_fallthru
    _
  // Predicated region
  $region10: #{_lambda_.23} parent=0 // pred_check
    _
  $region11: #{_lambda_.23} parent=0 // pred_check_branch
    %13 = sbr.rel (0) target = $region13
  $region12: #{_lambda_.23} parent=0 // pred_region
    _
  $region13: #{_lambda_.23} parent=0 // pred_fallthru
    _
  %p15 = scmp.eq.s32.totalorder 0, 0
  // Predicated region
  $region14: #{_lambda_.23} parent=0 // pred_check
    %p16 = pneg %p15
  $region15: #{_lambda_.23} parent=0 // pred_check_branch
    %18 = sbr.rel (%p16) target = $region17
  $region16: #{_lambda_.23} parent=0 // pred_region
    %vm19 = vcmask 277504
    %20 = vst.msk [vmem:[#allocation2] sm:$0xff] %vm19, 0.0
    %21 = vst.msk [vmem:[#allocation2 + $0x8] sm:$0xff] %vm19, 0.0
    %22 = vst.msk [vmem:[#allocation2 + $0x10] sm:$0xff] %vm19, 0.0
    %23 = vst.msk [vmem:[#allocation2 + $0x18] sm:$0xff] %vm19, 0.0
  $region17: #{_lambda_.23} parent=0 // pred_fallthru
    _
  %v24 = vld [vmem:[#allocation2] sm:$0xff]
  %v25 = vld [vmem:[#allocation2 + $0x8] sm:$0xff]
  %v26 = vld [vmem:[#allocation2 + $0x10] sm:$0xff]
  %v27 = vld [vmem:[#allocation2 + $0x18] sm:$0xff]
  %v28 = vld [vmem:[%s0] sm:$0xf]
  %v29 = vld [vmem:[%s0 + $0x4] sm:$0xf]
  %v30 = vld [vmem:[%s0 + $0x8] sm:$0xf]
  %v31 = vld [vmem:[%s0 + $0xc] sm:$0xf]
  %v32 = vld [vmem:[%s1] sm:$0xf]
  %v33 = vld [vmem:[%s1 + $0x4] sm:$0xf]
  %v34 = vld [vmem:[%s1 + $0x8] sm:$0xf]
  %v35 = vld [vmem:[%s1 + $0xc] sm:$0xf]
  %v36 = vld [vmem:[%s1 + $0x10] sm:$0xf]
  %v37 = vld [vmem:[%s1 + $0x14] sm:$0xf]
  %v38 = vld [vmem:[%s1 + $0x18] sm:$0xf]
  %v39 = vld [vmem:[%s1 + $0x1c] sm:$0xf]
  %v44 = vunpack.c.l.b16 %v28
  %v45 = vunpack.c.l.b16 %v29
  %v46 = vunpack.c.l.b16 %v30
  %v47 = vunpack.c.l.b16 %v31
  %v48 = vpack.c.b16 %v45, %v44
  %v49 = vpack.c.b16 %v47, %v46
  %v58 = vunpack.c.l.b16 %v32
  %v59 = vunpack.c.l.b16 %v33
  %v60 = vunpack.c.l.b16 %v34
  %v61 = vunpack.c.l.b16 %v35
  %v62 = vunpack.c.l.b16 %v36
  %v63 = vunpack.c.l.b16 %v37
  %v64 = vunpack.c.l.b16 %v38
  %v65 = vunpack.c.l.b16 %v39
  %v66 = vpack.c.b16 %v59, %v58
  %v67 = vpack.c.b16 %v61, %v60
  %v68 = vpack.c.b16 %v63, %v62
  %v69 = vpack.c.b16 %v65, %v64
  %vm74 = vcmask 523264
  %v76 = vsel %vm74, %v48, 0
  %v79 = vsel %vm74, %v49, 0
  %81 = vmatprep.subr.bf16.mxu0 0
  %82 = vmatpush1.bf16.msra.mxu0 %v66
  %83 = vmatprep.subr.bf16.mxu0 0
  %84 = vmatpush1.bf16.msra.mxu0 %v67
  %85 = vmatprep.subr.bf16.mxu0 0
  %86 = vmatpush1.bf16.msra.mxu0 %v68
  %87 = vmatprep.subr.bf16.mxu0 0
  %88 = vmatpush1.bf16.msra.mxu0 %v69
  %89 = vmatprep.subr.bf16.mxu0 0
  %90 = vmatpush1.bf16.msra.mxu0 0
  %91 = vmatprep.subr.bf16.mxu0 0
  %92 = vmatpush1.bf16.msra.mxu0 0
  %93 = vmatprep.subr.bf16.mxu0 0
  %94 = vmatpush1.bf16.msra.mxu0 0
  %95 = vmatprep.subr.bf16.mxu0 0
  %96 = vmatpush1.bf16.msra.mxu0 0
  %97 = vmatprep.subr.bf16.mxu0 0
  %98 = vmatpush1.bf16.msra.mxu0 0
  %99 = vmatprep.subr.bf16.mxu0 0
  %100 = vmatpush1.bf16.msra.mxu0 0
  %101 = vmatprep.subr.bf16.mxu0 0
  %102 = vmatpush1.bf16.msra.mxu0 0
  %103 = vmatprep.subr.bf16.mxu0 0
  %104 = vmatpush1.bf16.msra.mxu0 0
  %105 = vmatprep.subr.bf16.mxu0 0
  %106 = vmatpush1.bf16.msra.mxu0 0
  %107 = vmatprep.subr.bf16.mxu0 0
  %108 = vmatpush1.bf16.msra.mxu0 0
  %109 = vmatprep.subr.bf16.mxu0 0
  %110 = vmatpush1.bf16.msra.mxu0 0
  %111 = vmatprep.subr.bf16.mxu0 0
  %112 = vmatpush1.bf16.msra.mxu0 0
  %113 = vmatprep.mubr.bf16.mxu0 0
  %114 = vmatmul.mubr.bf16.gmra.mrb[0].mxu0 %v76
  %v115 = vpop.f32.mrb[0].mxu0
  %v116 = vadd.f32 0.0, %v115
  %v117 = vpop.f32.mrb[0].mxu0
  %v118 = vpop.f32.mrb[0].mxu0
  %v119 = vadd.f32 0.0, %v118
  %v120 = vpop.f32.mrb[0].mxu0
  %121 = vmatprep.mubr.bf16.mxu0 0
  %122 = vmatmul.mubr.bf16.gmra.mrb[0].mxu0 %v79
  %v123 = vpop.f32.mrb[0].mxu0
  %v124 = vadd.f32 0.0, %v123
  %v125 = vpop.f32.mrb[0].mxu0
  %v126 = vpop.f32.mrb[0].mxu0
  %v127 = vadd.f32 0.0, %v126
  %v128 = vpop.f32.mrb[0].mxu0
  %129 = vdwg.mxu0
  %v130 = vadd.f32 %v24, %v116
  %v131 = vadd.f32 %v25, %v119
  %v132 = vadd.f32 %v26, %v124
  %v133 = vadd.f32 %v27, %v127
  %vm134 = vcmask 277504
  %135 = vst.msk [vmem:[#allocation2] sm:$0xff] %vm134, %v130
  %136 = vst.msk [vmem:[#allocation2 + $0x8] sm:$0xff] %vm134, %v131
  %137 = vst.msk [vmem:[#allocation2 + $0x10] sm:$0xff] %vm134, %v132
  %138 = vst.msk [vmem:[#allocation2 + $0x18] sm:$0xff] %vm134, %v133
  // Predicated region
  $region18: #{_lambda_.23} parent=0 // pred_check
    %p139 = pneg %p15
  $region19: #{_lambda_.23} parent=0 // pred_check_branch
    %141 = sbr.rel (%p139) target = $region21
  $region20: #{_lambda_.23} parent=0 // pred_region
    %v142 = vld [vmem:[#allocation2] sm:$0xff]
    %v143 = vld [vmem:[#allocation2 + $0x8] sm:$0xff]
    %v144 = vld [vmem:[#allocation2 + $0x10] sm:$0xff]
    %v145 = vld [vmem:[#allocation2 + $0x18] sm:$0xff]
    %v146 = vld [vmem:[%s2] sm:$0x1]
    %v148 = vlaneseq
    %v149 = vshrl.u32 %v148, 7
    %v150 = vsub.s32 0, %v149
    %v151 = vrot.slane %v146, %v150
    %v153 = vadd.f32 %v142, %v151
    %v154 = vadd.f32 %v143, %v151
    %v155 = vadd.f32 %v144, %v151
    %v156 = vadd.f32 %v145, %v151
    %157 = vst.msk [vmem:[%s3] sm:$0xff] %vm134, %v153
    %158 = vst.msk [vmem:[%s3 + $0x8] sm:$0xff] %vm134, %v154
    %159 = vst.msk [vmem:[%s3 + $0x10] sm:$0xff] %vm134, %v155
    %160 = vst.msk [vmem:[%s3 + $0x18] sm:$0xff] %vm134, %v156
  $region21: #{_lambda_.23} parent=0 // pred_fallthru
    _
  // Predicated region
  $region22: #{_lambda_.23} parent=0 // pred_check
    _
  $region23: #{_lambda_.23} parent=0 // pred_check_branch
    %162 = sbr.rel (0) target = $region25
  $region24: #{_lambda_.23} parent=0 // pred_region
    _
  $region25: #{_lambda_.23} parent=0 // pred_fallthru
    _
  // Predicated region
  $region26: #{_lambda_.23} parent=0 // pred_check
    _
  $region27: #{_lambda_.23} parent=0 // pred_check_branch
    %164 = sbr.rel (0) target = $region29
  $region28: #{_lambda_.23} parent=0 // pred_region
    _
  $region29: #{_lambda_.23} parent=0 // pred_fallthru
    _

// kernel: _lambda_.26
$region0: #{_lambda_.26}
  #allocation0 [shape = 'u32[]', space=smem, size = 0x4, offset = 0x4, fixed_abs, tag = 'smem constant byte address 0x4 - core index']
  #allocation1 [shape = 'u32[144,128]{1,0:T(1,128)}', space=vmem, size = 0x12000, scoped, tag = 'internal scratch']
  #allocation2 [shape = 'f32[32,32]{1,0:T(8,128)}', space=vmem, size = 0x4000, scoped, tag = 'scratch operand']
  %s0 = inlined_call_operand.vmem [shape: bf16[32,64], index: 0, kind: input, shape index: {}]
  %s1 = inlined_call_operand.vmem [shape: bf16[64,32], index: 1, kind: input, shape index: {}]
  %s2 = inlined_call_operand.vmem [shape: f32[1,32], index: 2, kind: input, shape index: {}]
  %s3 = inlined_call_operand.vmem [shape: f32[32,32], index: 3, kind: output, shape index: {}]
  %s4 = sld [smem:[#allocation0]]
  $region30: #{_lambda_.26} parent=0
    _
  %s6 = ssub.s32 1, %s4
  %s7 = scalar_select 0, %s6, %s4
  // Predicated region
  $region2: #{_lambda_.26} parent=0 // pred_check
    _
  $region3: #{_lambda_.26} parent=0 // pred_check_branch
    %9 = sbr.rel (0) target = $region5
  $region4: #{_lambda_.26} parent=0 // pred_region
    _
  $region5: #{_lambda_.26} parent=0 // pred_fallthru
    _
  // Predicated region
  $region6: #{_lambda_.26} parent=0 // pred_check
    _
  $region7: #{_lambda_.26} parent=0 // pred_check_branch
    %11 = sbr.rel (0) target = $region9
  $region8: #{_lambda_.26} parent=0 // pred_region
    _
  $region9: #{_lambda_.26} parent=0 // pred_fallthru
    _
  // Predicated region
  $region10: #{_lambda_.26} parent=0 // pred_check
    _
  $region11: #{_lambda_.26} parent=0 // pred_check_branch
    %13 = sbr.rel (0) target = $region13
  $region12: #{_lambda_.26} parent=0 // pred_region
    _
  $region13: #{_lambda_.26} parent=0 // pred_fallthru
    _
  %p15 = scmp.eq.s32.totalorder 0, 0
  // Predicated region
  $region14: #{_lambda_.26} parent=0 // pred_check
    %p16 = pneg %p15
  $region15: #{_lambda_.26} parent=0 // pred_check_branch
    %18 = sbr.rel (%p16) target = $region17
  $region16: #{_lambda_.26} parent=0 // pred_region
    %vm19 = vcmask 261120
    %20 = vst.msk [vmem:[#allocation2] sm:$0xff] %vm19, 0.0
    %21 = vst.msk [vmem:[#allocation2 + $0x8] sm:$0xff] %vm19, 0.0
    %22 = vst.msk [vmem:[#allocation2 + $0x10] sm:$0xff] %vm19, 0.0
    %23 = vst.msk [vmem:[#allocation2 + $0x18] sm:$0xff] %vm19, 0.0
  $region17: #{_lambda_.26} parent=0 // pred_fallthru
    _
  %v24 = vld [vmem:[#allocation2] sm:$0xff]
  %v25 = vld [vmem:[#allocation2 + $0x8] sm:$0xff]
  %v26 = vld [vmem:[#allocation2 + $0x10] sm:$0xff]
  %v27 = vld [vmem:[#allocation2 + $0x18] sm:$0xff]
  %v28 = vld [vmem:[%s0] sm:$0xf]
  %v29 = vld [vmem:[%s0 + $0x4] sm:$0xf]
  %v30 = vld [vmem:[%s0 + $0x8] sm:$0xf]
  %v31 = vld [vmem:[%s0 + $0xc] sm:$0xf]
  %v32 = vld [vmem:[%s1] sm:$0xf]
  %v33 = vld [vmem:[%s1 + $0x4] sm:$0xf]
  %v34 = vld [vmem:[%s1 + $0x8] sm:$0xf]
  %v35 = vld [vmem:[%s1 + $0xc] sm:$0xf]
  %v36 = vld [vmem:[%s1 + $0x10] sm:$0xf]
  %v37 = vld [vmem:[%s1 + $0x14] sm:$0xf]
  %v38 = vld [vmem:[%s1 + $0x18] sm:$0xf]
  %v39 = vld [vmem:[%s1 + $0x1c] sm:$0xf]
  %v44 = vunpack.c.l.b16 %v28
  %v45 = vunpack.c.l.b16 %v29
  %v46 = vunpack.c.l.b16 %v30
  %v47 = vunpack.c.l.b16 %v31
  %v48 = vpack.c.b16 %v45, %v44
  %v49 = vpack.c.b16 %v47, %v46
  %v58 = vunpack.c.l.b16 %v32
  %v59 = vunpack.c.l.b16 %v33
  %v60 = vunpack.c.l.b16 %v34
  %v61 = vunpack.c.l.b16 %v35
  %v62 = vunpack.c.l.b16 %v36
  %v63 = vunpack.c.l.b16 %v37
  %v64 = vunpack.c.l.b16 %v38
  %v65 = vunpack.c.l.b16 %v39
  %v66 = vpack.c.b16 %v59, %v58
  %v67 = vpack.c.b16 %v61, %v60
  %v68 = vpack.c.b16 %v63, %v62
  %v69 = vpack.c.b16 %v65, %v64
  %vm74 = vcmask 523264
  %v76 = vsel %vm74, %v48, 0
  %v79 = vsel %vm74, %v49, 0
  %81 = vmatprep.subr.bf16.mxu0 0
  %82 = vmatpush1.bf16.msra.mxu0 %v66
  %83 = vmatprep.subr.bf16.mxu0 0
  %84 = vmatpush1.bf16.msra.mxu0 %v67
  %85 = vmatprep.subr.bf16.mxu0 0
  %86 = vmatpush1.bf16.msra.mxu0 %v68
  %87 = vmatprep.subr.bf16.mxu0 0
  %88 = vmatpush1.bf16.msra.mxu0 %v69
  %89 = vmatprep.subr.bf16.mxu0 0
  %90 = vmatpush1.bf16.msra.mxu0 0
  %91 = vmatprep.subr.bf16.mxu0 0
  %92 = vmatpush1.bf16.msra.mxu0 0
  %93 = vmatprep.subr.bf16.mxu0 0
  %94 = vmatpush1.bf16.msra.mxu0 0
  %95 = vmatprep.subr.bf16.mxu0 0
  %96 = vmatpush1.bf16.msra.mxu0 0
  %97 = vmatprep.subr.bf16.mxu0 0
  %98 = vmatpush1.bf16.msra.mxu0 0
  %99 = vmatprep.subr.bf16.mxu0 0
  %100 = vmatpush1.bf16.msra.mxu0 0
  %101 = vmatprep.subr.bf16.mxu0 0
  %102 = vmatpush1.bf16.msra.mxu0 0
  %103 = vmatprep.subr.bf16.mxu0 0
  %104 = vmatpush1.bf16.msra.mxu0 0
  %105 = vmatprep.subr.bf16.mxu0 0
  %106 = vmatpush1.bf16.msra.mxu0 0
  %107 = vmatprep.subr.bf16.mxu0 0
  %108 = vmatpush1.bf16.msra.mxu0 0
  %109 = vmatprep.subr.bf16.mxu0 0
  %110 = vmatpush1.bf16.msra.mxu0 0
  %111 = vmatprep.subr.bf16.mxu0 0
  %112 = vmatpush1.bf16.msra.mxu0 0
  %113 = vmatprep.mubr.bf16.mxu0 0
  %114 = vmatmul.mubr.bf16.gmra.mrb[0].mxu0 %v76
  %v115 = vpop.f32.mrb[0].mxu0
  %v116 = vadd.f32 0.0, %v115
  %v117 = vpop.f32.mrb[0].mxu0
  %v118 = vpop.f32.mrb[0].mxu0
  %v119 = vadd.f32 0.0, %v118
  %v120 = vpop.f32.mrb[0].mxu0
  %121 = vmatprep.mubr.bf16.mxu0 0
  %122 = vmatmul.mubr.bf16.gmra.mrb[0].mxu0 %v79
  %v123 = vpop.f32.mrb[0].mxu0
  %v124 = vadd.f32 0.0, %v123
  %v125 = vpop.f32.mrb[0].mxu0
  %v126 = vpop.f32.mrb[0].mxu0
  %v127 = vadd.f32 0.0, %v126
  %v128 = vpop.f32.mrb[0].mxu0
  %129 = vdwg.mxu0
  %v130 = vadd.f32 %v24, %v116
  %v131 = vadd.f32 %v25, %v119
  %v132 = vadd.f32 %v26, %v124
  %v133 = vadd.f32 %v27, %v127
  %vm134 = vcmask 261120
  %135 = vst.msk [vmem:[#allocation2] sm:$0xff] %vm134, %v130
  %136 = vst.msk [vmem:[#allocation2 + $0x8] sm:$0xff] %vm134, %v131
  %137 = vst.msk [vmem:[#allocation2 + $0x10] sm:$0xff] %vm134, %v132
  %138 = vst.msk [vmem:[#allocation2 + $0x18] sm:$0xff] %vm134, %v133
  // Predicated region
  $region18: #{_lambda_.26} parent=0 // pred_check
    %p139 = pneg %p15
  $region19: #{_lambda_.26} parent=0 // pred_check_branch
    %141 = sbr.rel (%p139) target = $region21
  $region20: #{_lambda_.26} parent=0 // pred_region
    %v142 = vld [vmem:[#allocation2] sm:$0xff]
    %v143 = vld [vmem:[#allocation2 + $0x8] sm:$0xff]
    %v144 = vld [vmem:[#allocation2 + $0x10] sm:$0xff]
    %v145 = vld [vmem:[#allocation2 + $0x18] sm:$0xff]
    %v146 = vld [vmem:[%s2] sm:$0x1]
    %v148 = vlaneseq
    %v149 = vshrl.u32 %v148, 7
    %v150 = vsub.s32 0, %v149
    %v151 = vrot.slane %v146, %v150
    %v153 = vadd.f32 %v142, %v151
    %v154 = vadd.f32 %v143, %v151
    %v155 = vadd.f32 %v144, %v151
    %v156 = vadd.f32 %v145, %v151
    %157 = vst.msk [vmem:[%s3] sm:$0xff] %vm134, %v153
    %158 = vst.msk [vmem:[%s3 + $0x8] sm:$0xff] %vm134, %v154
    %159 = vst.msk [vmem:[%s3 + $0x10] sm:$0xff] %vm134, %v155
    %160 = vst.msk [vmem:[%s3 + $0x18] sm:$0xff] %vm134, %v156
  $region21: #{_lambda_.26} parent=0 // pred_fallthru
    _
  // Predicated region
  $region22: #{_lambda_.26} parent=0 // pred_check
    _
  $region23: #{_lambda_.26} parent=0 // pred_check_branch
    %162 = sbr.rel (0) target = $region25
  $region24: #{_lambda_.26} parent=0 // pred_region
    _
  $region25: #{_lambda_.26} parent=0 // pred_fallthru
    _
  // Predicated region
  $region26: #{_lambda_.26} parent=0 // pred_check
    _
  $region27: #{_lambda_.26} parent=0 // pred_check_branch
    %164 = sbr.rel (0) target = $region29
  $region28: #{_lambda_.26} parent=0 // pred_region
    _
  $region29: #{_lambda_.26} parent=0 // pred_fallthru
    _

// kernel: _lambda_.24
$region0: #{_lambda_.24}
  #allocation0 [shape = 'u32[]', space=smem, size = 0x4, offset = 0x4, fixed_abs, tag = 'smem constant byte address 0x4 - core index']
  #allocation1 [shape = 'u32[144,128]{1,0:T(1,128)}', space=vmem, size = 0x12000, scoped, tag = 'internal scratch']
  #allocation2 [shape = 'f32[32,64]{1,0:T(8,128)}', space=vmem, size = 0x4000, scoped, tag = 'scratch operand']
  %s0 = inlined_call_operand.vmem [shape: bf16[32,2], index: 0, kind: input, shape index: {}]
  %s1 = inlined_call_operand.vmem [shape: bf16[2,64], index: 1, kind: input, shape index: {}]
  %s2 = inlined_call_operand.vmem [shape: f32[1,64], index: 2, kind: input, shape index: {}]
  %s3 = inlined_call_operand.vmem [shape: f32[32,64], index: 3, kind: output, shape index: {}]
  %s4 = sld [smem:[#allocation0]]
  $region30: #{_lambda_.24} parent=0
    _
  %s6 = ssub.s32 1, %s4
  %s7 = scalar_select 0, %s6, %s4
  // Predicated region
  $region2: #{_lambda_.24} parent=0 // pred_check
    _
  $region3: #{_lambda_.24} parent=0 // pred_check_branch
    %9 = sbr.rel (0) target = $region5
  $region4: #{_lambda_.24} parent=0 // pred_region
    _
  $region5: #{_lambda_.24} parent=0 // pred_fallthru
    _
  // Predicated region
  $region6: #{_lambda_.24} parent=0 // pred_check
    _
  $region7: #{_lambda_.24} parent=0 // pred_check_branch
    %11 = sbr.rel (0) target = $region9
  $region8: #{_lambda_.24} parent=0 // pred_region
    _
  $region9: #{_lambda_.24} parent=0 // pred_fallthru
    _
  // Predicated region
  $region10: #{_lambda_.24} parent=0 // pred_check
    _
  $region11: #{_lambda_.24} parent=0 // pred_check_branch
    %13 = sbr.rel (0) target = $region13
  $region12: #{_lambda_.24} parent=0 // pred_region
    _
  $region13: #{_lambda_.24} parent=0 // pred_fallthru
    _
  %p15 = scmp.eq.s32.totalorder 0, 0
  // Predicated region
  $region14: #{_lambda_.24} parent=0 // pred_check
    %p16 = pneg %p15
  $region15: #{_lambda_.24} parent=0 // pred_check_branch
    %18 = sbr.rel (%p16) target = $region17
  $region16: #{_lambda_.24} parent=0 // pred_region
    %vm19 = vcmask 523264
    %20 = vst.msk [vmem:[#allocation2] sm:$0xff] %vm19, 0.0
    %21 = vst.msk [vmem:[#allocation2 + $0x8] sm:$0xff] %vm19, 0.0
    %22 = vst.msk [vmem:[#allocation2 + $0x10] sm:$0xff] %vm19, 0.0
    %23 = vst.msk [vmem:[#allocation2 + $0x18] sm:$0xff] %vm19, 0.0
  $region17: #{_lambda_.24} parent=0 // pred_fallthru
    _
  %v24 = vld [vmem:[#allocation2] sm:$0xff]
  %v25 = vld [vmem:[#allocation2 + $0x8] sm:$0xff]
  %v26 = vld [vmem:[#allocation2 + $0x10] sm:$0xff]
  %v27 = vld [vmem:[#allocation2 + $0x18] sm:$0xff]
  %v28 = vld [vmem:[%s0] sm:$0xf]
  %v29 = vld [vmem:[%s0 + $0x4] sm:$0xf]
  %v30 = vld [vmem:[%s0 + $0x8] sm:$0xf]
  %v31 = vld [vmem:[%s0 + $0xc] sm:$0xf]
  %v32 = vld [vmem:[%s1] sm:$0x1]
  %v37 = vunpack.c.l.b16 %v28
  %v38 = vunpack.c.l.b16 %v29
  %v39 = vunpack.c.l.b16 %v30
  %v40 = vunpack.c.l.b16 %v31
  %v41 = vpack.c.b16 %v38, %v37
  %v42 = vpack.c.b16 %v40, %v39
  %vm43 = vcmask 15360
  %v45 = vsel %vm43, %v41, 0
  %v48 = vsel %vm43, %v42, 0
  %vm50 = vcmask 1040384
  %v52 = vsel %vm50, %v32, 0
  %54 = vmatprep.subr.bf16.mxu0 0
  %55 = vmatpush1.bf16.msra.mxu0 %v52
  %56 = vmatprep.subr.bf16.mxu0 0
  %57 = vmatpush1.bf16.msra.mxu0 0
  %58 = vmatprep.subr.bf16.mxu0 0
  %59 = vmatpush1.bf16.msra.mxu0 0
  %60 = vmatprep.subr.bf16.mxu0 0
  %61 = vmatpush1.bf16.msra.mxu0 0
  %62 = vmatprep.subr.bf16.mxu0 0
  %63 = vmatpush1.bf16.msra.mxu0 0
  %64 = vmatprep.subr.bf16.mxu0 0
  %65 = vmatpush1.bf16.msra.mxu0 0
  %66 = vmatprep.subr.bf16.mxu0 0
  %67 = vmatpush1.bf16.msra.mxu0 0
  %68 = vmatprep.subr.bf16.mxu0 0
  %69 = vmatpush1.bf16.msra.mxu0 0
  %70 = vmatprep.subr.bf16.mxu0 0
  %71 = vmatpush1.bf16.msra.mxu0 0
  %72 = vmatprep.subr.bf16.mxu0 0
  %73 = vmatpush1.bf16.msra.mxu0 0
  %74 = vmatprep.subr.bf16.mxu0 0
  %75 = vmatpush1.bf16.msra.mxu0 0
  %76 = vmatprep.subr.bf16.mxu0 0
  %77 = vmatpush1.bf16.msra.mxu0 0
  %78 = vmatprep.subr.bf16.mxu0 0
  %79 = vmatpush1.bf16.msra.mxu0 0
  %80 = vmatprep.subr.bf16.mxu0 0
  %81 = vmatpush1.bf16.msra.mxu0 0
  %82 = vmatprep.subr.bf16.mxu0 0
  %83 = vmatpush1.bf16.msra.mxu0 0
  %84 = vmatprep.subr.bf16.mxu0 0
  %85 = vmatpush1.bf16.msra.mxu0 0
  %86 = vmatprep.mubr.bf16.mxu0 0
  %87 = vmatmul.mubr.bf16.gmra.mrb[0].mxu0 %v45
  %v88 = vpop.f32.mrb[0].mxu0
  %v89 = vadd.f32 0.0, %v88
  %v90 = vpop.f32.mrb[0].mxu0
  %v91 = vpop.f32.mrb[0].mxu0
  %v92 = vadd.f32 0.0, %v91
  %v93 = vpop.f32.mrb[0].mxu0
  %94 = vmatprep.mubr.bf16.mxu0 0
  %95 = vmatmul.mubr.bf16.gmra.mrb[0].mxu0 %v48
  %v96 = vpop.f32.mrb[0].mxu0
  %v97 = vadd.f32 0.0, %v96
  %v98 = vpop.f32.mrb[0].mxu0
  %v99 = vpop.f32.mrb[0].mxu0
  %v100 = vadd.f32 0.0, %v99
  %v101 = vpop.f32.mrb[0].mxu0
  %102 = vdwg.mxu0
  %v103 = vadd.f32 %v24, %v89
  %v104 = vadd.f32 %v25, %v92
  %v105 = vadd.f32 %v26, %v97
  %v106 = vadd.f32 %v27, %v100
  %vm107 = vcmask 523264
  %108 = vst.msk [vmem:[#allocation2] sm:$0xff] %vm107, %v103
  %109 = vst.msk [vmem:[#allocation2 + $0x8] sm:$0xff] %vm107, %v104
  %110 = vst.msk [vmem:[#allocation2 + $0x10] sm:$0xff] %vm107, %v105
  %111 = vst.msk [vmem:[#allocation2 + $0x18] sm:$0xff] %vm107, %v106
  // Predicated region
  $region18: #{_lambda_.24} parent=0 // pred_check
    %p112 = pneg %p15
  $region19: #{_lambda_.24} parent=0 // pred_check_branch
    %114 = sbr.rel (%p112) target = $region21
  $region20: #{_lambda_.24} parent=0 // pred_region
    %v115 = vld [vmem:[#allocation2] sm:$0xff]
    %v116 = vld [vmem:[#allocation2 + $0x8] sm:$0xff]
    %v117 = vld [vmem:[#allocation2 + $0x10] sm:$0xff]
    %v118 = vld [vmem:[#allocation2 + $0x18] sm:$0xff]
    %v119 = vld [vmem:[%s2] sm:$0x1]
    %v121 = vlaneseq
    %v122 = vshrl.u32 %v121, 7
    %v123 = vsub.s32 0, %v122
    %v124 = vrot.slane %v119, %v123
    %v126 = vadd.f32 %v115, %v124
    %v127 = vadd.f32 %v116, %v124
    %v128 = vadd.f32 %v117, %v124
    %v129 = vadd.f32 %v118, %v124
    %130 = vst.msk [vmem:[%s3] sm:$0xff] %vm107, %v126
    %131 = vst.msk [vmem:[%s3 + $0x8] sm:$0xff] %vm107, %v127
    %132 = vst.msk [vmem:[%s3 + $0x10] sm:$0xff] %vm107, %v128
    %133 = vst.msk [vmem:[%s3 + $0x18] sm:$0xff] %vm107, %v129
  $region21: #{_lambda_.24} parent=0 // pred_fallthru
    _
  // Predicated region
  $region22: #{_lambda_.24} parent=0 // pred_check
    _
  $region23: #{_lambda_.24} parent=0 // pred_check_branch
    %135 = sbr.rel (0) target = $region25
  $region24: #{_lambda_.24} parent=0 // pred_region
    _
  $region25: #{_lambda_.24} parent=0 // pred_fallthru
    _
  // Predicated region
  $region26: #{_lambda_.24} parent=0 // pred_check
    _
  $region27: #{_lambda_.24} parent=0 // pred_check_branch
    %137 = sbr.rel (0) target = $region29
  $region28: #{_lambda_.24} parent=0 // pred_region
    _
  $region29: #{_lambda_.24} parent=0 // pred_fallthru
    _

// kernel: _lambda_.25
$region0: #{_lambda_.25}
  #allocation0 [shape = 'u32[]', space=smem, size = 0x4, offset = 0x4, fixed_abs, tag = 'smem constant byte address 0x4 - core index']
  #allocation1 [shape = 'u32[144,128]{1,0:T(1,128)}', space=vmem, size = 0x12000, scoped, tag = 'internal scratch']
  #allocation2 [shape = 'f32[16,64]{1,0:T(8,128)}', space=vmem, size = 0x2000, scoped, tag = 'scratch operand']
  %s0 = inlined_call_operand.vmem [shape: f32[2,16,64], index: 0, kind: input, shape index: {}]
  %s1 = inlined_call_operand.vmem [shape: f32[2,16,64], index: 1, kind: input, shape index: {}]
  %s2 = inlined_call_operand.vmem [shape: f32[2,1,16,16], index: 2, kind: input, shape index: {}]
  %s3 = inlined_call_operand.vmem [shape: f32[2,1,16,16], index: 3, kind: input, shape index: {}]
  %s4 = inlined_call_operand.vmem [shape: f32[2,16,64], index: 4, kind: input, shape index: {}]
  %s5 = inlined_call_operand.vmem [shape: f32[16,64], index: 5, kind: input, shape index: {}]
  %s6 = inlined_call_operand.vmem [shape: f32[1,64], index: 6, kind: input, shape index: {}]
  %s7 = inlined_call_operand.vmem [shape: f32[2,16,64], index: 7, kind: output, shape index: {}]
  %s8 = sld [smem:[#allocation0]]
  $region65: #{_lambda_.25} parent=0
    _
  %s10 = ssub.s32 1, %s8
  %s11 = scalar_select 0, %s10, %s8
  loop: start=0, step=1, limit=4
  $region2: #{_lambda_.25} parent=0 // loop_pre_header
    _
  $region3: #{_lambda_.25} parent=0 // loop_header
    %s13 = sphi 0, %s17
    %p14 = scmp.ge.s32.totalorder %s13, 4
    %s20 = sphi 0, %s32
    %s21 = sphi 0, %s28
    %s22 = sphi 0, %s20
    %s23 = sphi 0, %s21
    %s24 = sphi 0, %s22
    %s25 = sphi 0, %s23
    %s37 = sphi 0, %s39
    %s40 = sphi 0, %s37
    %s41 = sphi 0, %s40
    %s57 = sphi 0, %s41
    %s65 = sphi 0, %s67
    %s68 = sphi 0, %s65
    %s69 = sphi 0, %s68
    %s85 = sphi 0, %s69
    %s93 = sphi 0, %s95
    %s96 = sphi 0, %s93
    %s97 = sphi 0, %s96
    %s113 = sphi 0, %s97
    %s121 = sphi 0, %s123
    %s124 = sphi 0, %s121
    %s125 = sphi 0, %s124
    %s141 = sphi 0, %s125
    %s149 = sphi 0, %s151
    %s152 = sphi 0, %s149
    %s153 = sphi 0, %s152
    %s169 = sphi 0, %s153
    %s173 = sphi 0, %s173
    %s175 = sphi 0, %s173
    %s176 = sphi 0, %s175
    %s190 = sphi 0, %s176
    %s194 = sphi 0, %s194
    %s196 = sphi 0, %s194
    %s197 = sphi 0, %s196
    %s211 = sphi 0, %s197
    %s219 = sphi 0, %s221
    %s222 = sphi 0, %s219
    %s223 = sphi 0, %s222
    %s239 = sphi 0, %s223
  $region4: #{_lambda_.25} parent=0 // loop_header_branch
    %16 = sbr.rel (%p14) target = $region8
  $region5: #{_lambda_.25} parent=0 // loop_body
    %s18 = ssub.s32 %s13, 1
    %s19 = ssub.s32 %s13, 2
    %s26 = sadd.s32 1, %s21
    %p27 = scmp.ge.s32.totalorder %s26, 1
    %s28 = scalar_select %p27, 0, %s26
    %s29 = sadd.s32 1, %s20
    %s30 = scalar_select %p27, %s29, %s20
    %p31 = scmp.ge.s32.totalorder %s30, 2
    %s32 = scalar_select %p31, 0, %s30
    %s33 = ssub.s32 %s20, %s32
    %s34 = ssub.s32 %s21, %s28
    %s35 = sor.u32 %s33, %s34
    %p36 = scmp.eq.s32.totalorder %s35, 0
    %s38 = sadd.s32 %s37, 1
    %s39 = scalar_select %p36, %s37, %s38
    %p42 = pneg %p36
    %p43 = scmp.eq.s32.totalorder %s13, 1
    %p44 = por %p42, %p43
    %p45 = scmp.ne.s32.totalorder %s37, %s40
    %p46 = scmp.eq.s32.totalorder %s13, 0
    %p47 = por %p45, %p46
    %p48 = scmp.ne.s32.totalorder %s37, %s40
    %p49 = scmp.eq.s32.totalorder %s18, 1
    %p50 = por %p48, %p49
    %p51 = scmp.ne.s32.totalorder %s40, %s41
    %p52 = scmp.eq.s32.totalorder %s18, 0
    %p53 = por %p51, %p52
    %p54 = scmp.ne.s32.totalorder %s40, %s41
    %p55 = scmp.eq.s32.totalorder %s19, 1
    %p56 = por %p54, %p55
    %p58 = scmp.ne.s32.totalorder %s41, %s57
    %p59 = scmp.eq.s32.totalorder %s19, 0
    %p60 = por %p58, %p59
    %s61 = ssub.s32 %s20, %s32
    %s62 = ssub.s32 %s21, %s28
    %s63 = sor.u32 %s61, %s62
    %p64 = scmp.eq.s32.totalorder %s63, 0
    %s66 = sadd.s32 %s65, 1
    %s67 = scalar_select %p64, %s65, %s66
    %p70 = pneg %p64
    %p71 = scmp.eq.s32.totalorder %s13, 1
    %p72 = por %p70, %p71
    %p73 = scmp.ne.s32.totalorder %s65, %s68
    %p74 = scmp.eq.s32.totalorder %s13, 0
    %p75 = por %p73, %p74
    %p76 = scmp.ne.s32.totalorder %s65, %s68
    %p77 = scmp.eq.s32.totalorder %s18, 1
    %p78 = por %p76, %p77
    %p79 = scmp.ne.s32.totalorder %s68, %s69
    %p80 = scmp.eq.s32.totalorder %s18, 0
    %p81 = por %p79, %p80
    %p82 = scmp.ne.s32.totalorder %s68, %s69
    %p83 = scmp.eq.s32.totalorder %s19, 1
    %p84 = por %p82, %p83
    %p86 = scmp.ne.s32.totalorder %s69, %s85
    %p87 = scmp.eq.s32.totalorder %s19, 0
    %p88 = por %p86, %p87
    %s89 = ssub.s32 %s20, %s32
    %s90 = ssub.s32 %s21, %s28
    %s91 = sor.u32 %s89, %s90
    %p92 = scmp.eq.s32.totalorder %s91, 0
    %s94 = sadd.s32 %s93, 1
    %s95 = scalar_select %p92, %s93, %s94
    %p98 = pneg %p92
    %p99 = scmp.eq.s32.totalorder %s13, 1
    %p100 = por %p98, %p99
    %p101 = scmp.ne.s32.totalorder %s93, %s96
    %p102 = scmp.eq.s32.totalorder %s13, 0
    %p103 = por %p101, %p102
    %p104 = scmp.ne.s32.totalorder %s93, %s96
    %p105 = scmp.eq.s32.totalorder %s18, 1
    %p106 = por %p104, %p105
    %p107 = scmp.ne.s32.totalorder %s96, %s97
    %p108 = scmp.eq.s32.totalorder %s18, 0
    %p109 = por %p107, %p108
    %p110 = scmp.ne.s32.totalorder %s96, %s97
    %p111 = scmp.eq.s32.totalorder %s19, 1
    %p112 = por %p110, %p111
    %p114 = scmp.ne.s32.totalorder %s97, %s113
    %p115 = scmp.eq.s32.totalorder %s19, 0
    %p116 = por %p114, %p115
    %s117 = ssub.s32 %s20, %s32
    %s118 = ssub.s32 %s21, %s28
    %s119 = sor.u32 %s117, %s118
    %p120 = scmp.eq.s32.totalorder %s119, 0
    %s122 = sadd.s32 %s121, 1
    %s123 = scalar_select %p120, %s121, %s122
    %p126 = pneg %p120
    %p127 = scmp.eq.s32.totalorder %s13, 1
    %p128 = por %p126, %p127
    %p129 = scmp.ne.s32.totalorder %s121, %s124
    %p130 = scmp.eq.s32.totalorder %s13, 0
    %p131 = por %p129, %p130
    %p132 = scmp.ne.s32.totalorder %s121, %s124
    %p133 = scmp.eq.s32.totalorder %s18, 1
    %p134 = por %p132, %p133
    %p135 = scmp.ne.s32.totalorder %s124, %s125
    %p136 = scmp.eq.s32.totalorder %s18, 0
    %p137 = por %p135, %p136
    %p138 = scmp.ne.s32.totalorder %s124, %s125
    %p139 = scmp.eq.s32.totalorder %s19, 1
    %p140 = por %p138, %p139
    %p142 = scmp.ne.s32.totalorder %s125, %s141
    %p143 = scmp.eq.s32.totalorder %s19, 0
    %p144 = por %p142, %p143
    %s145 = ssub.s32 %s20, %s32
    %s146 = ssub.s32 %s21, %s28
    %s147 = sor.u32 %s145, %s146
    %p148 = scmp.eq.s32.totalorder %s147, 0
    %s150 = sadd.s32 %s149, 1
    %s151 = scalar_select %p148, %s149, %s150
    %p154 = pneg %p148
    %p155 = scmp.eq.s32.totalorder %s13, 1
    %p156 = por %p154, %p155
    %p157 = scmp.ne.s32.totalorder %s149, %s152
    %p158 = scmp.eq.s32.totalorder %s13, 0
    %p159 = por %p157, %p158
    %p160 = scmp.ne.s32.totalorder %s149, %s152
    %p161 = scmp.eq.s32.totalorder %s18, 1
    %p162 = por %p160, %p161
    %p163 = scmp.ne.s32.totalorder %s152, %s153
    %p164 = scmp.eq.s32.totalorder %s18, 0
    %p165 = por %p163, %p164
    %p166 = scmp.ne.s32.totalorder %s152, %s153
    %p167 = scmp.eq.s32.totalorder %s19, 1
    %p168 = por %p166, %p167
    %p170 = scmp.ne.s32.totalorder %s153, %s169
    %p171 = scmp.eq.s32.totalorder %s19, 0
    %p172 = por %p170, %p171
    %s174 = sadd.s32 %s173, 1
    %p177 = scmp.eq.s32.totalorder %s13, 1
    %p178 = scmp.ne.s32.totalorder %s173, %s175
    %p179 = scmp.eq.s32.totalorder %s13, 0
    %p180 = por %p178, %p179
    %p181 = scmp.ne.s32.totalorder %s173, %s175
    %p182 = scmp.eq.s32.totalorder %s18, 1
    %p183 = por %p181, %p182
    %p184 = scmp.ne.s32.totalorder %s175, %s176
    %p185 = scmp.eq.s32.totalorder %s18, 0
    %p186 = por %p184, %p185
    %p187 = scmp.ne.s32.totalorder %s175, %s176
    %p188 = scmp.eq.s32.totalorder %s19, 1
    %p189 = por %p187, %p188
    %p191 = scmp.ne.s32.totalorder %s176, %s190
    %p192 = scmp.eq.s32.totalorder %s19, 0
    %p193 = por %p191, %p192
    %s195 = sadd.s32 %s194, 1
    %p198 = scmp.eq.s32.totalorder %s13, 1
    %p199 = scmp.ne.s32.totalorder %s194, %s196
    %p200 = scmp.eq.s32.totalorder %s13, 0
    %p201 = por %p199, %p200
    %p202 = scmp.ne.s32.totalorder %s194, %s196
    %p203 = scmp.eq.s32.totalorder %s18, 1
    %p204 = por %p202, %p203
    %p205 = scmp.ne.s32.totalorder %s196, %s197
    %p206 = scmp.eq.s32.totalorder %s18, 0
    %p207 = por %p205, %p206
    %p208 = scmp.ne.s32.totalorder %s196, %s197
    %p209 = scmp.eq.s32.totalorder %s19, 1
    %p210 = por %p208, %p209
    %p212 = scmp.ne.s32.totalorder %s197, %s211
    %p213 = scmp.eq.s32.totalorder %s19, 0
    %p214 = por %p212, %p213
    %s215 = ssub.s32 %s20, %s32
    %s216 = ssub.s32 %s21, %s28
    %s217 = sor.u32 %s215, %s216
    %p218 = scmp.eq.s32.totalorder %s217, 0
    %s220 = sadd.s32 %s219, 1
    %s221 = scalar_select %p218, %s219, %s220
    %p224 = pneg %p218
    %p225 = scmp.eq.s32.totalorder %s13, 1
    %p226 = por %p224, %p225
    %p227 = scmp.ne.s32.totalorder %s219, %s222
    %p228 = scmp.eq.s32.totalorder %s13, 0
    %p229 = por %p227, %p228
    %p230 = scmp.ne.s32.totalorder %s219, %s222
    %p231 = scmp.eq.s32.totalorder %s18, 1
    %p232 = por %p230, %p231
    %p233 = scmp.ne.s32.totalorder %s222, %s223
    %p234 = scmp.eq.s32.totalorder %s18, 0
    %p235 = por %p233, %p234
    %p236 = scmp.ne.s32.totalorder %s222, %s223
    %p237 = scmp.eq.s32.totalorder %s19, 1
    %p238 = por %p236, %p237
    %p240 = scmp.ne.s32.totalorder %s223, %s239
    %p241 = scmp.eq.s32.totalorder %s19, 0
    %p242 = por %p240, %p241
    %p243 = scmp.le.s32.totalorder 1, %s13
    %p244 = scmp.lt.s32.totalorder %s13, 3
    %p245 = pnand %p243, %p244
    %p246 = pneg %p245
    // Predicated region
    $region9: #{_lambda_.25} parent=5 // pred_check
      _
    $region10: #{_lambda_.25} parent=5 // pred_check_branch
      %248 = sbr.rel (%p245) target = $region12
    $region11: #{_lambda_.25} parent=5 // pred_region
      %s249 = ssub.s32 %s13, 1
      // Predicated region
      $region13: #{_lambda_.25} parent=11 // pred_check
        %p250 = pneg %p186
      $region14: #{_lambda_.25} parent=11 // pred_check_branch
        %252 = sbr.rel (%p250) target = $region16
      $region15: #{_lambda_.25} parent=11 // pred_region
        _
      $region16: #{_lambda_.25} parent=11 // pred_fallthru
        _
      // Predicated region
      $region17: #{_lambda_.25} parent=11 // pred_check
        %p253 = pneg %p207
      $region18: #{_lambda_.25} parent=11 // pred_check_branch
        %255 = sbr.rel (%p253) target = $region20
      $region19: #{_lambda_.25} parent=11 // pred_region
        _
      $region20: #{_lambda_.25} parent=11 // pred_fallthru
        _
    $region12: #{_lambda_.25} parent=5 // pred_fallthru
      _
    %p256 = scmp.lt.s32.totalorder %s13, 2
    // Predicated region
    $region21: #{_lambda_.25} parent=5 // pred_check
      %p257 = pneg %p256
    $region22: #{_lambda_.25} parent=5 // pred_check_branch
      %259 = sbr.rel (%p257) target = $region24
    $region23: #{_lambda_.25} parent=5 // pred_region
      // Predicated region
      $region25: #{_lambda_.25} parent=23 // pred_check
        %p260 = pneg %p47
      $region26: #{_lambda_.25} parent=23 // pred_check_branch
        %262 = sbr.rel (%p260) target = $region28
      $region27: #{_lambda_.25} parent=23 // pred_region
        %s263 = smul.u32 2, %s21
        %p264 = scmp.lt.s32.totalorder %s20, 1
        %s265 = scalar_select %p264, %s20, 1
        %p266 = scmp.lt.s32.totalorder %s263, 1
        %s267 = scalar_select %p266, %s263, 1
        %s268 = smul.addr %s265, 2
        %s269 = sadd.s32 %s267, %s268
        %s270 = smul.addr %s269, 8
        %s271 = scalar_lea.vmem %s0, %s270
        %s272 = smul.u32 2, %s21
      $region28: #{_lambda_.25} parent=23 // pred_fallthru
        _
      // Predicated region
      $region29: #{_lambda_.25} parent=23 // pred_check
        %p273 = pneg %p75
      $region30: #{_lambda_.25} parent=23 // pred_check_branch
        %275 = sbr.rel (%p273) target = $region32
      $region31: #{_lambda_.25} parent=23 // pred_region
        %s276 = smul.u32 2, %s21
        %p277 = scmp.lt.s32.totalorder %s20, 1
        %s278 = scalar_select %p277, %s20, 1
        %p279 = scmp.lt.s32.totalorder %s276, 1
        %s280 = scalar_select %p279, %s276, 1
        %s281 = smul.addr %s278, 2
        %s282 = sadd.s32 %s280, %s281
        %s283 = smul.addr %s282, 8
        %s284 = scalar_lea.vmem %s1, %s283
        %s285 = smul.u32 2, %s21
      $region32: #{_lambda_.25} parent=23 // pred_fallthru
        _
      // Predicated region
      $region33: #{_lambda_.25} parent=23 // pred_check
        %p286 = pneg %p103
      $region34: #{_lambda_.25} parent=23 // pred_check_branch
        %288 = sbr.rel (%p286) target = $region36
      $region35: #{_lambda_.25} parent=23 // pred_region
        %p289 = scmp.lt.s32.totalorder %s20, 1
        %s290 = scalar_select %p289, %s20, 1
        %p291 = scmp.lt.s32.totalorder %s21, 0
        %s292 = scalar_select %p291, %s21, 0
        %s293 = smul.addr %s292, 2
        %s294 = smul.addr %s290, 2
        %s295 = sadd.s32 %s293, %s294
        %s296 = smul.addr %s295, 8
        %s297 = scalar_lea.vmem %s2, %s296
      $region36: #{_lambda_.25} parent=23 // pred_fallthru
        _
      // Predicated region
      $region37: #{_lambda_.25} parent=23 // pred_check
        %p298 = pneg %p131
      $region38: #{_lambda_.25} parent=23 // pred_check_branch
        %300 = sbr.rel (%p298) target = $region40
      $region39: #{_lambda_.25} parent=23 // pred_region
        %p301 = scmp.lt.s32.totalorder %s20, 1
        %s302 = scalar_select %p301, %s20, 1
        %p303 = scmp.lt.s32.totalorder %s21, 0
        %s304 = scalar_select %p303, %s21, 0
        %s305 = smul.addr %s304, 2
        %s306 = smul.addr %s302, 2
        %s307 = sadd.s32 %s305, %s306
        %s308 = smul.addr %s307, 8
        %s309 = scalar_lea.vmem %s3, %s308
      $region40: #{_lambda_.25} parent=23 // pred_fallthru
        _
      // Predicated region
      $region41: #{_lambda_.25} parent=23 // pred_check
        %p310 = pneg %p159
      $region42: #{_lambda_.25} parent=23 // pred_check_branch
        %312 = sbr.rel (%p310) target = $region44
      $region43: #{_lambda_.25} parent=23 // pred_region
        %s313 = smul.u32 2, %s21
        %p314 = scmp.lt.s32.totalorder %s20, 1
        %s315 = scalar_select %p314, %s20, 1
        %p316 = scmp.lt.s32.totalorder %s313, 1
        %s317 = scalar_select %p316, %s313, 1
        %s318 = smul.addr %s315, 2
        %s319 = sadd.s32 %s317, %s318
        %s320 = smul.addr %s319, 8
        %s321 = scalar_lea.vmem %s4, %s320
        %s322 = smul.u32 2, %s21
      $region44: #{_lambda_.25} parent=23 // pred_fallthru
        _
    $region24: #{_lambda_.25} parent=5 // pred_fallthru
      _
    %p323 = scmp.le.s32.totalorder 1, %s13
    %p324 = scmp.lt.s32.totalorder %s13, 3
    %p325 = pnand %p323, %p324
    %p326 = pneg %p325
    // Predicated region
    $region45: #{_lambda_.25} parent=5 // pred_check
      _
    $region46: #{_lambda_.25} parent=5 // pred_check_branch
      %328 = sbr.rel (%p325) target = $region48
    $region47: #{_lambda_.25} parent=5 // pred_region
      %s329 = ssub.s32 %s13, 1
      %s330 = smul.u32 2, %s23
      %p331 = scmp.lt.s32.totalorder %s22, 1
      %s332 = scalar_select %p331, %s22, 1
      %p333 = scmp.lt.s32.totalorder %s330, 1
      %s334 = scalar_select %p333, %s330, 1
      %s335 = smul.addr %s332, 2
      %s336 = sadd.s32 %s334, %s335
      %s337 = smul.addr %s336, 8
      %s338 = scalar_lea.vmem %s0, %s337
      %p339 = pneg %p53
      %p340 = pneg %p50
      %s341 = smul.u32 2, %s23
      %p342 = scmp.lt.s32.totalorder %s22, 1
      %s343 = scalar_select %p342, %s22, 1
      %p344 = scmp.lt.s32.totalorder %s341, 1
      %s345 = scalar_select %p344, %s341, 1
      %s346 = smul.addr %s343, 2
      %s347 = sadd.s32 %s345, %s346
      %s348 = smul.addr %s347, 8
      %s349 = scalar_lea.vmem %s1, %s348
      %p350 = pneg %p81
      %p351 = pneg %p78
      %p352 = scmp.lt.s32.totalorder %s22, 1
      %s353 = scalar_select %p352, %s22, 1
      %p354 = scmp.lt.s32.totalorder %s23, 0
      %s355 = scalar_select %p354, %s23, 0
      %s356 = smul.addr %s355, 2
      %s357 = smul.addr %s353, 2
      %s358 = sadd.s32 %s356, %s357
      %s359 = smul.addr %s358, 8
      %s360 = scalar_lea.vmem %s2, %s359
      %p361 = pneg %p109
      %p362 = pneg %p106
      %p363 = scmp.lt.s32.totalorder %s22, 1
      %s364 = scalar_select %p363, %s22, 1
      %p365 = scmp.lt.s32.totalorder %s23, 0
      %s366 = scalar_select %p365, %s23, 0
      %s367 = smul.addr %s366, 2
      %s368 = smul.addr %s364, 2
      %s369 = sadd.s32 %s367, %s368
      %s370 = smul.addr %s369, 8
      %s371 = scalar_lea.vmem %s3, %s370
      %p372 = pneg %p137
      %p373 = pneg %p134
      %s374 = smul.u32 2, %s23
      %p375 = scmp.lt.s32.totalorder %s22, 1
      %s376 = scalar_select %p375, %s22, 1
      %p377 = scmp.lt.s32.totalorder %s374, 1
      %s378 = scalar_select %p377, %s374, 1
      %s379 = smul.addr %s376, 2
      %s380 = sadd.s32 %s378, %s379
      %s381 = smul.addr %s380, 8
      %s382 = scalar_lea.vmem %s4, %s381
      %p383 = pneg %p165
      %p384 = pneg %p162
      %p385 = pneg %p186
      %p386 = pneg %p183
      %p387 = pneg %p207
      %p388 = pneg %p204
      %p389 = pneg %p235
      %p390 = pneg %p232
      %s391 = smul.u32 2, %s23
      %p392 = scmp.lt.s32.totalorder %s22, 1
      %s393 = scalar_select %p392, %s22, 1
      %p394 = scmp.lt.s32.totalorder %s391, 1
      %s395 = scalar_select %p394, %s391, 1
      %s396 = smul.addr %s393, 2
      %s397 = sadd.s32 %s395, %s396
      %s398 = smul.addr %s397, 8
      %s399 = scalar_lea.vmem %s7, %s398
      %s400 = smul.u32 2, %s23
      %p401 = scmp.lt.s32.totalorder %s22, 1
      %s402 = scalar_select %p401, %s22, 1
      %p403 = scmp.lt.s32.totalorder %s400, 1
      %s404 = scalar_select %p403, %s400, 1
      %s405 = smul.addr %s402, 2
      %s406 = sadd.s32 %s404, %s405
      %s407 = smul.addr %s406, 8
      %s408 = scalar_lea.vmem %s0, %s407
      %s409 = smul.u32 2, %s23
      %s410 = smul.u32 2, %s23
      %p411 = scmp.lt.s32.totalorder %s22, 1
      %s412 = scalar_select %p411, %s22, 1
      %p413 = scmp.lt.s32.totalorder %s410, 1
      %s414 = scalar_select %p413, %s410, 1
      %s415 = smul.addr %s412, 2
      %s416 = sadd.s32 %s414, %s415
      %s417 = smul.addr %s416, 8
      %s418 = scalar_lea.vmem %s1, %s417
      %s419 = smul.u32 2, %s23
      %p420 = scmp.lt.s32.totalorder %s22, 1
      %s421 = scalar_select %p420, %s22, 1
      %p422 = scmp.lt.s32.totalorder %s23, 0
      %s423 = scalar_select %p422, %s23, 0
      %s424 = smul.addr %s423, 2
      %s425 = smul.addr %s421, 2
      %s426 = sadd.s32 %s424, %s425
      %s427 = smul.addr %s426, 8
      %s428 = scalar_lea.vmem %s2, %s427
      %p429 = scmp.lt.s32.totalorder %s22, 1
      %s430 = scalar_select %p429, %s22, 1
      %p431 = scmp.lt.s32.totalorder %s23, 0
      %s432 = scalar_select %p431, %s23, 0
      %s433 = smul.addr %s432, 2
      %s434 = smul.addr %s430, 2
      %s435 = sadd.s32 %s433, %s434
      %s436 = smul.addr %s435, 8
      %s437 = scalar_lea.vmem %s3, %s436
      %s438 = smul.u32 2, %s23
      %p439 = scmp.lt.s32.totalorder %s22, 1
      %s440 = scalar_select %p439, %s22, 1
      %p441 = scmp.lt.s32.totalorder %s438, 1
      %s442 = scalar_select %p441, %s438, 1
      %s443 = smul.addr %s440, 2
      %s444 = sadd.s32 %s442, %s443
      %s445 = smul.addr %s444, 8
      %s446 = scalar_lea.vmem %s4, %s445
      %s447 = smul.u32 2, %s23
      %s448 = smul.u32 2, %s23
      %p449 = scmp.lt.s32.totalorder %s22, 1
      %s450 = scalar_select %p449, %s22, 1
      %p451 = scmp.lt.s32.totalorder %s448, 1
      %s452 = scalar_select %p451, %s448, 1
      %s453 = smul.addr %s450, 2
      %s454 = sadd.s32 %s452, %s453
      %s455 = smul.addr %s454, 8
      %s456 = scalar_lea.vmem %s7, %s455
      %s457 = smul.u32 2, %s23
      %p458 = scmp.eq.s32.totalorder %s23, 0
      // Predicated region
      $region49: #{_lambda_.25} parent=47 // pred_check
        %p459 = pneg %p458
      $region50: #{_lambda_.25} parent=47 // pred_check_branch
        %461 = sbr.rel (%p459) target = $region52
      $region51: #{_lambda_.25} parent=47 // pred_region
        %vm462 = vcmask 523264
        %463 = vst.msk [vmem:[#allocation2] sm:$0xff] %vm462, 0.0
        %464 = vst.msk [vmem:[#allocation2 + $0x8] sm:$0xff] %vm462, 0.0
      $region52: #{_lambda_.25} parent=47 // pred_fallthru
        _
      %v465 = vld [vmem:[%s408] sm:$0xff]
      %v466 = vld [vmem:[%s408 + $0x8] sm:$0xff]
      %v467 = vld [vmem:[%s418] sm:$0xff]
      %v468 = vld [vmem:[%s418 + $0x8] sm:$0xff]
      %v469 = vld [vmem:[%s446] sm:$0xff]
      %v470 = vld [vmem:[%s446 + $0x8] sm:$0xff]
      %v471 = vld [vmem:[%s428] sm:$0xff]
      %v472 = vld [vmem:[%s428 + $0x8] sm:$0xff]
      %v473 = vld [vmem:[%s437] sm:$0xff]
      %v474 = vld [vmem:[%s437 + $0x8] sm:$0xff]
      %v475 = vld [vmem:[%s5] sm:$0xff]
      %v476 = vld [vmem:[%s5 + $0x8] sm:$0xff]
      %v477 = vld [vmem:[%s6] sm:$0x1]
      %v478 = vmax.f32 %v467, 0.0
      %v479 = vmax.f32 %v468, 0.0
      %v480 = vand.u32 2147483647, %v467
      %v481 = vand.u32 2147483647, %v468
      %v482 = vsub.f32 0.0, %v480
      %v483 = vsub.f32 0.0, %v481
      %v484 = vmul.f32 %v482, 1.442695
      %v485 = vpow.pop %v484
      %v486 = vmul.f32 %v483, 1.442695
      %v487 = vpow.pop %v486
      %v488 = vadd.f32 %v485, 1.0
      %v489 = vadd.f32 %v487, 1.0
      %v490 = vlog2.pop %v488
      %v491 = vmul.f32 %v490, 0.6931472
      %v492 = vlog2.pop %v489
      %v493 = vmul.f32 %v492, 0.6931472
      %v494 = vadd.f32 %v478, %v491
      %v495 = vadd.f32 %v479, %v493
      %v496 = vmul.f32 %v494, %v465
      %v497 = vmul.f32 %v495, %v466
      %v498 = vsub.f32 0.0, %v469
      %v499 = vsub.f32 0.0, %v470
      %v500 = vmul.f32 %v498, 1.442695
      %v501 = vpow.pop %v500
      %v502 = vmul.f32 %v499, 1.442695
      %v503 = vpow.pop %v502
      %v504 = vadd.f32 %v501, 1.0
      %v505 = vadd.f32 %v503, 1.0
      %v506 = vrcp.pop %v504
      %v507 = vrcp.pop %v505
      %v508 = vmul.f32 %v469, %v506
      %v509 = vmul.f32 %v470, %v507
      %v510 = vlaneseq
      %v511 = vshrl.u32 %v510, 7
      %v512 = vadd.s32 %v511, 8
      %v513 = vadd.s32 %v511, 16
      %v514 = vadd.s32 %v511, 24
      %v515 = vadd.s32 %v511, 32
      %v516 = vadd.s32 %v511, 40
      %v517 = vadd.s32 %v511, 48
      %v518 = vadd.s32 %v511, 56
      %v519 = vadd.s32 %v511, 64
      %v520 = vadd.s32 %v511, 72
      %v521 = vadd.s32 %v511, 80
      %v522 = vadd.s32 %v511, 88
      %v523 = vadd.s32 %v511, 96
      %v524 = vadd.s32 %v511, 104
      %v525 = vadd.s32 %v511, 112
      %v526 = vadd.s32 %v511, 120
      %v527 = vadd.s32 %v511, 128
      %v528 = vadd.s32 %v511, 136
      %v529 = vadd.s32 %v511, 144
      %v530 = vadd.s32 %v511, 152
      %v531 = vadd.s32 %v511, 160
      %v532 = vadd.s32 %v511, 168
      %v533 = vadd.s32 %v511, 176
      %v534 = vadd.s32 %v511, 184
      %v535 = vadd.s32 %v511, 192
      %v536 = vadd.s32 %v511, 200
      %v537 = vadd.s32 %v511, 208
      %v538 = vadd.s32 %v511, 216
      %v539 = vadd.s32 %v511, 224
      %v540 = vadd.s32 %v511, 232
      %v541 = vadd.s32 %v511, 240
      %v542 = vadd.s32 %v511, 248
      %v543 = vlaneseq
      %v544 = vand.u32 %v543, 127
      %v545 = vmul.u32 %v544, 16
      %vm546 = vcmp.ge.s32.totalorder %v511, %v545
      %vm547 = vcmp.ge.s32.totalorder %v512, %v545
      %vm548 = vcmp.ge.s32.totalorder %v513, %v545
      %vm549 = vcmp.ge.s32.totalorder %v514, %v545
      %vm550 = vcmp.ge.s32.totalorder %v515, %v545
      %vm551 = vcmp.ge.s32.totalorder %v516, %v545
      %vm552 = vcmp.ge.s32.totalorder %v517, %v545
      %vm553 = vcmp.ge.s32.totalorder %v518, %v545
      %vm554 = vcmp.ge.s32.totalorder %v519, %v545
      %vm555 = vcmp.ge.s32.totalorder %v520, %v545
      %vm556 = vcmp.ge.s32.totalorder %v521, %v545
      %vm557 = vcmp.ge.s32.totalorder %v522, %v545
      %vm558 = vcmp.ge.s32.totalorder %v523, %v545
      %vm559 = vcmp.ge.s32.totalorder %v524, %v545
      %vm560 = vcmp.ge.s32.totalorder %v525, %v545
      %vm561 = vcmp.ge.s32.totalorder %v526, %v545
      %vm562 = vcmp.ge.s32.totalorder %v527, %v545
      %vm563 = vcmp.ge.s32.totalorder %v528, %v545
      %vm564 = vcmp.ge.s32.totalorder %v529, %v545
      %vm565 = vcmp.ge.s32.totalorder %v530, %v545
      %vm566 = vcmp.ge.s32.totalorder %v531, %v545
      %vm567 = vcmp.ge.s32.totalorder %v532, %v545
      %vm568 = vcmp.ge.s32.totalorder %v533, %v545
      %vm569 = vcmp.ge.s32.totalorder %v534, %v545
      %vm570 = vcmp.ge.s32.totalorder %v535, %v545
      %vm571 = vcmp.ge.s32.totalorder %v536, %v545
      %vm572 = vcmp.ge.s32.totalorder %v537, %v545
      %vm573 = vcmp.ge.s32.totalorder %v538, %v545
      %vm574 = vcmp.ge.s32.totalorder %v539, %v545
      %vm575 = vcmp.ge.s32.totalorder %v540, %v545
      %vm576 = vcmp.ge.s32.totalorder %v541, %v545
      %vm577 = vcmp.ge.s32.totalorder %v542, %v545
      %v578 = vadd.s32 %v545, 16
      %vm579 = vcmp.lt.s32.totalorder %v511, %v578
      %vm580 = vcmp.lt.s32.totalorder %v512, %v578
      %vm581 = vcmp.lt.s32.totalorder %v513, %v578
      %vm582 = vcmp.lt.s32.totalorder %v514, %v578
      %vm583 = vcmp.lt.s32.totalorder %v515, %v578
      %vm584 = vcmp.lt.s32.totalorder %v516, %v578
      %vm585 = vcmp.lt.s32.totalorder %v517, %v578
      %vm586 = vcmp.lt.s32.totalorder %v518, %v578
      %vm587 = vcmp.lt.s32.totalorder %v519, %v578
      %vm588 = vcmp.lt.s32.totalorder %v520, %v578
      %vm589 = vcmp.lt.s32.totalorder %v521, %v578
      %vm590 = vcmp.lt.s32.totalorder %v522, %v578
      %vm591 = vcmp.lt.s32.totalorder %v523, %v578
      %vm592 = vcmp.lt.s32.totalorder %v524, %v578
      %vm593 = vcmp.lt.s32.totalorder %v525, %v578
      %vm594 = vcmp.lt.s32.totalorder %v526, %v578
      %vm595 = vcmp.lt.s32.totalorder %v527, %v578
      %vm596 = vcmp.lt.s32.totalorder %v528, %v578
      %vm597 = vcmp.lt.s32.totalorder %v529, %v578
      %vm598 = vcmp.lt.s32.totalorder %v530, %v578
      %vm599 = vcmp.lt.s32.totalorder %v531, %v578
      %vm600 = vcmp.lt.s32.totalorder %v532, %v578
      %vm601 = vcmp.lt.s32.totalorder %v533, %v578
      %vm602 = vcmp.lt.s32.totalorder %v534, %v578
      %vm603 = vcmp.lt.s32.totalorder %v535, %v578
      %vm604 = vcmp.lt.s32.totalorder %v536, %v578
      %vm605 = vcmp.lt.s32.totalorder %v537, %v578
      %vm606 = vcmp.lt.s32.totalorder %v538, %v578
      %vm607 = vcmp.lt.s32.totalorder %v539, %v578
      %vm608 = vcmp.lt.s32.totalorder %v540, %v578
      %vm609 = vcmp.lt.s32.totalorder %v541, %v578
      %vm610 = vcmp.lt.s32.totalorder %v542, %v578
      %vm611 = vmand %vm546, %vm579
      %vm612 = vmand %vm547, %vm580
      %vm613 = vmand %vm548, %vm581
      %vm614 = vmand %vm549, %vm582
      %vm615 = vmand %vm550, %vm583
      %vm616 = vmand %vm551, %vm584
      %vm617 = vmand %vm552, %vm585
      %vm618 = vmand %vm553, %vm586
      %vm619 = vmand %vm554, %vm587
      %vm620 = vmand %vm555, %vm588
      %vm621 = vmand %vm556, %vm589
      %vm622 = vmand %vm557, %vm590
      %vm623 = vmand %vm558, %vm591
      %vm624 = vmand %vm559, %vm592
      %vm625 = vmand %vm560, %vm593
      %vm626 = vmand %vm561, %vm594
      %vm627 = vmand %vm562, %vm595
      %vm628 = vmand %vm563, %vm596
      %vm629 = vmand %vm564, %vm597
      %vm630 = vmand %vm565, %vm598
      %vm631 = vmand %vm566, %vm599
      %vm632 = vmand %vm567, %vm600
      %vm633 = vmand %vm568, %vm601
      %vm634 = vmand %vm569, %vm602
      %vm635 = vmand %vm570, %vm603
      %vm636 = vmand %vm571, %vm604
      %vm637 = vmand %vm572, %vm605
      %vm638 = vmand %vm573, %vm606
      %vm639 = vmand %vm574, %vm607
      %vm640 = vmand %vm575, %vm608
      %vm641 = vmand %vm576, %vm609
      %vm642 = vmand %vm577, %vm610
      %v643 = vsel %vm611, 1, 0
      %v644 = vsel %vm612, 1, 0
      %v645 = vsel %vm613, 1, 0
      %v646 = vsel %vm614, 1, 0
      %v647 = vsel %vm615, 1, 0
      %v648 = vsel %vm616, 1, 0
      %v649 = vsel %vm617, 1, 0
      %v650 = vsel %vm618, 1, 0
      %v651 = vsel %vm619, 1, 0
      %v652 = vsel %vm620, 1, 0
      %v653 = vsel %vm621, 1, 0
      %v654 = vsel %vm622, 1, 0
      %v655 = vsel %vm623, 1, 0
      %v656 = vsel %vm624, 1, 0
      %v657 = vsel %vm625, 1, 0
      %v658 = vsel %vm626, 1, 0
      %v659 = vsel %vm627, 1, 0
      %v660 = vsel %vm628, 1, 0
      %v661 = vsel %vm629, 1, 0
      %v662 = vsel %vm630, 1, 0
      %v663 = vsel %vm631, 1, 0
      %v664 = vsel %vm632, 1, 0
      %v665 = vsel %vm633, 1, 0
      %v666 = vsel %vm634, 1, 0
      %v667 = vsel %vm635, 1, 0
      %v668 = vsel %vm636, 1, 0
      %v669 = vsel %vm637, 1, 0
      %v670 = vsel %vm638, 1, 0
      %v671 = vsel %vm639, 1, 0
      %v672 = vsel %vm640, 1, 0
      %v673 = vsel %vm641, 1, 0
      %v674 = vsel %vm642, 1, 0
      %v675 = vcvt.s32.f32 %v643
      %v676 = vcvt.s32.f32 %v644
      %v677 = vcvt.s32.f32 %v645
      %v678 = vcvt.s32.f32 %v646
      %v679 = vcvt.s32.f32 %v647
      %v680 = vcvt.s32.f32 %v648
      %v681 = vcvt.s32.f32 %v649
      %v682 = vcvt.s32.f32 %v650
      %v683 = vcvt.s32.f32 %v651
      %v684 = vcvt.s32.f32 %v652
      %v685 = vcvt.s32.f32 %v653
      %v686 = vcvt.s32.f32 %v654
      %v687 = vcvt.s32.f32 %v655
      %v688 = vcvt.s32.f32 %v656
      %v689 = vcvt.s32.f32 %v657
      %v690 = vcvt.s32.f32 %v658
      %v691 = vcvt.s32.f32 %v659
      %v692 = vcvt.s32.f32 %v660
      %v693 = vcvt.s32.f32 %v661
      %v694 = vcvt.s32.f32 %v662
      %v695 = vcvt.s32.f32 %v663
      %v696 = vcvt.s32.f32 %v664
      %v697 = vcvt.s32.f32 %v665
      %v698 = vcvt.s32.f32 %v666
      %v699 = vcvt.s32.f32 %v667
      %v700 = vcvt.s32.f32 %v668
      %v701 = vcvt.s32.f32 %v669
      %v702 = vcvt.s32.f32 %v670
      %v703 = vcvt.s32.f32 %v671
      %v704 = vcvt.s32.f32 %v672
      %v705 = vcvt.s32.f32 %v673
      %v706 = vcvt.s32.f32 %v674
      %vm707 = vcmask 130048
      %v709 = vsel %vm707, %v675, 0
      %v712 = vsel %vm707, %v676, 0
      %v715 = vsel %vm707, %v677, 0
      %v718 = vsel %vm707, %v678, 0
      %v721 = vsel %vm707, %v679, 0
      %v724 = vsel %vm707, %v680, 0
      %v727 = vsel %vm707, %v681, 0
      %v730 = vsel %vm707, %v682, 0
      %v733 = vsel %vm707, %v683, 0
      %v736 = vsel %vm707, %v684, 0
      %v739 = vsel %vm707, %v685, 0
      %v742 = vsel %vm707, %v686, 0
      %v745 = vsel %vm707, %v687, 0
      %v748 = vsel %vm707, %v688, 0
      %v751 = vsel %vm707, %v689, 0
      %v754 = vsel %vm707, %v690, 0
      %v757 = vsel %vm707, %v691, 0
      %v760 = vsel %vm707, %v692, 0
      %v763 = vsel %vm707, %v693, 0
      %v766 = vsel %vm707, %v694, 0
      %v769 = vsel %vm707, %v695, 0
      %v772 = vsel %vm707, %v696, 0
      %v775 = vsel %vm707, %v697, 0
      %v778 = vsel %vm707, %v698, 0
      %v781 = vsel %vm707, %v699, 0
      %v784 = vsel %vm707, %v700, 0
      %v787 = vsel %vm707, %v701, 0
      %v790 = vsel %vm707, %v702, 0
      %v793 = vsel %vm707, %v703, 0
      %v796 = vsel %vm707, %v704, 0
      %v799 = vsel %vm707, %v705, 0
      %v802 = vsel %vm707, %v706, 0
      %804 = vmatprep.subr.mxu0 0.0
      %805 = vmatpush1.msra.mxu0 %v494
      %806 = vmatprep.subr.mxu0 0.0
      %807 = vmatpush1.msra.mxu0 %v495
      %808 = vmatprep.subr.mxu0 0.0
      %809 = vmatpush1.msra.mxu0 0.0
      %810 = vmatprep.subr.mxu0 0.0
      %811 = vmatpush1.msra.mxu0 0.0
      %812 = vmatprep.subr.mxu0 0.0
      %813 = vmatpush1.msra.mxu0 0.0
      %814 = vmatprep.subr.mxu0 0.0
      %815 = vmatpush1.msra.mxu0 0.0
      %816 = vmatprep.subr.mxu0 0.0
      %817 = vmatpush1.msra.mxu0 0.0
      %818 = vmatprep.subr.mxu0 0.0
      %819 = vmatpush1.msra.mxu0 0.0
      %820 = vmatprep.subr.mxu0 0.0
      %821 = vmatpush1.msra.mxu0 0.0
      %822 = vmatprep.subr.mxu0 0.0
      %823 = vmatpush1.msra.mxu0 0.0
      %824 = vmatprep.subr.mxu0 0.0
      %825 = vmatpush1.msra.mxu0 0.0
      %826 = vmatprep.subr.mxu0 0.0
      %827 = vmatpush1.msra.mxu0 0.0
      %828 = vmatprep.subr.mxu0 0.0
      %829 = vmatpush1.msra.mxu0 0.0
      %830 = vmatprep.subr.mxu0 0.0
      %831 = vmatpush1.msra.mxu0 0.0
      %832 = vmatprep.subr.mxu0 0.0
      %833 = vmatpush1.msra.mxu0 0.0
      %834 = vmatprep.subr.mxu0 0.0
      %835 = vmatpush1.msra.mxu0 0.0
      %836 = vmatprep.subr.mxu0 0.0
      %837 = vmatpush1.msra.mxu0 0.0
      %838 = vmatprep.subr.mxu0 0.0
      %839 = vmatpush1.msra.mxu0 0.0
      %840 = vmatprep.subr.mxu0 0.0
      %841 = vmatpush1.msra.mxu0 0.0
      %842 = vmatprep.subr.mxu0 0.0
      %843 = vmatpush1.msra.mxu0 0.0
      %844 = vmatprep.subr.mxu0 0.0
      %845 = vmatpush1.msra.mxu0 0.0
      %846 = vmatprep.subr.mxu0 0.0
      %847 = vmatpush1.msra.mxu0 0.0
      %848 = vmatprep.subr.mxu0 0.0
      %849 = vmatpush1.msra.mxu0 0.0
      %850 = vmatprep.subr.mxu0 0.0
      %851 = vmatpush1.msra.mxu0 0.0
      %852 = vmatprep.subr.mxu0 0.0
      %853 = vmatpush1.msra.mxu0 0.0
      %854 = vmatprep.subr.mxu0 0.0
      %855 = vmatpush1.msra.mxu0 0.0
      %856 = vmatprep.subr.mxu0 0.0
      %857 = vmatpush1.msra.mxu0 0.0
      %858 = vmatprep.subr.mxu0 0.0
      %859 = vmatpush1.msra.mxu0 0.0
      %860 = vmatprep.subr.mxu0 0.0
      %861 = vmatpush1.msra.mxu0 0.0
      %862 = vmatprep.subr.mxu0 0.0
      %863 = vmatpush1.msra.mxu0 0.0
      %864 = vmatprep.subr.mxu0 0.0
      %865 = vmatpush1.msra.mxu0 0.0
      %866 = vmatprep.subr.mxu0 0.0
      %867 = vmatpush1.msra.mxu0 0.0
      %868 = vmatprep.mubr.f32.mxu0 0.0
      %869 = vmatmul.mubr.f32.gmra.mrb[0].mxu0 %v709
      %v870 = vpop.f32.mrb[0].mxu0
      %v871 = vadd.f32 0.0, %v870
      %v872 = vpop.f32.mrb[0].mxu0
      %873 = vmatprep.mubr.f32.mxu0 0.0
      %874 = vmatmul.mubr.f32.gmra.mrb[0].mxu0 %v712
      %v875 = vpop.f32.mrb[0].mxu0
      %v876 = vadd.f32 0.0, %v875
      %v877 = vpop.f32.mrb[0].mxu0
      %878 = vmatprep.mubr.f32.mxu0 0.0
      %879 = vmatmul.mubr.f32.gmra.mrb[0].mxu0 %v715
      %v880 = vpop.f32.mrb[0].mxu0
      %v881 = vadd.f32 0.0, %v880
      %v882 = vpop.f32.mrb[0].mxu0
      %883 = vmatprep.mubr.f32.mxu0 0.0
      %884 = vmatmul.mubr.f32.gmra.mrb[0].mxu0 %v718
      %v885 = vpop.f32.mrb[0].mxu0
      %v886 = vadd.f32 0.0, %v885
      %v887 = vpop.f32.mrb[0].mxu0
      %888 = vmatprep.mubr.f32.mxu0 0.0
      %889 = vmatmul.mubr.f32.gmra.mrb[0].mxu0 %v721
      %v890 = vpop.f32.mrb[0].mxu0
      %v891 = vadd.f32 0.0, %v890
      %v892 = vpop.f32.mrb[0].mxu0
      %893 = vmatprep.mubr.f32.mxu0 0.0
      %894 = vmatmul.mubr.f32.gmra.mrb[0].mxu0 %v724
      %v895 = vpop.f32.mrb[0].mxu0
      %v896 = vadd.f32 0.0, %v895
      %v897 = vpop.f32.mrb[0].mxu0
      %898 = vmatprep.mubr.f32.mxu0 0.0
      %899 = vmatmul.mubr.f32.gmra.mrb[0].mxu0 %v727
      %v900 = vpop.f32.mrb[0].mxu0
      %v901 = vadd.f32 0.0, %v900
      %v902 = vpop.f32.mrb[0].mxu0
      %903 = vmatprep.mubr.f32.mxu0 0.0
      %904 = vmatmul.mubr.f32.gmra.mrb[0].mxu0 %v730
      %v905 = vpop.f32.mrb[0].mxu0
      %v906 = vadd.f32 0.0, %v905
      %v907 = vpop.f32.mrb[0].mxu0
      %908 = vmatprep.mubr.f32.mxu0 0.0
      %909 = vmatmul.mubr.f32.gmra.mrb[0].mxu0 %v733
      %v910 = vpop.f32.mrb[0].mxu0
      %v911 = vadd.f32 0.0, %v910
      %v912 = vpop.f32.mrb[0].mxu0
      %913 = vmatprep.mubr.f32.mxu0 0.0
      %914 = vmatmul.mubr.f32.gmra.mrb[0].mxu0 %v736
      %v915 = vpop.f32.mrb[0].mxu0
      %v916 = vadd.f32 0.0, %v915
      %v917 = vpop.f32.mrb[0].mxu0
      %918 = vmatprep.mubr.f32.mxu0 0.0
      %919 = vmatmul.mubr.f32.gmra.mrb[0].mxu0 %v739
      %v920 = vpop.f32.mrb[0].mxu0
      %v921 = vadd.f32 0.0, %v920
      %v922 = vpop.f32.mrb[0].mxu0
      %923 = vmatprep.mubr.f32.mxu0 0.0
      %924 = vmatmul.mubr.f32.gmra.mrb[0].mxu0 %v742
      %v925 = vpop.f32.mrb[0].mxu0
      %v926 = vadd.f32 0.0, %v925
      %v927 = vpop.f32.mrb[0].mxu0
      %928 = vmatprep.mubr.f32.mxu0 0.0
      %929 = vmatmul.mubr.f32.gmra.mrb[0].mxu0 %v745
      %v930 = vpop.f32.mrb[0].mxu0
      %v931 = vadd.f32 0.0, %v930
      %v932 = vpop.f32.mrb[0].mxu0
      %933 = vmatprep.mubr.f32.mxu0 0.0
      %934 = vmatmul.mubr.f32.gmra.mrb[0].mxu0 %v748
      %v935 = vpop.f32.mrb[0].mxu0
      %v936 = vadd.f32 0.0, %v935
      %v937 = vpop.f32.mrb[0].mxu0
      %938 = vmatprep.mubr.f32.mxu0 0.0
      %939 = vmatmul.mubr.f32.gmra.mrb[0].mxu0 %v751
      %v940 = vpop.f32.mrb[0].mxu0
      %v941 = vadd.f32 0.0, %v940
      %v942 = vpop.f32.mrb[0].mxu0
      %943 = vmatprep.mubr.f32.mxu0 0.0
      %944 = vmatmul.mubr.f32.gmra.mrb[0].mxu0 %v754
      %v945 = vpop.f32.mrb[0].mxu0
      %v946 = vadd.f32 0.0, %v945
      %v947 = vpop.f32.mrb[0].mxu0
      %948 = vmatprep.mubr.f32.mxu0 0.0
      %949 = vmatmul.mubr.f32.gmra.mrb[0].mxu0 %v757
      %v950 = vpop.f32.mrb[0].mxu0
      %v951 = vadd.f32 0.0, %v950
      %v952 = vpop.f32.mrb[0].mxu0
      %953 = vmatprep.mubr.f32.mxu0 0.0
      %954 = vmatmul.mubr.f32.gmra.mrb[0].mxu0 %v760
      %v955 = vpop.f32.mrb[0].mxu0
      %v956 = vadd.f32 0.0, %v955
      %v957 = vpop.f32.mrb[0].mxu0
      %958 = vmatprep.mubr.f32.mxu0 0.0
      %959 = vmatmul.mubr.f32.gmra.mrb[0].mxu0 %v763
      %v960 = vpop.f32.mrb[0].mxu0
      %v961 = vadd.f32 0.0, %v960
      %v962 = vpop.f32.mrb[0].mxu0
      %963 = vmatprep.mubr.f32.mxu0 0.0
      %964 = vmatmul.mubr.f32.gmra.mrb[0].mxu0 %v766
      %v965 = vpop.f32.mrb[0].mxu0
      %v966 = vadd.f32 0.0, %v965
      %v967 = vpop.f32.mrb[0].mxu0
      %968 = vmatprep.mubr.f32.mxu0 0.0
      %969 = vmatmul.mubr.f32.gmra.mrb[0].mxu0 %v769
      %v970 = vpop.f32.mrb[0].mxu0
      %v971 = vadd.f32 0.0, %v970
      %v972 = vpop.f32.mrb[0].mxu0
      %973 = vmatprep.mubr.f32.mxu0 0.0
      %974 = vmatmul.mubr.f32.gmra.mrb[0].mxu0 %v772
      %v975 = vpop.f32.mrb[0].mxu0
      %v976 = vadd.f32 0.0, %v975
      %v977 = vpop.f32.mrb[0].mxu0
      %978 = vmatprep.mubr.f32.mxu0 0.0
      %979 = vmatmul.mubr.f32.gmra.mrb[0].mxu0 %v775
      %v980 = vpop.f32.mrb[0].mxu0
      %v981 = vadd.f32 0.0, %v980
      %v982 = vpop.f32.mrb[0].mxu0
      %983 = vmatprep.mubr.f32.mxu0 0.0
      %984 = vmatmul.mubr.f32.gmra.mrb[0].mxu0 %v778
      %v985 = vpop.f32.mrb[0].mxu0
      %v986 = vadd.f32 0.0, %v985
      %v987 = vpop.f32.mrb[0].mxu0
      %988 = vmatprep.mubr.f32.mxu0 0.0
      %989 = vmatmul.mubr.f32.gmra.mrb[0].mxu0 %v781
      %v990 = vpop.f32.mrb[0].mxu0
      %v991 = vadd.f32 0.0, %v990
      %v992 = vpop.f32.mrb[0].mxu0
      %993 = vmatprep.mubr.f32.mxu0 0.0
      %994 = vmatmul.mubr.f32.gmra.mrb[0].mxu0 %v784
      %v995 = vpop.f32.mrb[0].mxu0
      %v996 = vadd.f32 0.0, %v995
      %v997 = vpop.f32.mrb[0].mxu0
      %998 = vmatprep.mubr.f32.mxu0 0.0
      %999 = vmatmul.mubr.f32.gmra.mrb[0].mxu0 %v787
      %v1000 = vpop.f32.mrb[0].mxu0
      %v1001 = vadd.f32 0.0, %v1000
      %v1002 = vpop.f32.mrb[0].mxu0
      %1003 = vmatprep.mubr.f32.mxu0 0.0
      %1004 = vmatmul.mubr.f32.gmra.mrb[0].mxu0 %v790
      %v1005 = vpop.f32.mrb[0].mxu0
      %v1006 = vadd.f32 0.0, %v1005
      %v1007 = vpop.f32.mrb[0].mxu0
      %1008 = vmatprep.mubr.f32.mxu0 0.0
      %1009 = vmatmul.mubr.f32.gmra.mrb[0].mxu0 %v793
      %v1010 = vpop.f32.mrb[0].mxu0
      %v1011 = vadd.f32 0.0, %v1010
      %v1012 = vpop.f32.mrb[0].mxu0
      %1013 = vmatprep.mubr.f32.mxu0 0.0
      %1014 = vmatmul.mubr.f32.gmra.mrb[0].mxu0 %v796
      %v1015 = vpop.f32.mrb[0].mxu0
      %v1016 = vadd.f32 0.0, %v1015
      %v1017 = vpop.f32.mrb[0].mxu0
      %1018 = vmatprep.mubr.f32.mxu0 0.0
      %1019 = vmatmul.mubr.f32.gmra.mrb[0].mxu0 %v799
      %v1020 = vpop.f32.mrb[0].mxu0
      %v1021 = vadd.f32 0.0, %v1020
      %v1022 = vpop.f32.mrb[0].mxu0
      %1023 = vmatprep.mubr.f32.mxu0 0.0
      %1024 = vmatmul.mubr.f32.gmra.mrb[0].mxu0 %v802
      %v1025 = vpop.f32.mrb[0].mxu0
      %v1026 = vadd.f32 0.0, %v1025
      %v1027 = vpop.f32.mrb[0].mxu0
      %1028 = vdwg.mxu0
      %v1029 = vmul.f32 %v871, %v475
      %v1030 = vmul.f32 %v876, %v476
      %v1031 = vmul.f32 %v881, %v475
      %v1032 = vmul.f32 %v886, %v476
      %v1033 = vmul.f32 %v891, %v475
      %v1034 = vmul.f32 %v896, %v476
      %v1035 = vmul.f32 %v901, %v475
      %v1036 = vmul.f32 %v906, %v476
      %v1037 = vmul.f32 %v911, %v475
      %v1038 = vmul.f32 %v916, %v476
      %v1039 = vmul.f32 %v921, %v475
      %v1040 = vmul.f32 %v926, %v476
      %v1041 = vmul.f32 %v931, %v475
      %v1042 = vmul.f32 %v936, %v476
      %v1043 = vmul.f32 %v941, %v475
      %v1044 = vmul.f32 %v946, %v476
      %v1045 = vmul.f32 %v951, %v475
      %v1046 = vmul.f32 %v956, %v476
      %v1047 = vmul.f32 %v961, %v475
      %v1048 = vmul.f32 %v966, %v476
      %v1049 = vmul.f32 %v971, %v475
      %v1050 = vmul.f32 %v976, %v476
      %v1051 = vmul.f32 %v981, %v475
      %v1052 = vmul.f32 %v986, %v476
      %v1053 = vmul.f32 %v991, %v475
      %v1054 = vmul.f32 %v996, %v476
      %v1055 = vmul.f32 %v1001, %v475
      %v1056 = vmul.f32 %v1006, %v476
      %v1057 = vmul.f32 %v1011, %v475
      %v1058 = vmul.f32 %v1016, %v476
      %v1059 = vmul.f32 %v1021, %v475
      %v1060 = vmul.f32 %v1026, %v476
      %v1061 = vmul.f32 %v1029, 1.442695
      %v1062 = vpow.pop %v1061
      %v1063 = vmul.f32 %v1030, 1.442695
      %v1064 = vpow.pop %v1063
      %v1065 = vmul.f32 %v1031, 1.442695
      %v1066 = vpow.pop %v1065
      %v1067 = vmul.f32 %v1032, 1.442695
      %v1068 = vpow.pop %v1067
      %v1069 = vmul.f32 %v1033, 1.442695
      %v1070 = vpow.pop %v1069
      %v1071 = vmul.f32 %v1034, 1.442695
      %v1072 = vpow.pop %v1071
      %v1073 = vmul.f32 %v1035, 1.442695
      %v1074 = vpow.pop %v1073
      %v1075 = vmul.f32 %v1036, 1.442695
      %v1076 = vpow.pop %v1075
      %v1077 = vmul.f32 %v1037, 1.442695
      %v1078 = vpow.pop %v1077
      %v1079 = vmul.f32 %v1038, 1.442695
      %v1080 = vpow.pop %v1079
      %v1081 = vmul.f32 %v1039, 1.442695
      %v1082 = vpow.pop %v1081
      %v1083 = vmul.f32 %v1040, 1.442695
      %v1084 = vpow.pop %v1083
      %v1085 = vmul.f32 %v1041, 1.442695
      %v1086 = vpow.pop %v1085
      %v1087 = vmul.f32 %v1042, 1.442695
      %v1088 = vpow.pop %v1087
      %v1089 = vmul.f32 %v1043, 1.442695
      %v1090 = vpow.pop %v1089
      %v1091 = vmul.f32 %v1044, 1.442695
      %v1092 = vpow.pop %v1091
      %v1093 = vmul.f32 %v1045, 1.442695
      %v1094 = vpow.pop %v1093
      %v1095 = vmul.f32 %v1046, 1.442695
      %v1096 = vpow.pop %v1095
      %v1097 = vmul.f32 %v1047, 1.442695
      %v1098 = vpow.pop %v1097
      %v1099 = vmul.f32 %v1048, 1.442695
      %v1100 = vpow.pop %v1099
      %v1101 = vmul.f32 %v1049, 1.442695
      %v1102 = vpow.pop %v1101
      %v1103 = vmul.f32 %v1050, 1.442695
      %v1104 = vpow.pop %v1103
      %v1105 = vmul.f32 %v1051, 1.442695
      %v1106 = vpow.pop %v1105
      %v1107 = vmul.f32 %v1052, 1.442695
      %v1108 = vpow.pop %v1107
      %v1109 = vmul.f32 %v1053, 1.442695
      %v1110 = vpow.pop %v1109
      %v1111 = vmul.f32 %v1054, 1.442695
      %v1112 = vpow.pop %v1111
      %v1113 = vmul.f32 %v1055, 1.442695
      %v1114 = vpow.pop %v1113
      %v1115 = vmul.f32 %v1056, 1.442695
      %v1116 = vpow.pop %v1115
      %v1117 = vmul.f32 %v1057, 1.442695
      %v1118 = vpow.pop %v1117
      %v1119 = vmul.f32 %v1058, 1.442695
      %v1120 = vpow.pop %v1119
      %v1121 = vmul.f32 %v1059, 1.442695
      %v1122 = vpow.pop %v1121
      %v1123 = vmul.f32 %v1060, 1.442695
      %v1124 = vpow.pop %v1123
      %v1125 = vsel %vm611, %v471, 0.0
      %v1126 = vsel %vm612, %v472, 0.0
      %v1127 = vsel %vm613, %v471, 0.0
      %v1128 = vsel %vm614, %v472, 0.0
      %v1129 = vsel %vm615, %v471, 0.0
      %v1130 = vsel %vm616, %v472, 0.0
      %v1131 = vsel %vm617, %v471, 0.0
      %v1132 = vsel %vm618, %v472, 0.0
      %v1133 = vsel %vm619, %v471, 0.0
      %v1134 = vsel %vm620, %v472, 0.0
      %v1135 = vsel %vm621, %v471, 0.0
      %v1136 = vsel %vm622, %v472, 0.0
      %v1137 = vsel %vm623, %v471, 0.0
      %v1138 = vsel %vm624, %v472, 0.0
      %v1139 = vsel %vm625, %v471, 0.0
      %v1140 = vsel %vm626, %v472, 0.0
      %v1141 = vsel %vm627, %v471, 0.0
      %v1142 = vsel %vm628, %v472, 0.0
      %v1143 = vsel %vm629, %v471, 0.0
      %v1144 = vsel %vm630, %v472, 0.0
      %v1145 = vsel %vm631, %v471, 0.0
      %v1146 = vsel %vm632, %v472, 0.0
      %v1147 = vsel %vm633, %v471, 0.0
      %v1148 = vsel %vm634, %v472, 0.0
      %v1149 = vsel %vm635, %v471, 0.0
      %v1150 = vsel %vm636, %v472, 0.0
      %v1151 = vsel %vm637, %v471, 0.0
      %v1152 = vsel %vm638, %v472, 0.0
      %v1153 = vsel %vm639, %v471, 0.0
      %v1154 = vsel %vm640, %v472, 0.0
      %v1155 = vsel %vm641, %v471, 0.0
      %v1156 = vsel %vm642, %v472, 0.0
      %v1158 = vsel %vm707, %v1125, 0
      %v1161 = vsel %vm707, %v1126, 0
      %v1164 = vsel %vm707, %v1127, 0
      %v1167 = vsel %vm707, %v1128, 0
      %v1170 = vsel %vm707, %v1129, 0
      %v1173 = vsel %vm707, %v1130, 0
      %v1176 = vsel %vm707, %v1131, 0
      %v1179 = vsel %vm707, %v1132, 0
      %v1182 = vsel %vm707, %v1133, 0
      %v1185 = vsel %vm707, %v1134, 0
      %v1188 = vsel %vm707, %v1135, 0
      %v1191 = vsel %vm707, %v1136, 0
      %v1194 = vsel %vm707, %v1137, 0
      %v1197 = vsel %vm707, %v1138, 0
      %v1200 = vsel %vm707, %v1139, 0
      %v1203 = vsel %vm707, %v1140, 0
      %v1206 = vsel %vm707, %v1141, 0
      %v1209 = vsel %vm707, %v1142, 0
      %v1212 = vsel %vm707, %v1143, 0
      %v1215 = vsel %vm707, %v1144, 0
      %v1218 = vsel %vm707, %v1145, 0
      %v1221 = vsel %vm707, %v1146, 0
      %v1224 = vsel %vm707, %v1147, 0
      %v1227 = vsel %vm707, %v1148, 0
      %v1230 = vsel %vm707, %v1149, 0
      %v1233 = vsel %vm707, %v1150, 0
      %v1236 = vsel %vm707, %v1151, 0
      %v1239 = vsel %vm707, %v1152, 0
      %v1242 = vsel %vm707, %v1153, 0
      %v1245 = vsel %vm707, %v1154, 0
      %v1248 = vsel %vm707, %v1155, 0
      %v1251 = vsel %vm707, %v1156, 0
      %1253 = vmatprep.subr.mxu0 0.0
      %1254 = vmatpush1.msra.mxu0 %v496
      %1255 = vmatprep.subr.mxu0 0.0
      %1256 = vmatpush1.msra.mxu0 %v497
      %1257 = vmatprep.subr.mxu0 0.0
      %1258 = vmatpush1.msra.mxu0 0.0
      %1259 = vmatprep.subr.mxu0 0.0
      %1260 = vmatpush1.msra.mxu0 0.0
      %1261 = vmatprep.subr.mxu0 0.0
      %1262 = vmatpush1.msra.mxu0 0.0
      %1263 = vmatprep.subr.mxu0 0.0
      %1264 = vmatpush1.msra.mxu0 0.0
      %1265 = vmatprep.subr.mxu0 0.0
      %1266 = vmatpush1.msra.mxu0 0.0
      %1267 = vmatprep.subr.mxu0 0.0
      %1268 = vmatpush1.msra.mxu0 0.0
      %1269 = vmatprep.subr.mxu0 0.0
      %1270 = vmatpush1.msra.mxu0 0.0
      %1271 = vmatprep.subr.mxu0 0.0
      %1272 = vmatpush1.msra.mxu0 0.0
      %1273 = vmatprep.subr.mxu0 0.0
      %1274 = vmatpush1.msra.mxu0 0.0
      %1275 = vmatprep.subr.mxu0 0.0
      %1276 = vmatpush1.msra.mxu0 0.0
      %1277 = vmatprep.subr.mxu0 0.0
      %1278 = vmatpush1.msra.mxu0 0.0
      %1279 = vmatprep.subr.mxu0 0.0
      %1280 = vmatpush1.msra.mxu0 0.0
      %1281 = vmatprep.subr.mxu0 0.0
      %1282 = vmatpush1.msra.mxu0 0.0
      %1283 = vmatprep.subr.mxu0 0.0
      %1284 = vmatpush1.msra.mxu0 0.0
      %1285 = vmatprep.subr.mxu0 0.0
      %1286 = vmatpush1.msra.mxu0 0.0
      %1287 = vmatprep.subr.mxu0 0.0
      %1288 = vmatpush1.msra.mxu0 0.0
      %1289 = vmatprep.subr.mxu0 0.0
      %1290 = vmatpush1.msra.mxu0 0.0
      %1291 = vmatprep.subr.mxu0 0.0
      %1292 = vmatpush1.msra.mxu0 0.0
      %1293 = vmatprep.subr.mxu0 0.0
      %1294 = vmatpush1.msra.mxu0 0.0
      %1295 = vmatprep.subr.mxu0 0.0
      %1296 = vmatpush1.msra.mxu0 0.0
      %1297 = vmatprep.subr.mxu0 0.0
      %1298 = vmatpush1.msra.mxu0 0.0
      %1299 = vmatprep.subr.mxu0 0.0
      %1300 = vmatpush1.msra.mxu0 0.0
      %1301 = vmatprep.subr.mxu0 0.0
      %1302 = vmatpush1.msra.mxu0 0.0
      %1303 = vmatprep.subr.mxu0 0.0
      %1304 = vmatpush1.msra.mxu0 0.0
      %1305 = vmatprep.subr.mxu0 0.0
      %1306 = vmatpush1.msra.mxu0 0.0
      %1307 = vmatprep.subr.mxu0 0.0
      %1308 = vmatpush1.msra.mxu0 0.0
      %1309 = vmatprep.subr.mxu0 0.0
      %1310 = vmatpush1.msra.mxu0 0.0
      %1311 = vmatprep.subr.mxu0 0.0
      %1312 = vmatpush1.msra.mxu0 0.0
      %1313 = vmatprep.subr.mxu0 0.0
      %1314 = vmatpush1.msra.mxu0 0.0
      %1315 = vmatprep.subr.mxu0 0.0
      %1316 = vmatpush1.msra.mxu0 0.0
      %1317 = vmatprep.mubr.f32.mxu0 0.0
      %1318 = vmatmul.mubr.f32.gmra.mrb[0].mxu0 %v1158
      %v1319 = vpop.f32.mrb[0].mxu0
      %v1320 = vadd.f32 0.0, %v1319
      %v1321 = vpop.f32.mrb[0].mxu0
      %1322 = vmatprep.mubr.f32.mxu0 0.0
      %1323 = vmatmul.mubr.f32.gmra.mrb[0].mxu0 %v1161
      %v1324 = vpop.f32.mrb[0].mxu0
      %v1325 = vadd.f32 0.0, %v1324
      %v1326 = vpop.f32.mrb[0].mxu0
      %1327 = vmatprep.mubr.f32.mxu0 0.0
      %1328 = vmatmul.mubr.f32.gmra.mrb[0].mxu0 %v1164
      %v1329 = vpop.f32.mrb[0].mxu0
      %v1330 = vadd.f32 0.0, %v1329
      %v1331 = vpop.f32.mrb[0].mxu0
      %1332 = vmatprep.mubr.f32.mxu0 0.0
      %1333 = vmatmul.mubr.f32.gmra.mrb[0].mxu0 %v1167
      %v1334 = vpop.f32.mrb[0].mxu0
      %v1335 = vadd.f32 0.0, %v1334
      %v1336 = vpop.f32.mrb[0].mxu0
      %1337 = vmatprep.mubr.f32.mxu0 0.0
      %1338 = vmatmul.mubr.f32.gmra.mrb[0].mxu0 %v1170
      %v1339 = vpop.f32.mrb[0].mxu0
      %v1340 = vadd.f32 0.0, %v1339
      %v1341 = vpop.f32.mrb[0].mxu0
      %1342 = vmatprep.mubr.f32.mxu0 0.0
      %1343 = vmatmul.mubr.f32.gmra.mrb[0].mxu0 %v1173
      %v1344 = vpop.f32.mrb[0].mxu0
      %v1345 = vadd.f32 0.0, %v1344
      %v1346 = vpop.f32.mrb[0].mxu0
      %1347 = vmatprep.mubr.f32.mxu0 0.0
      %1348 = vmatmul.mubr.f32.gmra.mrb[0].mxu0 %v1176
      %v1349 = vpop.f32.mrb[0].mxu0
      %v1350 = vadd.f32 0.0, %v1349
      %v1351 = vpop.f32.mrb[0].mxu0
      %1352 = vmatprep.mubr.f32.mxu0 0.0
      %1353 = vmatmul.mubr.f32.gmra.mrb[0].mxu0 %v1179
      %v1354 = vpop.f32.mrb[0].mxu0
      %v1355 = vadd.f32 0.0, %v1354
      %v1356 = vpop.f32.mrb[0].mxu0
      %1357 = vmatprep.mubr.f32.mxu0 0.0
      %1358 = vmatmul.mubr.f32.gmra.mrb[0].mxu0 %v1182
      %v1359 = vpop.f32.mrb[0].mxu0
      %v1360 = vadd.f32 0.0, %v1359
      %v1361 = vpop.f32.mrb[0].mxu0
      %1362 = vmatprep.mubr.f32.mxu0 0.0
      %1363 = vmatmul.mubr.f32.gmra.mrb[0].mxu0 %v1185
      %v1364 = vpop.f32.mrb[0].mxu0
      %v1365 = vadd.f32 0.0, %v1364
      %v1366 = vpop.f32.mrb[0].mxu0
      %1367 = vmatprep.mubr.f32.mxu0 0.0
      %1368 = vmatmul.mubr.f32.gmra.mrb[0].mxu0 %v1188
      %v1369 = vpop.f32.mrb[0].mxu0
      %v1370 = vadd.f32 0.0, %v1369
      %v1371 = vpop.f32.mrb[0].mxu0
      %1372 = vmatprep.mubr.f32.mxu0 0.0
      %1373 = vmatmul.mubr.f32.gmra.mrb[0].mxu0 %v1191
      %v1374 = vpop.f32.mrb[0].mxu0
      %v1375 = vadd.f32 0.0, %v1374
      %v1376 = vpop.f32.mrb[0].mxu0
      %1377 = vmatprep.mubr.f32.mxu0 0.0
      %1378 = vmatmul.mubr.f32.gmra.mrb[0].mxu0 %v1194
      %v1379 = vpop.f32.mrb[0].mxu0
      %v1380 = vadd.f32 0.0, %v1379
      %v1381 = vpop.f32.mrb[0].mxu0
      %1382 = vmatprep.mubr.f32.mxu0 0.0
      %1383 = vmatmul.mubr.f32.gmra.mrb[0].mxu0 %v1197
      %v1384 = vpop.f32.mrb[0].mxu0
      %v1385 = vadd.f32 0.0, %v1384
      %v1386 = vpop.f32.mrb[0].mxu0
      %1387 = vmatprep.mubr.f32.mxu0 0.0
      %1388 = vmatmul.mubr.f32.gmra.mrb[0].mxu0 %v1200
      %v1389 = vpop.f32.mrb[0].mxu0
      %v1390 = vadd.f32 0.0, %v1389
      %v1391 = vpop.f32.mrb[0].mxu0
      %1392 = vmatprep.mubr.f32.mxu0 0.0
      %1393 = vmatmul.mubr.f32.gmra.mrb[0].mxu0 %v1203
      %v1394 = vpop.f32.mrb[0].mxu0
      %v1395 = vadd.f32 0.0, %v1394
      %v1396 = vpop.f32.mrb[0].mxu0
      %1397 = vmatprep.mubr.f32.mxu0 0.0
      %1398 = vmatmul.mubr.f32.gmra.mrb[0].mxu0 %v1206
      %v1399 = vpop.f32.mrb[0].mxu0
      %v1400 = vadd.f32 0.0, %v1399
      %v1401 = vpop.f32.mrb[0].mxu0
      %1402 = vmatprep.mubr.f32.mxu0 0.0
      %1403 = vmatmul.mubr.f32.gmra.mrb[0].mxu0 %v1209
      %v1404 = vpop.f32.mrb[0].mxu0
      %v1405 = vadd.f32 0.0, %v1404
      %v1406 = vpop.f32.mrb[0].mxu0
      %1407 = vmatprep.mubr.f32.mxu0 0.0
      %1408 = vmatmul.mubr.f32.gmra.mrb[0].mxu0 %v1212
      %v1409 = vpop.f32.mrb[0].mxu0
      %v1410 = vadd.f32 0.0, %v1409
      %v1411 = vpop.f32.mrb[0].mxu0
      %1412 = vmatprep.mubr.f32.mxu0 0.0
      %1413 = vmatmul.mubr.f32.gmra.mrb[0].mxu0 %v1215
      %v1414 = vpop.f32.mrb[0].mxu0
      %v1415 = vadd.f32 0.0, %v1414
      %v1416 = vpop.f32.mrb[0].mxu0
      %1417 = vmatprep.mubr.f32.mxu0 0.0
      %1418 = vmatmul.mubr.f32.gmra.mrb[0].mxu0 %v1218
      %v1419 = vpop.f32.mrb[0].mxu0
      %v1420 = vadd.f32 0.0, %v1419
      %v1421 = vpop.f32.mrb[0].mxu0
      %1422 = vmatprep.mubr.f32.mxu0 0.0
      %1423 = vmatmul.mubr.f32.gmra.mrb[0].mxu0 %v1221
      %v1424 = vpop.f32.mrb[0].mxu0
      %v1425 = vadd.f32 0.0, %v1424
      %v1426 = vpop.f32.mrb[0].mxu0
      %1427 = vmatprep.mubr.f32.mxu0 0.0
      %1428 = vmatmul.mubr.f32.gmra.mrb[0].mxu0 %v1224
      %v1429 = vpop.f32.mrb[0].mxu0
      %v1430 = vadd.f32 0.0, %v1429
      %v1431 = vpop.f32.mrb[0].mxu0
      %1432 = vmatprep.mubr.f32.mxu0 0.0
      %1433 = vmatmul.mubr.f32.gmra.mrb[0].mxu0 %v1227
      %v1434 = vpop.f32.mrb[0].mxu0
      %v1435 = vadd.f32 0.0, %v1434
      %v1436 = vpop.f32.mrb[0].mxu0
      %1437 = vmatprep.mubr.f32.mxu0 0.0
      %1438 = vmatmul.mubr.f32.gmra.mrb[0].mxu0 %v1230
      %v1439 = vpop.f32.mrb[0].mxu0
      %v1440 = vadd.f32 0.0, %v1439
      %v1441 = vpop.f32.mrb[0].mxu0
      %1442 = vmatprep.mubr.f32.mxu0 0.0
      %1443 = vmatmul.mubr.f32.gmra.mrb[0].mxu0 %v1233
      %v1444 = vpop.f32.mrb[0].mxu0
      %v1445 = vadd.f32 0.0, %v1444
      %v1446 = vpop.f32.mrb[0].mxu0
      %1447 = vmatprep.mubr.f32.mxu0 0.0
      %1448 = vmatmul.mubr.f32.gmra.mrb[0].mxu0 %v1236
      %v1449 = vpop.f32.mrb[0].mxu0
      %v1450 = vadd.f32 0.0, %v1449
      %v1451 = vpop.f32.mrb[0].mxu0
      %1452 = vmatprep.mubr.f32.mxu0 0.0
      %1453 = vmatmul.mubr.f32.gmra.mrb[0].mxu0 %v1239
      %v1454 = vpop.f32.mrb[0].mxu0
      %v1455 = vadd.f32 0.0, %v1454
      %v1456 = vpop.f32.mrb[0].mxu0
      %1457 = vmatprep.mubr.f32.mxu0 0.0
      %1458 = vmatmul.mubr.f32.gmra.mrb[0].mxu0 %v1242
      %v1459 = vpop.f32.mrb[0].mxu0
      %v1460 = vadd.f32 0.0, %v1459
      %v1461 = vpop.f32.mrb[0].mxu0
      %1462 = vmatprep.mubr.f32.mxu0 0.0
      %1463 = vmatmul.mubr.f32.gmra.mrb[0].mxu0 %v1245
      %v1464 = vpop.f32.mrb[0].mxu0
      %v1465 = vadd.f32 0.0, %v1464
      %v1466 = vpop.f32.mrb[0].mxu0
      %1467 = vmatprep.mubr.f32.mxu0 0.0
      %1468 = vmatmul.mubr.f32.gmra.mrb[0].mxu0 %v1248
      %v1469 = vpop.f32.mrb[0].mxu0
      %v1470 = vadd.f32 0.0, %v1469
      %v1471 = vpop.f32.mrb[0].mxu0
      %1472 = vmatprep.mubr.f32.mxu0 0.0
      %1473 = vmatmul.mubr.f32.gmra.mrb[0].mxu0 %v1251
      %v1474 = vpop.f32.mrb[0].mxu0
      %v1475 = vadd.f32 0.0, %v1474
      %v1476 = vpop.f32.mrb[0].mxu0
      %1477 = vdwg.mxu0
      %v1478 = vsel %vm611, %v473, 0.0
      %v1479 = vsel %vm612, %v474, 0.0
      %v1480 = vsel %vm613, %v473, 0.0
      %v1481 = vsel %vm614, %v474, 0.0
      %v1482 = vsel %vm615, %v473, 0.0
      %v1483 = vsel %vm616, %v474, 0.0
      %v1484 = vsel %vm617, %v473, 0.0
      %v1485 = vsel %vm618, %v474, 0.0
      %v1486 = vsel %vm619, %v473, 0.0
      %v1487 = vsel %vm620, %v474, 0.0
      %v1488 = vsel %vm621, %v473, 0.0
      %v1489 = vsel %vm622, %v474, 0.0
      %v1490 = vsel %vm623, %v473, 0.0
      %v1491 = vsel %vm624, %v474, 0.0
      %v1492 = vsel %vm625, %v473, 0.0
      %v1493 = vsel %vm626, %v474, 0.0
      %v1494 = vsel %vm627, %v473, 0.0
      %v1495 = vsel %vm628, %v474, 0.0
      %v1496 = vsel %vm629, %v473, 0.0
      %v1497 = vsel %vm630, %v474, 0.0
      %v1498 = vsel %vm631, %v473, 0.0
      %v1499 = vsel %vm632, %v474, 0.0
      %v1500 = vsel %vm633, %v473, 0.0
      %v1501 = vsel %vm634, %v474, 0.0
      %v1502 = vsel %vm635, %v473, 0.0
      %v1503 = vsel %vm636, %v474, 0.0
      %v1504 = vsel %vm637, %v473, 0.0
      %v1505 = vsel %vm638, %v474, 0.0
      %v1506 = vsel %vm639, %v473, 0.0
      %v1507 = vsel %vm640, %v474, 0.0
      %v1508 = vsel %vm641, %v473, 0.0
      %v1509 = vsel %vm642, %v474, 0.0
      %v1511 = vsel %vm707, %v1478, 0
      %v1514 = vsel %vm707, %v1479, 0
      %v1517 = vsel %vm707, %v1480, 0
      %v1520 = vsel %vm707, %v1481, 0
      %v1523 = vsel %vm707, %v1482, 0
      %v1526 = vsel %vm707, %v1483, 0
      %v1529 = vsel %vm707, %v1484, 0
      %v1532 = vsel %vm707, %v1485, 0
      %v1535 = vsel %vm707, %v1486, 0
      %v1538 = vsel %vm707, %v1487, 0
      %v1541 = vsel %vm707, %v1488, 0
      %v1544 = vsel %vm707, %v1489, 0
      %v1547 = vsel %vm707, %v1490, 0
      %v1550 = vsel %vm707, %v1491, 0
      %v1553 = vsel %vm707, %v1492, 0
      %v1556 = vsel %vm707, %v1493, 0
      %v1559 = vsel %vm707, %v1494, 0
      %v1562 = vsel %vm707, %v1495, 0
      %v1565 = vsel %vm707, %v1496, 0
      %v1568 = vsel %vm707, %v1497, 0
      %v1571 = vsel %vm707, %v1498, 0
      %v1574 = vsel %vm707, %v1499, 0
      %v1577 = vsel %vm707, %v1500, 0
      %v1580 = vsel %vm707, %v1501, 0
      %v1583 = vsel %vm707, %v1502, 0
      %v1586 = vsel %vm707, %v1503, 0
      %v1589 = vsel %vm707, %v1504, 0
      %v1592 = vsel %vm707, %v1505, 0
      %v1595 = vsel %vm707, %v1506, 0
      %v1598 = vsel %vm707, %v1507, 0
      %v1601 = vsel %vm707, %v1508, 0
      %v1604 = vsel %vm707, %v1509, 0
      %1606 = vmatprep.subr.mxu0 0.0
      %1607 = vmatpush1.msra.mxu0 1.0
      %1608 = vmatprep.subr.mxu0 0.0
      %1609 = vmatpush1.msra.mxu0 1.0
      %1610 = vmatprep.subr.mxu0 0.0
      %1611 = vmatpush1.msra.mxu0 0.0
      %1612 = vmatprep.subr.mxu0 0.0
      %1613 = vmatpush1.msra.mxu0 0.0
      %1614 = vmatprep.subr.mxu0 0.0
      %1615 = vmatpush1.msra.mxu0 0.0
      %1616 = vmatprep.subr.mxu0 0.0
      %1617 = vmatpush1.msra.mxu0 0.0
      %1618 = vmatprep.subr.mxu0 0.0
      %1619 = vmatpush1.msra.mxu0 0.0
      %1620 = vmatprep.subr.mxu0 0.0
      %1621 = vmatpush1.msra.mxu0 0.0
      %1622 = vmatprep.subr.mxu0 0.0
      %1623 = vmatpush1.msra.mxu0 0.0
      %1624 = vmatprep.subr.mxu0 0.0
      %1625 = vmatpush1.msra.mxu0 0.0
      %1626 = vmatprep.subr.mxu0 0.0
      %1627 = vmatpush1.msra.mxu0 0.0
      %1628 = vmatprep.subr.mxu0 0.0
      %1629 = vmatpush1.msra.mxu0 0.0
      %1630 = vmatprep.subr.mxu0 0.0
      %1631 = vmatpush1.msra.mxu0 0.0
      %1632 = vmatprep.subr.mxu0 0.0
      %1633 = vmatpush1.msra.mxu0 0.0
      %1634 = vmatprep.subr.mxu0 0.0
      %1635 = vmatpush1.msra.mxu0 0.0
      %1636 = vmatprep.subr.mxu0 0.0
      %1637 = vmatpush1.msra.mxu0 0.0
      %1638 = vmatprep.subr.mxu0 0.0
      %1639 = vmatpush1.msra.mxu0 0.0
      %1640 = vmatprep.subr.mxu0 0.0
      %1641 = vmatpush1.msra.mxu0 0.0
      %1642 = vmatprep.subr.mxu0 0.0
      %1643 = vmatpush1.msra.mxu0 0.0
      %1644 = vmatprep.subr.mxu0 0.0
      %1645 = vmatpush1.msra.mxu0 0.0
      %1646 = vmatprep.subr.mxu0 0.0
      %1647 = vmatpush1.msra.mxu0 0.0
      %1648 = vmatprep.subr.mxu0 0.0
      %1649 = vmatpush1.msra.mxu0 0.0
      %1650 = vmatprep.subr.mxu0 0.0
      %1651 = vmatpush1.msra.mxu0 0.0
      %1652 = vmatprep.subr.mxu0 0.0
      %1653 = vmatpush1.msra.mxu0 0.0
      %1654 = vmatprep.subr.mxu0 0.0
      %1655 = vmatpush1.msra.mxu0 0.0
      %1656 = vmatprep.subr.mxu0 0.0
      %1657 = vmatpush1.msra.mxu0 0.0
      %1658 = vmatprep.subr.mxu0 0.0
      %1659 = vmatpush1.msra.mxu0 0.0
      %1660 = vmatprep.subr.mxu0 0.0
      %1661 = vmatpush1.msra.mxu0 0.0
      %1662 = vmatprep.subr.mxu0 0.0
      %1663 = vmatpush1.msra.mxu0 0.0
      %1664 = vmatprep.subr.mxu0 0.0
      %1665 = vmatpush1.msra.mxu0 0.0
      %1666 = vmatprep.subr.mxu0 0.0
      %1667 = vmatpush1.msra.mxu0 0.0
      %1668 = vmatprep.subr.mxu0 0.0
      %1669 = vmatpush1.msra.mxu0 0.0
      %1670 = vmatprep.mubr.f32.mxu0 0.0
      %1671 = vmatmul.mubr.f32.gmra.mrb[0].mxu0 %v1511
      %v1672 = vpop.f32.mrb[0].mxu0
      %v1673 = vadd.f32 0.0, %v1672
      %v1674 = vpop.f32.mrb[0].mxu0
      %1675 = vmatprep.mubr.f32.mxu0 0.0
      %1676 = vmatmul.mubr.f32.gmra.mrb[0].mxu0 %v1514
      %v1677 = vpop.f32.mrb[0].mxu0
      %v1678 = vadd.f32 0.0, %v1677
      %v1679 = vpop.f32.mrb[0].mxu0
      %1680 = vmatprep.mubr.f32.mxu0 0.0
      %1681 = vmatmul.mubr.f32.gmra.mrb[0].mxu0 %v1517
      %v1682 = vpop.f32.mrb[0].mxu0
      %v1683 = vadd.f32 0.0, %v1682
      %v1684 = vpop.f32.mrb[0].mxu0
      %1685 = vmatprep.mubr.f32.mxu0 0.0
      %1686 = vmatmul.mubr.f32.gmra.mrb[0].mxu0 %v1520
      %v1687 = vpop.f32.mrb[0].mxu0
      %v1688 = vadd.f32 0.0, %v1687
      %v1689 = vpop.f32.mrb[0].mxu0
      %1690 = vmatprep.mubr.f32.mxu0 0.0
      %1691 = vmatmul.mubr.f32.gmra.mrb[0].mxu0 %v1523
      %v1692 = vpop.f32.mrb[0].mxu0
      %v1693 = vadd.f32 0.0, %v1692
      %v1694 = vpop.f32.mrb[0].mxu0
      %1695 = vmatprep.mubr.f32.mxu0 0.0
      %1696 = vmatmul.mubr.f32.gmra.mrb[0].mxu0 %v1526
      %v1697 = vpop.f32.mrb[0].mxu0
      %v1698 = vadd.f32 0.0, %v1697
      %v1699 = vpop.f32.mrb[0].mxu0
      %1700 = vmatprep.mubr.f32.mxu0 0.0
      %1701 = vmatmul.mubr.f32.gmra.mrb[0].mxu0 %v1529
      %v1702 = vpop.f32.mrb[0].mxu0
      %v1703 = vadd.f32 0.0, %v1702
      %v1704 = vpop.f32.mrb[0].mxu0
      %1705 = vmatprep.mubr.f32.mxu0 0.0
      %1706 = vmatmul.mubr.f32.gmra.mrb[0].mxu0 %v1532
      %v1707 = vpop.f32.mrb[0].mxu0
      %v1708 = vadd.f32 0.0, %v1707
      %v1709 = vpop.f32.mrb[0].mxu0
      %1710 = vmatprep.mubr.f32.mxu0 0.0
      %1711 = vmatmul.mubr.f32.gmra.mrb[0].mxu0 %v1535
      %v1712 = vpop.f32.mrb[0].mxu0
      %v1713 = vadd.f32 0.0, %v1712
      %v1714 = vpop.f32.mrb[0].mxu0
      %1715 = vmatprep.mubr.f32.mxu0 0.0
      %1716 = vmatmul.mubr.f32.gmra.mrb[0].mxu0 %v1538
      %v1717 = vpop.f32.mrb[0].mxu0
      %v1718 = vadd.f32 0.0, %v1717
      %v1719 = vpop.f32.mrb[0].mxu0
      %1720 = vmatprep.mubr.f32.mxu0 0.0
      %1721 = vmatmul.mubr.f32.gmra.mrb[0].mxu0 %v1541
      %v1722 = vpop.f32.mrb[0].mxu0
      %v1723 = vadd.f32 0.0, %v1722
      %v1724 = vpop.f32.mrb[0].mxu0
      %1725 = vmatprep.mubr.f32.mxu0 0.0
      %1726 = vmatmul.mubr.f32.gmra.mrb[0].mxu0 %v1544
      %v1727 = vpop.f32.mrb[0].mxu0
      %v1728 = vadd.f32 0.0, %v1727
      %v1729 = vpop.f32.mrb[0].mxu0
      %1730 = vmatprep.mubr.f32.mxu0 0.0
      %1731 = vmatmul.mubr.f32.gmra.mrb[0].mxu0 %v1547
      %v1732 = vpop.f32.mrb[0].mxu0
      %v1733 = vadd.f32 0.0, %v1732
      %v1734 = vpop.f32.mrb[0].mxu0
      %1735 = vmatprep.mubr.f32.mxu0 0.0
      %1736 = vmatmul.mubr.f32.gmra.mrb[0].mxu0 %v1550
      %v1737 = vpop.f32.mrb[0].mxu0
      %v1738 = vadd.f32 0.0, %v1737
      %v1739 = vpop.f32.mrb[0].mxu0
      %1740 = vmatprep.mubr.f32.mxu0 0.0
      %1741 = vmatmul.mubr.f32.gmra.mrb[0].mxu0 %v1553
      %v1742 = vpop.f32.mrb[0].mxu0
      %v1743 = vadd.f32 0.0, %v1742
      %v1744 = vpop.f32.mrb[0].mxu0
      %1745 = vmatprep.mubr.f32.mxu0 0.0
      %1746 = vmatmul.mubr.f32.gmra.mrb[0].mxu0 %v1556
      %v1747 = vpop.f32.mrb[0].mxu0
      %v1748 = vadd.f32 0.0, %v1747
      %v1749 = vpop.f32.mrb[0].mxu0
      %1750 = vmatprep.mubr.f32.mxu0 0.0
      %1751 = vmatmul.mubr.f32.gmra.mrb[0].mxu0 %v1559
      %v1752 = vpop.f32.mrb[0].mxu0
      %v1753 = vadd.f32 0.0, %v1752
      %v1754 = vpop.f32.mrb[0].mxu0
      %1755 = vmatprep.mubr.f32.mxu0 0.0
      %1756 = vmatmul.mubr.f32.gmra.mrb[0].mxu0 %v1562
      %v1757 = vpop.f32.mrb[0].mxu0
      %v1758 = vadd.f32 0.0, %v1757
      %v1759 = vpop.f32.mrb[0].mxu0
      %1760 = vmatprep.mubr.f32.mxu0 0.0
      %1761 = vmatmul.mubr.f32.gmra.mrb[0].mxu0 %v1565
      %v1762 = vpop.f32.mrb[0].mxu0
      %v1763 = vadd.f32 0.0, %v1762
      %v1764 = vpop.f32.mrb[0].mxu0
      %1765 = vmatprep.mubr.f32.mxu0 0.0
      %1766 = vmatmul.mubr.f32.gmra.mrb[0].mxu0 %v1568
      %v1767 = vpop.f32.mrb[0].mxu0
      %v1768 = vadd.f32 0.0, %v1767
      %v1769 = vpop.f32.mrb[0].mxu0
      %1770 = vmatprep.mubr.f32.mxu0 0.0
      %1771 = vmatmul.mubr.f32.gmra.mrb[0].mxu0 %v1571
      %v1772 = vpop.f32.mrb[0].mxu0
      %v1773 = vadd.f32 0.0, %v1772
      %v1774 = vpop.f32.mrb[0].mxu0
      %1775 = vmatprep.mubr.f32.mxu0 0.0
      %1776 = vmatmul.mubr.f32.gmra.mrb[0].mxu0 %v1574
      %v1777 = vpop.f32.mrb[0].mxu0
      %v1778 = vadd.f32 0.0, %v1777
      %v1779 = vpop.f32.mrb[0].mxu0
      %1780 = vmatprep.mubr.f32.mxu0 0.0
      %1781 = vmatmul.mubr.f32.gmra.mrb[0].mxu0 %v1577
      %v1782 = vpop.f32.mrb[0].mxu0
      %v1783 = vadd.f32 0.0, %v1782
      %v1784 = vpop.f32.mrb[0].mxu0
      %1785 = vmatprep.mubr.f32.mxu0 0.0
      %1786 = vmatmul.mubr.f32.gmra.mrb[0].mxu0 %v1580
      %v1787 = vpop.f32.mrb[0].mxu0
      %v1788 = vadd.f32 0.0, %v1787
      %v1789 = vpop.f32.mrb[0].mxu0
      %1790 = vmatprep.mubr.f32.mxu0 0.0
      %1791 = vmatmul.mubr.f32.gmra.mrb[0].mxu0 %v1583
      %v1792 = vpop.f32.mrb[0].mxu0
      %v1793 = vadd.f32 0.0, %v1792
      %v1794 = vpop.f32.mrb[0].mxu0
      %1795 = vmatprep.mubr.f32.mxu0 0.0
      %1796 = vmatmul.mubr.f32.gmra.mrb[0].mxu0 %v1586
      %v1797 = vpop.f32.mrb[0].mxu0
      %v1798 = vadd.f32 0.0, %v1797
      %v1799 = vpop.f32.mrb[0].mxu0
      %1800 = vmatprep.mubr.f32.mxu0 0.0
      %1801 = vmatmul.mubr.f32.gmra.mrb[0].mxu0 %v1589
      %v1802 = vpop.f32.mrb[0].mxu0
      %v1803 = vadd.f32 0.0, %v1802
      %v1804 = vpop.f32.mrb[0].mxu0
      %1805 = vmatprep.mubr.f32.mxu0 0.0
      %1806 = vmatmul.mubr.f32.gmra.mrb[0].mxu0 %v1592
      %v1807 = vpop.f32.mrb[0].mxu0
      %v1808 = vadd.f32 0.0, %v1807
      %v1809 = vpop.f32.mrb[0].mxu0
      %1810 = vmatprep.mubr.f32.mxu0 0.0
      %1811 = vmatmul.mubr.f32.gmra.mrb[0].mxu0 %v1595
      %v1812 = vpop.f32.mrb[0].mxu0
      %v1813 = vadd.f32 0.0, %v1812
      %v1814 = vpop.f32.mrb[0].mxu0
      %1815 = vmatprep.mubr.f32.mxu0 0.0
      %1816 = vmatmul.mubr.f32.gmra.mrb[0].mxu0 %v1598
      %v1817 = vpop.f32.mrb[0].mxu0
      %v1818 = vadd.f32 0.0, %v1817
      %v1819 = vpop.f32.mrb[0].mxu0
      %1820 = vmatprep.mubr.f32.mxu0 0.0
      %1821 = vmatmul.mubr.f32.gmra.mrb[0].mxu0 %v1601
      %v1822 = vpop.f32.mrb[0].mxu0
      %v1823 = vadd.f32 0.0, %v1822
      %v1824 = vpop.f32.mrb[0].mxu0
      %1825 = vmatprep.mubr.f32.mxu0 0.0
      %1826 = vmatmul.mubr.f32.gmra.mrb[0].mxu0 %v1604
      %v1827 = vpop.f32.mrb[0].mxu0
      %v1828 = vadd.f32 0.0, %v1827
      %v1829 = vpop.f32.mrb[0].mxu0
      %1830 = vdwg.mxu0
      %v1831 = vld [vmem:[#allocation2] sm:$0xff]
      %v1832 = vld [vmem:[#allocation2 + $0x8] sm:$0xff]
      %v1833 = vmul.f32 %v1062, %v1831
      %v1834 = vmul.f32 %v1064, %v1832
      %v1835 = vadd.f32 %v1833, %v1320
      %v1836 = vadd.f32 %v1834, %v1325
      %v1837 = vmul.f32 %v1066, %v1835
      %v1838 = vmul.f32 %v1068, %v1836
      %v1839 = vadd.f32 %v1837, %v1330
      %v1840 = vadd.f32 %v1838, %v1335
      %v1841 = vmul.f32 %v1070, %v1839
      %v1842 = vmul.f32 %v1072, %v1840
      %v1843 = vadd.f32 %v1841, %v1340
      %v1844 = vadd.f32 %v1842, %v1345
      %v1845 = vmul.f32 %v1074, %v1843
      %v1846 = vmul.f32 %v1076, %v1844
      %v1847 = vadd.f32 %v1845, %v1350
      %v1848 = vadd.f32 %v1846, %v1355
      %v1849 = vmul.f32 %v1078, %v1847
      %v1850 = vmul.f32 %v1080, %v1848
      %v1851 = vadd.f32 %v1849, %v1360
      %v1852 = vadd.f32 %v1850, %v1365
      %v1853 = vmul.f32 %v1082, %v1851
      %v1854 = vmul.f32 %v1084, %v1852
      %v1855 = vadd.f32 %v1853, %v1370
      %v1856 = vadd.f32 %v1854, %v1375
      %v1857 = vmul.f32 %v1086, %v1855
      %v1858 = vmul.f32 %v1088, %v1856
      %v1859 = vadd.f32 %v1857, %v1380
      %v1860 = vadd.f32 %v1858, %v1385
      %v1861 = vmul.f32 %v1090, %v1859
      %v1862 = vmul.f32 %v1092, %v1860
      %v1863 = vadd.f32 %v1861, %v1390
      %v1864 = vadd.f32 %v1862, %v1395
      %v1865 = vmul.f32 %v1094, %v1863
      %v1866 = vmul.f32 %v1096, %v1864
      %v1867 = vadd.f32 %v1865, %v1400
      %v1868 = vadd.f32 %v1866, %v1405
      %v1869 = vmul.f32 %v1098, %v1867
      %v1870 = vmul.f32 %v1100, %v1868
      %v1871 = vadd.f32 %v1869, %v1410
      %v1872 = vadd.f32 %v1870, %v1415
      %v1873 = vmul.f32 %v1102, %v1871
      %v1874 = vmul.f32 %v1104, %v1872
      %v1875 = vadd.f32 %v1873, %v1420
      %v1876 = vadd.f32 %v1874, %v1425
      %v1877 = vmul.f32 %v1106, %v1875
      %v1878 = vmul.f32 %v1108, %v1876
      %v1879 = vadd.f32 %v1877, %v1430
      %v1880 = vadd.f32 %v1878, %v1435
      %v1881 = vmul.f32 %v1110, %v1879
      %v1882 = vmul.f32 %v1112, %v1880
      %v1883 = vadd.f32 %v1881, %v1440
      %v1884 = vadd.f32 %v1882, %v1445
      %v1885 = vmul.f32 %v1114, %v1883
      %v1886 = vmul.f32 %v1116, %v1884
      %v1887 = vadd.f32 %v1885, %v1450
      %v1888 = vadd.f32 %v1886, %v1455
      %v1889 = vmul.f32 %v1118, %v1887
      %v1890 = vmul.f32 %v1120, %v1888
      %v1891 = vadd.f32 %v1889, %v1460
      %v1892 = vadd.f32 %v1890, %v1465
      %v1893 = vmul.f32 %v1122, %v1891
      %v1894 = vmul.f32 %v1124, %v1892
      %v1895 = vadd.f32 %v1893, %v1470
      %v1896 = vadd.f32 %v1894, %v1475
      %vm1897 = vcmask 523264
      %1898 = vst.msk [vmem:[#allocation2] sm:$0xff] %vm1897, %v1895
      %1899 = vst.msk [vmem:[#allocation2 + $0x8] sm:$0xff] %vm1897, %v1896
      %v1900 = vadd.s32 %v544, 128
      %v1901 = vmul.u32 %v511, 16
      %v1902 = vmul.u32 %v512, 16
      %vm1903 = vcmp.ge.s32.totalorder %v544, %v1901
      %vm1904 = vcmp.ge.s32.totalorder %v1900, %v1901
      %vm1905 = vcmp.ge.s32.totalorder %v544, %v1902
      %vm1906 = vcmp.ge.s32.totalorder %v1900, %v1902
      %v1907 = vadd.s32 %v1901, 16
      %v1908 = vadd.s32 %v1902, 16
      %vm1909 = vcmp.lt.s32.totalorder %v544, %v1907
      %vm1910 = vcmp.lt.s32.totalorder %v1900, %v1907
      %vm1911 = vcmp.lt.s32.totalorder %v544, %v1908
      %vm1912 = vcmp.lt.s32.totalorder %v1900, %v1908
      %vm1913 = vmand %vm1903, %vm1909
      %vm1914 = vmand %vm1904, %vm1910
      %vm1915 = vmand %vm1905, %vm1911
      %vm1916 = vmand %vm1906, %vm1912
      %v1917 = vsel %vm1913, 1, 0
      %v1918 = vsel %vm1914, 1, 0
      %v1919 = vsel %vm1915, 1, 0
      %v1920 = vsel %vm1916, 1, 0
      %v1921 = vcvt.s32.f32 %v1917
      %v1922 = vcvt.s32.f32 %v1918
      %v1923 = vcvt.s32.f32 %v1919
      %v1924 = vcvt.s32.f32 %v1920
      %v1925 = vmul.f32 %v1673, %v1835
      %v1926 = vmul.f32 %v1678, %v1836
      %v1927 = vmul.f32 %v1683, %v1839
      %v1928 = vmul.f32 %v1688, %v1840
      %v1929 = vmul.f32 %v1693, %v1843
      %v1930 = vmul.f32 %v1698, %v1844
      %v1931 = vmul.f32 %v1703, %v1847
      %v1932 = vmul.f32 %v1708, %v1848
      %v1933 = vmul.f32 %v1713, %v1851
      %v1934 = vmul.f32 %v1718, %v1852
      %v1935 = vmul.f32 %v1723, %v1855
      %v1936 = vmul.f32 %v1728, %v1856
      %v1937 = vmul.f32 %v1733, %v1859
      %v1938 = vmul.f32 %v1738, %v1860
      %v1939 = vmul.f32 %v1743, %v1863
      %v1940 = vmul.f32 %v1748, %v1864
      %v1941 = vmul.f32 %v1753, %v1867
      %v1942 = vmul.f32 %v1758, %v1868
      %v1943 = vmul.f32 %v1763, %v1871
      %v1944 = vmul.f32 %v1768, %v1872
      %v1945 = vmul.f32 %v1773, %v1875
      %v1946 = vmul.f32 %v1778, %v1876
      %v1947 = vmul.f32 %v1783, %v1879
      %v1948 = vmul.f32 %v1788, %v1880
      %v1949 = vmul.f32 %v1793, %v1883
      %v1950 = vmul.f32 %v1798, %v1884
      %v1951 = vmul.f32 %v1803, %v1887
      %v1952 = vmul.f32 %v1808, %v1888
      %v1953 = vmul.f32 %v1813, %v1891
      %v1954 = vmul.f32 %v1818, %v1892
      %v1955 = vmul.f32 %v1823, %v1895
      %v1956 = vmul.f32 %v1828, %v1896
      %v1958 = vlaneseq
      %v1959 = vshrl.u32 %v1958, 7
      %v1960 = vsub.s32 0, %v1959
      %v1961 = vrot.slane %v477, %v1960
      %v1963 = vmul.f32 %v1961, %v465
      %v1964 = vmul.f32 %v1961, %v466
      %1965 = vmatprep.subr.mxu0 0.0
      %1966 = vmatpush1.msra.mxu0 %v1925
      %1967 = vmatprep.subr.mxu0 0.0
      %1968 = vmatpush1.msra.mxu0 %v1926
      %1969 = vmatprep.subr.mxu0 0.0
      %1970 = vmatpush1.msra.mxu0 %v1927
      %1971 = vmatprep.subr.mxu0 0.0
      %1972 = vmatpush1.msra.mxu0 %v1928
      %1973 = vmatprep.subr.mxu0 0.0
      %1974 = vmatpush1.msra.mxu0 %v1929
      %1975 = vmatprep.subr.mxu0 0.0
      %1976 = vmatpush1.msra.mxu0 %v1930
      %1977 = vmatprep.subr.mxu0 0.0
      %1978 = vmatpush1.msra.mxu0 %v1931
      %1979 = vmatprep.subr.mxu0 0.0
      %1980 = vmatpush1.msra.mxu0 %v1932
      %1981 = vmatprep.subr.mxu0 0.0
      %1982 = vmatpush1.msra.mxu0 %v1933
      %1983 = vmatprep.subr.mxu0 0.0
      %1984 = vmatpush1.msra.mxu0 %v1934
      %1985 = vmatprep.subr.mxu0 0.0
      %1986 = vmatpush1.msra.mxu0 %v1935
      %1987 = vmatprep.subr.mxu0 0.0
      %1988 = vmatpush1.msra.mxu0 %v1936
      %1989 = vmatprep.subr.mxu0 0.0
      %1990 = vmatpush1.msra.mxu0 %v1937
      %1991 = vmatprep.subr.mxu0 0.0
      %1992 = vmatpush1.msra.mxu0 %v1938
      %1993 = vmatprep.subr.mxu0 0.0
      %1994 = vmatpush1.msra.mxu0 %v1939
      %1995 = vmatprep.subr.mxu0 0.0
      %1996 = vmatpush1.msra.mxu0 %v1940
      %1997 = vmatprep.subr.mxu0 0.0
      %1998 = vmatpush1.msra.mxu0 %v1941
      %1999 = vmatprep.subr.mxu0 0.0
      %2000 = vmatpush1.msra.mxu0 %v1942
      %2001 = vmatprep.subr.mxu0 0.0
      %2002 = vmatpush1.msra.mxu0 %v1943
      %2003 = vmatprep.subr.mxu0 0.0
      %2004 = vmatpush1.msra.mxu0 %v1944
      %2005 = vmatprep.subr.mxu0 0.0
      %2006 = vmatpush1.msra.mxu0 %v1945
      %2007 = vmatprep.subr.mxu0 0.0
      %2008 = vmatpush1.msra.mxu0 %v1946
      %2009 = vmatprep.subr.mxu0 0.0
      %2010 = vmatpush1.msra.mxu0 %v1947
      %2011 = vmatprep.subr.mxu0 0.0
      %2012 = vmatpush1.msra.mxu0 %v1948
      %2013 = vmatprep.subr.mxu0 0.0
      %2014 = vmatpush1.msra.mxu0 %v1949
      %2015 = vmatprep.subr.mxu0 0.0
      %2016 = vmatpush1.msra.mxu0 %v1950
      %2017 = vmatprep.subr.mxu0 0.0
      %2018 = vmatpush1.msra.mxu0 %v1951
      %2019 = vmatprep.subr.mxu0 0.0
      %2020 = vmatpush1.msra.mxu0 %v1952
      %2021 = vmatprep.subr.mxu0 0.0
      %2022 = vmatpush1.msra.mxu0 %v1953
      %2023 = vmatprep.subr.mxu0 0.0
      %2024 = vmatpush1.msra.mxu0 %v1954
      %2025 = vmatprep.subr.mxu0 0.0
      %2026 = vmatpush1.msra.mxu0 %v1955
      %2027 = vmatprep.subr.mxu0 0.0
      %2028 = vmatpush1.msra.mxu0 %v1956
      %2029 = vmatprep.mubr.f32.mxu0 %v1922
      %2030 = vmatmul.mubr.f32.gmra.mrb[0].mxu0 %v1921
      %v2031 = vpop.f32.mrb[0].mxu0
      %v2032 = vadd.f32 %v1963, %v2031
      %v2033 = vpop.f32.mrb[0].mxu0
      %2034 = vmatprep.mubr.f32.mxu0 %v1924
      %2035 = vmatmul.mubr.f32.gmra.mrb[0].mxu0 %v1923
      %v2036 = vpop.f32.mrb[0].mxu0
      %v2037 = vadd.f32 %v1964, %v2036
      %v2038 = vpop.f32.mrb[0].mxu0
      %2039 = vdwg.mxu0
      %v2040 = vmul.f32 %v2032, %v508
      %v2041 = vmul.f32 %v2037, %v509
      %2042 = vst.msk [vmem:[%s456] sm:$0xff] %vm1897, %v2040
      %2043 = vst.msk [vmem:[%s456 + $0x8] sm:$0xff] %vm1897, %v2041
      %s2044 = smul.u32 2, %s23
      %p2045 = scmp.lt.s32.totalorder %s22, 1
      %s2046 = scalar_select %p2045, %s22, 1
      %p2047 = scmp.lt.s32.totalorder %s2044, 1
      %s2048 = scalar_select %p2047, %s2044, 1
      %s2049 = smul.addr %s2046, 2
      %s2050 = sadd.s32 %s2048, %s2049
      %s2051 = smul.addr %s2050, 8
      %s2052 = scalar_lea.vmem %s7, %s2051
      // Predicated region
      $region53: #{_lambda_.25} parent=47 // pred_check
        %p2053 = pneg %p232
      $region54: #{_lambda_.25} parent=47 // pred_check_branch
        %2055 = sbr.rel (%p2053) target = $region56
      $region55: #{_lambda_.25} parent=47 // pred_region
        %s2056 = smul.u32 2, %s23
      $region56: #{_lambda_.25} parent=47 // pred_fallthru
        _
    $region48: #{_lambda_.25} parent=5 // pred_fallthru
      _
    %p2057 = scmp.le.s32.totalorder 2, %s13
    // Predicated region
    $region57: #{_lambda_.25} parent=5 // pred_check
      %p2058 = pneg %p2057
    $region58: #{_lambda_.25} parent=5 // pred_check_branch
      %2060 = sbr.rel (%p2058) target = $region60
    $region59: #{_lambda_.25} parent=5 // pred_region
      %s2061 = ssub.s32 %s13, 2
      // Predicated region
      $region61: #{_lambda_.25} parent=59 // pred_check
        %p2062 = pneg %p238
      $region62: #{_lambda_.25} parent=59 // pred_check_branch
        %2064 = sbr.rel (%p2062) target = $region64
      $region63: #{_lambda_.25} parent=59 // pred_region
        %s2065 = smul.u32 2, %s25
        %p2066 = scmp.lt.s32.totalorder %s24, 1
        %s2067 = scalar_select %p2066, %s24, 1
        %p2068 = scmp.lt.s32.totalorder %s2065, 1
        %s2069 = scalar_select %p2068, %s2065, 1
        %s2070 = smul.addr %s2067, 2
        %s2071 = sadd.s32 %s2069, %s2070
        %s2072 = smul.addr %s2071, 8
        %s2073 = scalar_lea.vmem %s7, %s2072
      $region64: #{_lambda_.25} parent=59 // pred_fallthru
        _
    $region60: #{_lambda_.25} parent=5 // pred_fallthru
      _
  $region6: #{_lambda_.25} parent=0 // loop_footer
    %s17 = sadd.s32 1, %s13
  $region7: #{_lambda_.25} parent=0 // loop_footer_branch
    %12 = sbr.rel target = $region3
  $region8: #{_lambda_.25} parent=0 // loop_exit
    _

// kernel: _lambda_.34
$region0: #{_lambda_.34}
  #allocation0 [shape = 'u32[]', space=smem, size = 0x4, offset = 0x4, fixed_abs, tag = 'smem constant byte address 0x4 - core index']
  #allocation1 [shape = 'u32[144,128]{1,0:T(1,128)}', space=vmem, size = 0x12000, scoped, tag = 'internal scratch']
  %s0 = inlined_call_operand.vmem [shape: f32[32,32], index: 0, kind: input, shape index: {}]
  %s1 = inlined_call_operand.vmem [shape: f32[32,32], index: 1, kind: input, shape index: {}]
  %s2 = inlined_call_operand.vmem [shape: f32[1,32], index: 2, kind: input, shape index: {}]
  %s3 = inlined_call_operand.vmem [shape: f32[32,32], index: 3, kind: output, shape index: {0}]
  %s4 = inlined_call_operand.hbm [shape: f32[32,32], index: 4, kind: output, shape index: {1}]
  %5 = xla_tuple %s3, %s4
  %s6 = sld [smem:[#allocation0]]
  $region30: #{_lambda_.34} parent=0
    _
  %s8 = ssub.s32 1, %s6
  %s9 = scalar_select 0, %s8, %s6
  $region1: #{_lambda_.34} parent=0
    #allocation2 [shape = 'u8[16384]{0}', space=vmem, size = 0x4000, scoped, tag = 'output window, operand 1, single buffered']
    #allocation3 [shape = 's32[1]{0}', space=sflag, size = 0x4, scoped, tag = 'scoped memory for _lambda_.34']
    %10 = vsyncpa [#allocation3], 0
    // Predicated region
    $region2: #{_lambda_.34} parent=1 // pred_check
      _
    $region3: #{_lambda_.34} parent=1 // pred_check_branch
      %12 = sbr.rel (0) target = $region5
    $region4: #{_lambda_.34} parent=1 // pred_region
      _
    $region5: #{_lambda_.34} parent=1 // pred_fallthru
      _
    // Predicated region
    $region6: #{_lambda_.34} parent=1 // pred_check
      _
    $region7: #{_lambda_.34} parent=1 // pred_check_branch
      %14 = sbr.rel (0) target = $region9
    $region8: #{_lambda_.34} parent=1 // pred_region
      _
    $region9: #{_lambda_.34} parent=1 // pred_fallthru
      _
    // Predicated region
    $region10: #{_lambda_.34} parent=1 // pred_check
      _
    $region11: #{_lambda_.34} parent=1 // pred_check_branch
      %16 = sbr.rel (0) target = $region13
    $region12: #{_lambda_.34} parent=1 // pred_region
      _
    $region13: #{_lambda_.34} parent=1 // pred_fallthru
      _
    %v17 = vld [vmem:[%s0] sm:$0xff]
    %v18 = vld [vmem:[%s0 + $0x8] sm:$0xff]
    %v19 = vld [vmem:[%s0 + $0x10] sm:$0xff]
    %v20 = vld [vmem:[%s0 + $0x18] sm:$0xff]
    %v21 = vld [vmem:[%s1] sm:$0xff]
    %v22 = vld [vmem:[%s1 + $0x8] sm:$0xff]
    %v23 = vld [vmem:[%s1 + $0x10] sm:$0xff]
    %v24 = vld [vmem:[%s1 + $0x18] sm:$0xff]
    %v25 = vadd.f32 %v17, %v21
    %v26 = vadd.f32 %v18, %v22
    %v27 = vadd.f32 %v19, %v23
    %v28 = vadd.f32 %v20, %v24
    %vm29 = vcmask 261120
    %30 = vst.msk [vmem:[#allocation2] sm:$0xff] %vm29, %v25
    %31 = vst.msk [vmem:[#allocation2 + $0x8] sm:$0xff] %vm29, %v26
    %32 = vst.msk [vmem:[#allocation2 + $0x10] sm:$0xff] %vm29, %v27
    %33 = vst.msk [vmem:[#allocation2 + $0x18] sm:$0xff] %vm29, %v28
    %v34 = vmul.f32 %v25, %v25
    %v35 = vmul.f32 %v26, %v26
    %v36 = vmul.f32 %v27, %v27
    %v37 = vmul.f32 %v28, %v28
    %v38 = vsel %vm29, %v34, 0.0
    %39 = vadd.xlane.f32.xlu0 %v38
    %v40 = vpop.xlane.xlu0 %39
    %v41 = vsel %vm29, %v35, 0.0
    %42 = vadd.xlane.f32.xlu0 %v41
    %v43 = vpop.xlane.xlu0 %42
    %v44 = vsel %vm29, %v36, 0.0
    %45 = vadd.xlane.f32.xlu0 %v44
    %v46 = vpop.xlane.xlu0 %45
    %v47 = vsel %vm29, %v37, 0.0
    %48 = vadd.xlane.f32.xlu0 %v47
    %v49 = vpop.xlane.xlu0 %48
    %v50 = vrcp.pop 32.0
    %v51 = vmul.f32 %v40, %v50
    %v52 = vmul.f32 %v43, %v50
    %v53 = vmul.f32 %v46, %v50
    %v54 = vmul.f32 %v49, %v50
    %v55 = vadd.f32 %v51, 1e-05
    %v56 = vadd.f32 %v52, 1e-05
    %v57 = vadd.f32 %v53, 1e-05
    %v58 = vadd.f32 %v54, 1e-05
    %v59 = vrsqrt.pop %v55
    %v60 = vrsqrt.pop %v56
    %v61 = vrsqrt.pop %v57
    %v62 = vrsqrt.pop %v58
    %v63 = vmul.f32 %v25, %v59
    %v64 = vmul.f32 %v26, %v60
    %v65 = vmul.f32 %v27, %v61
    %v66 = vmul.f32 %v28, %v62
    %v67 = vld [vmem:[%s2] sm:$0x1]
    %v69 = vlaneseq
    %v70 = vshrl.u32 %v69, 7
    %v71 = vsub.s32 0, %v70
    %v72 = vrot.slane %v67, %v71
    %v74 = vmul.f32 %v63, %v72
    %v75 = vmul.f32 %v64, %v72
    %v76 = vmul.f32 %v65, %v72
    %v77 = vmul.f32 %v66, %v72
    %78 = vst.msk [vmem:[%s3] sm:$0xff] %vm29, %v74
    %79 = vst.msk [vmem:[%s3 + $0x8] sm:$0xff] %vm29, %v75
    %80 = vst.msk [vmem:[%s3 + $0x10] sm:$0xff] %vm29, %v76
    %81 = vst.msk [vmem:[%s3 + $0x18] sm:$0xff] %vm29, %v77
    // Predicated region
    $region14: #{_lambda_.34} parent=1 // pred_check
      _
    $region15: #{_lambda_.34} parent=1 // pred_check_branch
      %83 = sbr.rel (0) target = $region17
    $region16: #{_lambda_.34} parent=1 // pred_region
      _
    $region17: #{_lambda_.34} parent=1 // pred_fallthru
      _
    // Predicated region
    $region18: #{_lambda_.34} parent=1 // pred_check
      _
    $region19: #{_lambda_.34} parent=1 // pred_check_branch
      %85 = sbr.rel (0) target = $region21
    $region20: #{_lambda_.34} parent=1 // pred_region
      %s87 = ssub.s32 512, 512
      %88 = vsyncadd [#allocation3], %s87
      %s89 = sshll.u32 [#allocation2], 4
      %s90 = int_to_ptr.vmem [resolvable:$true] %s89
      %95 = dma.vmem_to_hbm [thread:$0]  %s90, 512, %s4, [#allocation3], 128, 128, 8
    $region21: #{_lambda_.34} parent=1 // pred_fallthru
      _
    // Predicated region
    $region22: #{_lambda_.34} parent=1 // pred_check
      _
    $region23: #{_lambda_.34} parent=1 // pred_check_branch
      %97 = sbr.rel (0) target = $region25
    $region24: #{_lambda_.34} parent=1 // pred_region
      _
    $region25: #{_lambda_.34} parent=1 // pred_fallthru
      _
    // Predicated region
    $region26: #{_lambda_.34} parent=1 // pred_check
      _
    $region27: #{_lambda_.34} parent=1 // pred_check_branch
      %99 = sbr.rel (0) target = $region29
    $region28: #{_lambda_.34} parent=1 // pred_region
      %100 = dma.done [#allocation3], 512
    $region29: #{_lambda_.34} parent=1 // pred_fallthru
      _
    %101 = vsyncpa [#allocation3], 1

// kernel: _lambda_.35
$region0: #{_lambda_.35}
  #allocation0 [shape = 'u32[]', space=smem, size = 0x4, offset = 0x4, fixed_abs, tag = 'smem constant byte address 0x4 - core index']
  #allocation1 [shape = 'u32[144,128]{1,0:T(1,128)}', space=vmem, size = 0x12000, scoped, tag = 'internal scratch']
  #allocation2 [shape = 'f32[8,8]{1,0:T(8,128)}', space=vmem, size = 0x1000, scoped, tag = 'scratch operand']
  %s0 = inlined_call_operand.vmem [shape: bf16[8,128], index: 0, kind: input, shape index: {}]
  %s1 = inlined_call_operand.vmem [shape: bf16[128,8], index: 1, kind: input, shape index: {}]
  %s2 = inlined_call_operand.vmem [shape: f32[1,8], index: 2, kind: input, shape index: {}]
  %s3 = inlined_call_operand.vmem [shape: f32[8,8], index: 3, kind: output, shape index: {}]
  %s4 = sld [smem:[#allocation0]]
  $region30: #{_lambda_.35} parent=0
    _
  %s6 = ssub.s32 1, %s4
  %s7 = scalar_select 0, %s6, %s4
  // Predicated region
  $region2: #{_lambda_.35} parent=0 // pred_check
    _
  $region3: #{_lambda_.35} parent=0 // pred_check_branch
    %9 = sbr.rel (0) target = $region5
  $region4: #{_lambda_.35} parent=0 // pred_region
    _
  $region5: #{_lambda_.35} parent=0 // pred_fallthru
    _
  // Predicated region
  $region6: #{_lambda_.35} parent=0 // pred_check
    _
  $region7: #{_lambda_.35} parent=0 // pred_check_branch
    %11 = sbr.rel (0) target = $region9
  $region8: #{_lambda_.35} parent=0 // pred_region
    _
  $region9: #{_lambda_.35} parent=0 // pred_fallthru
    _
  // Predicated region
  $region10: #{_lambda_.35} parent=0 // pred_check
    _
  $region11: #{_lambda_.35} parent=0 // pred_check_branch
    %13 = sbr.rel (0) target = $region13
  $region12: #{_lambda_.35} parent=0 // pred_region
    _
  $region13: #{_lambda_.35} parent=0 // pred_fallthru
    _
  %p15 = scmp.eq.s32.totalorder 0, 0
  // Predicated region
  $region14: #{_lambda_.35} parent=0 // pred_check
    %p16 = pneg %p15
  $region15: #{_lambda_.35} parent=0 // pred_check_branch
    %18 = sbr.rel (%p16) target = $region17
  $region16: #{_lambda_.35} parent=0 // pred_region
    %vm19 = vcmask 64512
    %20 = vst.msk [vmem:[#allocation2] sm:$0xff] %vm19, 0.0
  $region17: #{_lambda_.35} parent=0 // pred_fallthru
    _
  %v21 = vld [vmem:[#allocation2] sm:$0xff]
  %v22 = vld [vmem:[%s0] sm:$0xf]
  %v23 = vld [vmem:[%s1] sm:$0xf]
  %v24 = vld [vmem:[%s1 + $0x4] sm:$0xf]
  %v25 = vld [vmem:[%s1 + $0x8] sm:$0xf]
  %v26 = vld [vmem:[%s1 + $0xc] sm:$0xf]
  %v27 = vld [vmem:[%s1 + $0x10] sm:$0xf]
  %v28 = vld [vmem:[%s1 + $0x14] sm:$0xf]
  %v29 = vld [vmem:[%s1 + $0x18] sm:$0xf]
  %v30 = vld [vmem:[%s1 + $0x1c] sm:$0xf]
  %v31 = vld [vmem:[%s1 + $0x20] sm:$0xf]
  %v32 = vld [vmem:[%s1 + $0x24] sm:$0xf]
  %v33 = vld [vmem:[%s1 + $0x28] sm:$0xf]
  %v34 = vld [vmem:[%s1 + $0x2c] sm:$0xf]
  %v35 = vld [vmem:[%s1 + $0x30] sm:$0xf]
  %v36 = vld [vmem:[%s1 + $0x34] sm:$0xf]
  %v37 = vld [vmem:[%s1 + $0x38] sm:$0xf]
  %v38 = vld [vmem:[%s1 + $0x3c] sm:$0xf]
  %v55 = vunpack.c.l.b16 %v23
  %v56 = vunpack.c.l.b16 %v24
  %v57 = vunpack.c.l.b16 %v25
  %v58 = vunpack.c.l.b16 %v26
  %v59 = vunpack.c.l.b16 %v27
  %v60 = vunpack.c.l.b16 %v28
  %v61 = vunpack.c.l.b16 %v29
  %v62 = vunpack.c.l.b16 %v30
  %v63 = vunpack.c.l.b16 %v31
  %v64 = vunpack.c.l.b16 %v32
  %v65 = vunpack.c.l.b16 %v33
  %v66 = vunpack.c.l.b16 %v34
  %v67 = vunpack.c.l.b16 %v35
  %v68 = vunpack.c.l.b16 %v36
  %v69 = vunpack.c.l.b16 %v37
  %v70 = vunpack.c.l.b16 %v38
  %v71 = vpack.c.b16 %v56, %v55
  %v72 = vpack.c.b16 %v58, %v57
  %v73 = vpack.c.b16 %v60, %v59
  %v74 = vpack.c.b16 %v62, %v61
  %v75 = vpack.c.b16 %v64, %v63
  %v76 = vpack.c.b16 %v66, %v65
  %v77 = vpack.c.b16 %v68, %v67
  %v78 = vpack.c.b16 %v70, %v69
  %87 = vmatprep.subr.bf16.mxu0 0
  %88 = vmatpush1.bf16.msra.mxu0 %v71
  %89 = vmatprep.subr.bf16.mxu0 0
  %90 = vmatpush1.bf16.msra.mxu0 %v72
  %91 = vmatprep.subr.bf16.mxu0 0
  %92 = vmatpush1.bf16.msra.mxu0 %v73
  %93 = vmatprep.subr.bf16.mxu0 0
  %94 = vmatpush1.bf16.msra.mxu0 %v74
  %95 = vmatprep.subr.bf16.mxu0 0
  %96 = vmatpush1.bf16.msra.mxu0 %v75
  %97 = vmatprep.subr.bf16.mxu0 0
  %98 = vmatpush1.bf16.msra.mxu0 %v76
  %99 = vmatprep.subr.bf16.mxu0 0
  %100 = vmatpush1.bf16.msra.mxu0 %v77
  %101 = vmatprep.subr.bf16.mxu0 0
  %102 = vmatpush1.bf16.msra.mxu0 %v78
  %103 = vmatprep.subr.bf16.mxu0 0
  %104 = vmatpush1.bf16.msra.mxu0 0
  %105 = vmatprep.subr.bf16.mxu0 0
  %106 = vmatpush1.bf16.msra.mxu0 0
  %107 = vmatprep.subr.bf16.mxu0 0
  %108 = vmatpush1.bf16.msra.mxu0 0
  %109 = vmatprep.subr.bf16.mxu0 0
  %110 = vmatpush1.bf16.msra.mxu0 0
  %111 = vmatprep.subr.bf16.mxu0 0
  %112 = vmatpush1.bf16.msra.mxu0 0
  %113 = vmatprep.subr.bf16.mxu0 0
  %114 = vmatpush1.bf16.msra.mxu0 0
  %115 = vmatprep.subr.bf16.mxu0 0
  %116 = vmatpush1.bf16.msra.mxu0 0
  %117 = vmatprep.subr.bf16.mxu0 0
  %118 = vmatpush1.bf16.msra.mxu0 0
  %119 = vmatprep.mubr.bf16.mxu0 0
  %120 = vmatmul.mubr.bf16.gmra.mrb[0].mxu0 %v22
  %v121 = vpop.f32.mrb[0].mxu0
  %v122 = vadd.f32 0.0, %v121
  %v123 = vpop.f32.mrb[0].mxu0
  %v124 = vpop.f32.mrb[0].mxu0
  %v125 = vpop.f32.mrb[0].mxu0
  %126 = vdwg.mxu0
  %v127 = vadd.f32 %v21, %v122
  %vm128 = vcmask 64512
  %129 = vst.msk [vmem:[#allocation2] sm:$0xff] %vm128, %v127
  // Predicated region
  $region18: #{_lambda_.35} parent=0 // pred_check
    %p130 = pneg %p15
  $region19: #{_lambda_.35} parent=0 // pred_check_branch
    %132 = sbr.rel (%p130) target = $region21
  $region20: #{_lambda_.35} parent=0 // pred_region
    %v133 = vld [vmem:[#allocation2] sm:$0xff]
    %v134 = vld [vmem:[%s2] sm:$0x1]
    %v136 = vlaneseq
    %v137 = vshrl.u32 %v136, 7
    %v138 = vsub.s32 0, %v137
    %v139 = vrot.slane %v134, %v138
    %v141 = vadd.f32 %v133, %v139
    %142 = vst.msk [vmem:[%s3] sm:$0xff] %vm128, %v141
  $region21: #{_lambda_.35} parent=0 // pred_fallthru
    _
  // Predicated region
  $region22: #{_lambda_.35} parent=0 // pred_check
    _
  $region23: #{_lambda_.35} parent=0 // pred_check_branch
    %144 = sbr.rel (0) target = $region25
  $region24: #{_lambda_.35} parent=0 // pred_region
    _
  $region25: #{_lambda_.35} parent=0 // pred_fallthru
    _
  // Predicated region
  $region26: #{_lambda_.35} parent=0 // pred_check
    _
  $region27: #{_lambda_.35} parent=0 // pred_check_branch
    %146 = sbr.rel (0) target = $region29
  $region28: #{_lambda_.35} parent=0 // pred_region
    _
  $region29: #{_lambda_.35} parent=0 // pred_fallthru
    _

</llo_original>
